<compile_context>
chip_gen: v7x
topology: tpu7x:2x2x1
jax: 0.10.0
libtpu: 0.0.40
codegen_flags: <defaults>
</compile_context>

<pallas_src>
import functools

import jax
import jax.numpy as jnp
from jax.experimental import pallas as pl
from jax.experimental.pallas import tpu as pltpu


def _round_up(x, m):
    return (x + m - 1) // m * m


# ------------------------------ fused kernel --------------------------------

def _bottleneck_kernel(x_ref, w14_ref, b14_ref, w2_ref, b2_ref,
                       w36_ref, b36_ref, o_ref,
                       v1_ref, v2_ref, v36_ref, pad_ref,
                       *, H, W, Wp, off0, tau, v_th):
    t = pl.program_id(1)               # time step (inner, sequential "arbitrary")
    decay = 1.0 - 1.0 / tau
    P = H * W
    LEN = H * Wp                       # stencil rows computed "over padded width"
    cm = w14_ref.shape[1]              # 2*width, padded to a multiple of 128
    co = w36_ref.shape[1] // 2         # out_c, padded to a multiple of 128

    @pl.when(t == 0)
    def _init():
        # Fresh LIF membranes (v_reset = 0) at the start of each sample's time
        # sequence; the halo buffer's border/gap rows stay zero forever because
        # only the (aligned) image-row positions are ever rewritten.
        v1_ref[...] = jnp.zeros_like(v1_ref)
        v2_ref[...] = jnp.zeros_like(v2_ref)
        v36_ref[...] = jnp.zeros_like(v36_ref)
        pad_ref[...] = jnp.zeros_like(pad_ref)

    def lif(v_ref, a):
        # MultiStepLIFNode(decay_input=False, v_reset=0.0, tau, v_threshold):
        #   charge: v = v*(1 - 1/tau) + a ; fire: s = (v >= v_th) ; hard reset.
        v = v_ref[...] * decay + a
        s = (v >= v_th).astype(jnp.float32)
        v_ref[...] = v * (1.0 - s)
        return s

    xt = x_ref[0, 0]                                         # (P, Ci) f32

    # -- stage 1: merged conv1 || conv4 (1x1, folded BN) + LIF (spike1||spike4)
    a1 = jnp.dot(xt.astype(jnp.bfloat16), w14_ref[...],
                 preferred_element_type=jnp.float32) + b14_ref[...]
    s1 = lif(v1_ref, a1)                                     # (P, cm), 0/1

    # scatter spike rows into the gapped flat halo buffer; every store starts
    # at an 8-aligned sublane offset (off0 and Wp are multiples of 8).
    for h in range(H):
        base = off0 + h * Wp
        pad_ref[base:base + W, :] = s1[h * W:(h + 1) * W, :]

    # -- stage 2: merged conv2 || conv5 (3x3, folded BN, block-diagonal taps).
    #    Each tap is one contiguous row slice of the flat halo buffer; the
    #    accumulator lives "over padded width" and the pad columns are dropped
    #    once at the end.
    def tap(k):
        kh, kw = divmod(k, 3)
        start = off0 + (kh - 1) * Wp + (kw - 1)
        win = pad_ref[start:start + LEN, :]
        return jnp.dot(win.astype(jnp.bfloat16), w2_ref[k],
                       preferred_element_type=jnp.float32)

    a2p = tap(0) + b2_ref[...]                               # (LEN, cm)
    for k in range(1, 9):
        a2p = a2p + tap(k)
    a2 = a2p.reshape(H, Wp, cm)[:, :W, :].reshape(P, cm)     # drop pad columns
    s2 = lif(v2_ref, a2)                                     # (P, cm)

    # -- stage 3: conv3 || conv6 fused into ONE matmul + ONE LIF membrane;
    #    the two branches are split by a 128-aligned lane slice.
    a36 = jnp.dot(s2.astype(jnp.bfloat16), w36_ref[...],
                  preferred_element_type=jnp.float32) + b36_ref[...]
    s36 = lif(v36_ref, a36)                                  # (P, 2*co)
    out = s36[:, :co]                                        # spike3
    out2 = s36[:, co:]                                       # spike6

    # -- soft-logic combine with the identity (= x; downsample is None).
    #    idn*out + (1-idn)*out*(1-out2) + idn*(1-out)*(1-out2)
    #  ==  idn*out + (1-out2)*(idn + out - 2*idn*out)
    idn = xt
    o_ref[0, 0] = idn * out + (1.0 - out2) * (idn + out - 2.0 * idn * out)


# ------------------------------- host wrapper --------------------------------

def bottleneck_forward(x, params, tau=2.0, v_th=1.0):
    """x: (T, B, Cin, H, W) float32 -> (T, B, planes*4, H, W) float32."""
    T, B, Cin, H, W = x.shape
    out_c = params['out_c']
    # downsample=None + the residual soft-logic combine require matching channels
    assert Cin == out_c, "fused path needs inplanes == planes*expansion"

    Ci = params['w14'].shape[0]        # Cin padded to 128
    Cm = params['w14'].shape[1]        # 2*width padded to 128
    Co = params['w36'].shape[1] // 2   # out_c padded to 128
    P = H * W
    Wp = _round_up(W + 2, 8)           # padded row pitch (>= W+2, 8-aligned)
    off0 = _round_up(Wp + 1, 8)        # first image-row offset (8-aligned)
    LEN = H * Wp
    NPAD = _round_up(off0 + LEN + Wp + 1, 8)

    # single layout change at the block boundary: (T,B,C,H,W) -> (T,B,H*W,Cpad)
    xc = jnp.transpose(x, (0, 1, 3, 4, 2)).reshape(T, B, P, Cin)
    if Ci > Cin:
        xc = jnp.pad(xc, ((0, 0), (0, 0), (0, 0), (0, Ci - Cin)))

    # advisory cost + explicit VMEM budget for the fused block
    flops = T * B * (2 * P * Ci * Cm + 9 * 2 * LEN * Cm * Cm + 2 * P * Cm * 2 * Co)
    weight_bytes = (2 * (params['w14'].size + params['w2'].size + params['w36'].size)
                    + 4 * (params['b14'].size + params['b2'].size + params['b36'].size))
    bytes_accessed = xc.size * 4 + T * B * P * Co * 4 + weight_bytes
    block_bytes = (P * Ci + P * Co) * 4
    scratch_bytes = (P * Cm * 2 + P * 2 * Co + NPAD * Cm) * 4
    vmem_limit = min(2 * (2 * block_bytes + 2 * weight_bytes + scratch_bytes)
                     + (8 << 20), 100 << 20)

    kern = functools.partial(_bottleneck_kernel, H=H, W=W, Wp=Wp, off0=off0,
                             tau=tau, v_th=v_th)
    y = pl.pallas_call(
        kern,
        out_shape=jax.ShapeDtypeStruct((T, B, P, Co), jnp.float32),
        grid=(B, T),
        in_specs=[
            pl.BlockSpec((1, 1, P, Ci), lambda b, t: (t, b, 0, 0)),
            # grid-invariant weights / biases (constant index maps).
            # TODO(synk): pipeline_mode=pl.Buffered(1) to single-buffer them.
            pl.BlockSpec(params['w14'].shape, lambda b, t: (0, 0)),
            pl.BlockSpec(params['b14'].shape, lambda b, t: (0, 0)),
            pl.BlockSpec(params['w2'].shape, lambda b, t: (0, 0, 0)),
            pl.BlockSpec(params['b2'].shape, lambda b, t: (0, 0)),
            pl.BlockSpec(params['w36'].shape, lambda b, t: (0, 0)),
            pl.BlockSpec(params['b36'].shape, lambda b, t: (0, 0)),
        ],
        out_specs=pl.BlockSpec((1, 1, P, Co), lambda b, t: (t, b, 0, 0)),
        scratch_shapes=[
            pltpu.VMEM((P, Cm), jnp.float32),        # membrane spike1||spike4
            pltpu.VMEM((P, Cm), jnp.float32),        # membrane spike2||spike5
            pltpu.VMEM((P, 2 * Co), jnp.float32),    # membrane spike3||spike6
            pltpu.VMEM((NPAD, Cm), jnp.float32),     # flat gapped halo buffer
        ],
        compiler_params=pltpu.CompilerParams(
            dimension_semantics=("parallel", "arbitrary"),
            vmem_limit_bytes=int(vmem_limit)),
        cost_estimate=pl.CostEstimate(flops=int(flops), transcendentals=0,
                                      bytes_accessed=int(bytes_accessed)),
    )(xc, params['w14'], params['b14'], params['w2'], params['b2'],
      params['w36'], params['b36'])

    y = y[..., :out_c].reshape(T, B, H, W, out_c)
    return jnp.transpose(y, (0, 1, 4, 2, 3))                # back to (T,B,C,H,W)


# --------------------- deterministic folded / merged params ------------------

def _fold_bn(w, gamma, beta, mean, var, eps=1e-5):
    """Fold eval-mode BN into a conv weight.

    w: (Cout, Cin, kh, kw) -> per-tap weights (kh*kw, Cin, Cout), bias (1, Cout).
    """
    scale = gamma / jnp.sqrt(var + eps)                     # (Cout,)
    bias = (beta - mean * scale).reshape(1, -1)             # (1, Cout)
    cout, cin, kh, kw = w.shape
    w_taps = jnp.transpose(w, (2, 3, 1, 0)).reshape(kh * kw, cin, cout)
    return (w_taps * scale[None, None, :]).astype(jnp.float32), bias.astype(jnp.float32)


def make_params(key, inplanes, planes, groups=1, base_width=64):
    width = int(planes * (base_width / 64.0)) * groups
    out_c = planes * 4                                      # expansion = 4
    Ci = _round_up(inplanes, 128)
    Cm = _round_up(2 * width, 128)
    Co = _round_up(out_c, 128)
    ks = jax.random.split(key, 12)

    def conv_w(k, cout, cin, kh, kw):
        fan_in = cin * kh * kw
        return (jax.random.normal(k, (cout, cin, kh, kw), jnp.float32)
                * (1.0 / jnp.sqrt(fan_in)))

    def bn_p(k, c):
        k1, k2, k3 = jax.random.split(k, 3)
        return (1.0 + 0.1 * jax.random.normal(k1, (c,), jnp.float32),
                0.1 * jax.random.normal(k2, (c,), jnp.float32),
                0.05 * jax.random.normal(k3, (c,), jnp.float32),
                jnp.ones((c,), jnp.float32))

    # conv1/bn1 (1x1 in->w), conv2/bn2 (3x3 w->w), conv3/bn3 (1x1 w->out),
    # conv4/bn4, conv5/bn5, conv6/bn6: the second (parallel) branch.
    specs = [(width, inplanes, 1, 1), (width, width, 3, 3), (out_c, width, 1, 1),
             (width, inplanes, 1, 1), (width, width, 3, 3), (out_c, width, 1, 1)]
    folded = []
    for i, (co_, ci_, kh_, kw_) in enumerate(specs):
        w = conv_w(ks[2 * i], co_, ci_, kh_, kw_)
        folded.append(_fold_bn(w, *bn_p(ks[2 * i + 1], co_)))
    (w1, b1), (w2t, b2), (w3, b3), (w4, b4), (w5t, b5), (w6, b6) = folded

    # stage 1: conv1 || conv4 share the input -> one (Ci, Cm) matmul
    w14 = jnp.zeros((Ci, Cm), jnp.float32)
    w14 = w14.at[:inplanes, :width].set(w1[0])
    w14 = w14.at[:inplanes, width:2 * width].set(w4[0])
    b14 = jnp.zeros((1, Cm), jnp.float32)
    b14 = b14.at[:, :width].set(b1).at[:, width:2 * width].set(b4)

    # stage 2: conv2 / conv5 as block-diagonal per-tap weights (9, Cm, Cm)
    w2m = jnp.zeros((9, Cm, Cm), jnp.float32)
    w2m = w2m.at[:, :width, :width].set(w2t)
    w2m = w2m.at[:, width:2 * width, width:2 * width].set(w5t)
    b2m = jnp.zeros((1, Cm), jnp.float32)
    b2m = b2m.at[:, :width].set(b2).at[:, width:2 * width].set(b5)

    # stage 3: conv3 || conv6 fused along the output axis (lane-aligned split)
    w36 = jnp.zeros((Cm, 2 * Co), jnp.float32)
    w36 = w36.at[:width, :out_c].set(w3[0])
    w36 = w36.at[width:2 * width, Co:Co + out_c].set(w6[0])
    b36 = jnp.zeros((1, 2 * Co), jnp.float32)
    b36 = b36.at[:, :out_c].set(b3).at[:, Co:Co + out_c].set(b6)

    return {'w14': w14.astype(jnp.bfloat16), 'b14': b14,
            'w2': w2m.astype(jnp.bfloat16), 'b2': b2m,
            'w36': w36.astype(jnp.bfloat16), 'b36': b36,
            'out_c': out_c, 'width': width}


# ------------------------------------ main -----------------------------------

if __name__ == "__main__":
    # Small, self-consistent shapes: downsample=None and the final elementwise
    # combine require inplanes == planes*expansion and stride == 1.
    T, B, H, W = 4, 2, 8, 8
    planes = 4
    inplanes = planes * 4  # 16

    key = jax.random.PRNGKey(0)
    k_x, k_p = jax.random.split(key)
    x = jax.random.uniform(k_x, (T, B, inplanes, H, W), jnp.float32)
    params = make_params(k_p, inplanes, planes)

    fwd = jax.jit(lambda xx: bottleneck_forward(xx, params))
    y = fwd(x)
    jax.block_until_ready(y)
    assert y.shape == (T, B, planes * 4, H, W), y.shape
    print("KERNEL_OK")
</pallas_src>

<mosaic_0001>
module attributes {stable_mosaic.version = 11 : i64} {
  func.func @_bottleneck_kernel(%arg0: i32, %arg1: i32, %arg2: memref<1x1x64x128xf32, #tpu.memory_space<vmem>>, %arg3: memref<128x128xbf16, #tpu.memory_space<vmem>>, %arg4: memref<1x128xf32, #tpu.memory_space<vmem>>, %arg5: memref<9x128x128xbf16, #tpu.memory_space<vmem>>, %arg6: memref<1x128xf32, #tpu.memory_space<vmem>>, %arg7: memref<128x256xbf16, #tpu.memory_space<vmem>>, %arg8: memref<1x256xf32, #tpu.memory_space<vmem>>, %arg9: memref<1x1x64x128xf32, #tpu.memory_space<vmem>>, %arg10: memref<64x128xf32, #tpu.memory_space<vmem>>, %arg11: memref<64x128xf32, #tpu.memory_space<vmem>>, %arg12: memref<64x256xf32, #tpu.memory_space<vmem>>, %arg13: memref<176x128xf32, #tpu.memory_space<vmem>>) attributes {dimension_semantics = [#tpu.dimension_semantics<parallel>, #tpu.dimension_semantics<arbitrary>], iteration_bounds = array<i64: 2, 4>, scalar_prefetch = 0 : i64, scratch_operands = 4 : i64, tpu.core_type = #tpu.core_type<tc>, window_params = [{transform_indices = @transform_0, window_bounds = array<i64: 1, 1, 64, 128>}, {pipeline_mode = #tpu.pipeline_mode<synchronous>, transform_indices = @transform_1, window_bounds = array<i64: 128, 128>}, {pipeline_mode = #tpu.pipeline_mode<synchronous>, transform_indices = @transform_2, window_bounds = array<i64: 1, 128>}, {pipeline_mode = #tpu.pipeline_mode<synchronous>, transform_indices = @transform_3, window_bounds = array<i64: 9, 128, 128>}, {pipeline_mode = #tpu.pipeline_mode<synchronous>, transform_indices = @transform_4, window_bounds = array<i64: 1, 128>}, {pipeline_mode = #tpu.pipeline_mode<synchronous>, transform_indices = @transform_5, window_bounds = array<i64: 128, 256>}, {pipeline_mode = #tpu.pipeline_mode<synchronous>, transform_indices = @transform_6, window_bounds = array<i64: 1, 256>}, {transform_indices = @transform_7, window_bounds = array<i64: 1, 1, 64, 128>}]} {
    %c0_i32 = arith.constant 0 : i32
    %0 = arith.cmpi eq, %arg1, %c0_i32 : i32
    %1 = arith.extui %0 : i1 to i32
    %c0_i32_0 = arith.constant 0 : i32
    %2 = arith.cmpi ne, %1, %c0_i32_0 : i32
    scf.if %2 {
      %cst_91 = arith.constant 0.000000e+00 : f32
      %143 = vector.broadcast %cst_91 : f32 to vector<64x128xf32>
      %c0_92 = arith.constant 0 : index
      %c0_93 = arith.constant 0 : index
      %144 = vector.load %arg10[%c0_92, %c0_93] : memref<64x128xf32, #tpu.memory_space<vmem>>, vector<64x128xf32>
      tpu.vector_store %arg10[%c0_92, %c0_93], %143 {strides = array<i32>} : memref<64x128xf32, #tpu.memory_space<vmem>>, vector<64x128xf32>,
      %cst_94 = arith.constant 0.000000e+00 : f32
      %145 = vector.broadcast %cst_94 : f32 to vector<64x128xf32>
      %c0_95 = arith.constant 0 : index
      %c0_96 = arith.constant 0 : index
      %146 = vector.load %arg11[%c0_95, %c0_96] : memref<64x128xf32, #tpu.memory_space<vmem>>, vector<64x128xf32>
      tpu.vector_store %arg11[%c0_95, %c0_96], %145 {strides = array<i32>} : memref<64x128xf32, #tpu.memory_space<vmem>>, vector<64x128xf32>,
      %cst_97 = arith.constant 0.000000e+00 : f32
      %147 = vector.broadcast %cst_97 : f32 to vector<64x256xf32>
      %c0_98 = arith.constant 0 : index
      %c0_99 = arith.constant 0 : index
      %148 = vector.load %arg12[%c0_98, %c0_99] : memref<64x256xf32, #tpu.memory_space<vmem>>, vector<64x256xf32>
      tpu.vector_store %arg12[%c0_98, %c0_99], %147 {strides = array<i32>} : memref<64x256xf32, #tpu.memory_space<vmem>>, vector<64x256xf32>,
      %cst_100 = arith.constant 0.000000e+00 : f32
      %149 = vector.broadcast %cst_100 : f32 to vector<176x128xf32>
      %c0_101 = arith.constant 0 : index
      %c0_102 = arith.constant 0 : index
      %150 = vector.load %arg13[%c0_101, %c0_102] : memref<176x128xf32, #tpu.memory_space<vmem>>, vector<176x128xf32>
      tpu.vector_store %arg13[%c0_101, %c0_102], %149 {strides = array<i32>} : memref<176x128xf32, #tpu.memory_space<vmem>>, vector<176x128xf32>,
    } else {
    }
    %c0 = arith.constant 0 : index
    %c0_1 = arith.constant 0 : index
    %c0_2 = arith.constant 0 : index
    %c0_3 = arith.constant 0 : index
    %3 = vector.load %arg2[%c0, %c0_1, %c0_2, %c0_3] : memref<1x1x64x128xf32, #tpu.memory_space<vmem>>, vector<1x1x64x128xf32>
    %4 = vector.shape_cast %3 : vector<1x1x64x128xf32> to vector<64x128xf32>
    %5 = arith.truncf %4 : vector<64x128xf32> to vector<64x128xbf16>
    %c0_4 = arith.constant 0 : index
    %c0_5 = arith.constant 0 : index
    %6 = vector.load %arg3[%c0_4, %c0_5] : memref<128x128xbf16, #tpu.memory_space<vmem>>, vector<128x128xbf16>
    %cst = arith.constant dense<0.000000e+00> : vector<64x128xf32>
    %7 = tpu.matmul %5, %6, %cst {dimension_numbers = #tpu.dot_dimension_numbers<[1], [0], [0], [1], [0, 0, 1, 1], [], []>} : vector<64x128xbf16>, vector<128x128xbf16>, vector<64x128xf32> -> vector<64x128xf32>
    %c0_6 = arith.constant 0 : index
    %c0_7 = arith.constant 0 : index
    %8 = vector.load %arg4[%c0_6, %c0_7] : memref<1x128xf32, #tpu.memory_space<vmem>>, vector<1x128xf32>
    %9 = vector.broadcast %8 : vector<1x128xf32> to vector<64x128xf32>
    %10 = arith.addf %7, %9 : vector<64x128xf32>
    %c0_8 = arith.constant 0 : index
    %c0_9 = arith.constant 0 : index
    %11 = vector.load %arg10[%c0_8, %c0_9] : memref<64x128xf32, #tpu.memory_space<vmem>>, vector<64x128xf32>
    %cst_10 = arith.constant 5.000000e-01 : f32
    %12 = vector.broadcast %cst_10 : f32 to vector<64x128xf32>
    %13 = arith.mulf %11, %12 : vector<64x128xf32>
    %14 = arith.addf %13, %10 : vector<64x128xf32>
    %cst_11 = arith.constant 1.000000e+00 : f32
    %15 = vector.broadcast %cst_11 : f32 to vector<64x128xf32>
    %16 = arith.cmpf oge, %14, %15 : vector<64x128xf32>
    %17 = arith.extui %16 : vector<64x128xi1> to vector<64x128xi32>
    %18 = arith.sitofp %17 : vector<64x128xi32> to vector<64x128xf32>
    %cst_12 = arith.constant 1.000000e+00 : f32
    %19 = vector.broadcast %cst_12 : f32 to vector<64x128xf32>
    %20 = arith.subf %19, %18 : vector<64x128xf32>
    %21 = arith.mulf %14, %20 : vector<64x128xf32>
    %c0_13 = arith.constant 0 : index
    %c0_14 = arith.constant 0 : index
    %22 = vector.load %arg10[%c0_13, %c0_14] : memref<64x128xf32, #tpu.memory_space<vmem>>, vector<64x128xf32>
    tpu.vector_store %arg10[%c0_13, %c0_14], %21 {strides = array<i32>} : memref<64x128xf32, #tpu.memory_space<vmem>>, vector<64x128xf32>,
    %23 = vector.extract_strided_slice %18 {offsets = [0, 0], sizes = [8, 128], strides = [1, 1]} : vector<64x128xf32> to vector<8x128xf32>
    %c24 = arith.constant 24 : index
    %c0_15 = arith.constant 0 : index
    %24 = vector.load %arg13[%c24, %c0_15] : memref<176x128xf32, #tpu.memory_space<vmem>>, vector<8x128xf32>
    tpu.vector_store %arg13[%c24, %c0_15], %23 {strides = array<i32>} : memref<176x128xf32, #tpu.memory_space<vmem>>, vector<8x128xf32>,
    %25 = vector.extract_strided_slice %18 {offsets = [8, 0], sizes = [8, 128], strides = [1, 1]} : vector<64x128xf32> to vector<8x128xf32>
    %c40 = arith.constant 40 : index
    %c0_16 = arith.constant 0 : index
    %26 = vector.load %arg13[%c40, %c0_16] : memref<176x128xf32, #tpu.memory_space<vmem>>, vector<8x128xf32>
    tpu.vector_store %arg13[%c40, %c0_16], %25 {strides = array<i32>} : memref<176x128xf32, #tpu.memory_space<vmem>>, vector<8x128xf32>,
    %27 = vector.extract_strided_slice %18 {offsets = [16, 0], sizes = [8, 128], strides = [1, 1]} : vector<64x128xf32> to vector<8x128xf32>
    %c56 = arith.constant 56 : index
    %c0_17 = arith.constant 0 : index
    %28 = vector.load %arg13[%c56, %c0_17] : memref<176x128xf32, #tpu.memory_space<vmem>>, vector<8x128xf32>
    tpu.vector_store %arg13[%c56, %c0_17], %27 {strides = array<i32>} : memref<176x128xf32, #tpu.memory_space<vmem>>, vector<8x128xf32>,
    %29 = vector.extract_strided_slice %18 {offsets = [24, 0], sizes = [8, 128], strides = [1, 1]} : vector<64x128xf32> to vector<8x128xf32>
    %c72 = arith.constant 72 : index
    %c0_18 = arith.constant 0 : index
    %30 = vector.load %arg13[%c72, %c0_18] : memref<176x128xf32, #tpu.memory_space<vmem>>, vector<8x128xf32>
    tpu.vector_store %arg13[%c72, %c0_18], %29 {strides = array<i32>} : memref<176x128xf32, #tpu.memory_space<vmem>>, vector<8x128xf32>,
    %31 = vector.extract_strided_slice %18 {offsets = [32, 0], sizes = [8, 128], strides = [1, 1]} : vector<64x128xf32> to vector<8x128xf32>
    %c88 = arith.constant 88 : index
    %c0_19 = arith.constant 0 : index
    %32 = vector.load %arg13[%c88, %c0_19] : memref<176x128xf32, #tpu.memory_space<vmem>>, vector<8x128xf32>
    tpu.vector_store %arg13[%c88, %c0_19], %31 {strides = array<i32>} : memref<176x128xf32, #tpu.memory_space<vmem>>, vector<8x128xf32>,
    %33 = vector.extract_strided_slice %18 {offsets = [40, 0], sizes = [8, 128], strides = [1, 1]} : vector<64x128xf32> to vector<8x128xf32>
    %c104 = arith.constant 104 : index
    %c0_20 = arith.constant 0 : index
    %34 = vector.load %arg13[%c104, %c0_20] : memref<176x128xf32, #tpu.memory_space<vmem>>, vector<8x128xf32>
    tpu.vector_store %arg13[%c104, %c0_20], %33 {strides = array<i32>} : memref<176x128xf32, #tpu.memory_space<vmem>>, vector<8x128xf32>,
    %35 = vector.extract_strided_slice %18 {offsets = [48, 0], sizes = [8, 128], strides = [1, 1]} : vector<64x128xf32> to vector<8x128xf32>
    %c120 = arith.constant 120 : index
    %c0_21 = arith.constant 0 : index
    %36 = vector.load %arg13[%c120, %c0_21] : memref<176x128xf32, #tpu.memory_space<vmem>>, vector<8x128xf32>
    tpu.vector_store %arg13[%c120, %c0_21], %35 {strides = array<i32>} : memref<176x128xf32, #tpu.memory_space<vmem>>, vector<8x128xf32>,
    %37 = vector.extract_strided_slice %18 {offsets = [56, 0], sizes = [8, 128], strides = [1, 1]} : vector<64x128xf32> to vector<8x128xf32>
    %c136 = arith.constant 136 : index
    %c0_22 = arith.constant 0 : index
    %38 = vector.load %arg13[%c136, %c0_22] : memref<176x128xf32, #tpu.memory_space<vmem>>, vector<8x128xf32>
    tpu.vector_store %arg13[%c136, %c0_22], %37 {strides = array<i32>} : memref<176x128xf32, #tpu.memory_space<vmem>>, vector<8x128xf32>,
    %c7 = arith.constant 7 : index
    %c0_23 = arith.constant 0 : index
    %39 = vector.load %arg13[%c7, %c0_23] : memref<176x128xf32, #tpu.memory_space<vmem>>, vector<128x128xf32>
    %40 = arith.truncf %39 : vector<128x128xf32> to vector<128x128xbf16>
    %c0_24 = arith.constant 0 : index
    %c0_25 = arith.constant 0 : index
    %c0_26 = arith.constant 0 : index
    %41 = vector.load %arg5[%c0_24, %c0_25, %c0_26] : memref<9x128x128xbf16, #tpu.memory_space<vmem>>, vector<1x128x128xbf16>
    %42 = vector.shape_cast %41 : vector<1x128x128xbf16> to vector<128x128xbf16>
    %cst_27 = arith.constant dense<0.000000e+00> : vector<128x128xf32>
    %43 = tpu.matmul %40, %42, %cst_27 {dimension_numbers = #tpu.dot_dimension_numbers<[1], [0], [0], [1], [0, 0, 1, 1], [], []>} : vector<128x128xbf16>, vector<128x128xbf16>, vector<128x128xf32> -> vector<128x128xf32>
    %c0_28 = arith.constant 0 : index
    %c0_29 = arith.constant 0 : index
    %44 = vector.load %arg6[%c0_28, %c0_29] : memref<1x128xf32, #tpu.memory_space<vmem>>, vector<1x128xf32>
    %45 = vector.broadcast %44 : vector<1x128xf32> to vector<128x128xf32>
    %46 = arith.addf %43, %45 : vector<128x128xf32>
    %c8 = arith.constant 8 : index
    %c0_30 = arith.constant 0 : index
    %47 = vector.load %arg13[%c8, %c0_30] : memref<176x128xf32, #tpu.memory_space<vmem>>, vector<128x128xf32>
    %48 = arith.truncf %47 : vector<128x128xf32> to vector<128x128xbf16>
    %c1 = arith.constant 1 : index
    %c0_31 = arith.constant 0 : index
    %c0_32 = arith.constant 0 : index
    %49 = vector.load %arg5[%c1, %c0_31, %c0_32] : memref<9x128x128xbf16, #tpu.memory_space<vmem>>, vector<1x128x128xbf16>
    %50 = vector.shape_cast %49 : vector<1x128x128xbf16> to vector<128x128xbf16>
    %cst_33 = arith.constant dense<0.000000e+00> : vector<128x128xf32>
    %51 = tpu.matmul %48, %50, %cst_33 {dimension_numbers = #tpu.dot_dimension_numbers<[1], [0], [0], [1], [0, 0, 1, 1], [], []>} : vector<128x128xbf16>, vector<128x128xbf16>, vector<128x128xf32> -> vector<128x128xf32>
    %52 = arith.addf %46, %51 : vector<128x128xf32>
    %c9 = arith.constant 9 : index
    %c0_34 = arith.constant 0 : index
    %53 = vector.load %arg13[%c9, %c0_34] : memref<176x128xf32, #tpu.memory_space<vmem>>, vector<128x128xf32>
    %54 = arith.truncf %53 : vector<128x128xf32> to vector<128x128xbf16>
    %c2 = arith.constant 2 : index
    %c0_35 = arith.constant 0 : index
    %c0_36 = arith.constant 0 : index
    %55 = vector.load %arg5[%c2, %c0_35, %c0_36] : memref<9x128x128xbf16, #tpu.memory_space<vmem>>, vector<1x128x128xbf16>
    %56 = vector.shape_cast %55 : vector<1x128x128xbf16> to vector<128x128xbf16>
    %cst_37 = arith.constant dense<0.000000e+00> : vector<128x128xf32>
    %57 = tpu.matmul %54, %56, %cst_37 {dimension_numbers = #tpu.dot_dimension_numbers<[1], [0], [0], [1], [0, 0, 1, 1], [], []>} : vector<128x128xbf16>, vector<128x128xbf16>, vector<128x128xf32> -> vector<128x128xf32>
    %58 = arith.addf %52, %57 : vector<128x128xf32>
    %c23 = arith.constant 23 : index
    %c0_38 = arith.constant 0 : index
    %59 = vector.load %arg13[%c23, %c0_38] : memref<176x128xf32, #tpu.memory_space<vmem>>, vector<128x128xf32>
    %60 = arith.truncf %59 : vector<128x128xf32> to vector<128x128xbf16>
    %c3 = arith.constant 3 : index
    %c0_39 = arith.constant 0 : index
    %c0_40 = arith.constant 0 : index
    %61 = vector.load %arg5[%c3, %c0_39, %c0_40] : memref<9x128x128xbf16, #tpu.memory_space<vmem>>, vector<1x128x128xbf16>
    %62 = vector.shape_cast %61 : vector<1x128x128xbf16> to vector<128x128xbf16>
    %cst_41 = arith.constant dense<0.000000e+00> : vector<128x128xf32>
    %63 = tpu.matmul %60, %62, %cst_41 {dimension_numbers = #tpu.dot_dimension_numbers<[1], [0], [0], [1], [0, 0, 1, 1], [], []>} : vector<128x128xbf16>, vector<128x128xbf16>, vector<128x128xf32> -> vector<128x128xf32>
    %64 = arith.addf %58, %63 : vector<128x128xf32>
    %c24_42 = arith.constant 24 : index
    %c0_43 = arith.constant 0 : index
    %65 = vector.load %arg13[%c24_42, %c0_43] : memref<176x128xf32, #tpu.memory_space<vmem>>, vector<128x128xf32>
    %66 = arith.truncf %65 : vector<128x128xf32> to vector<128x128xbf16>
    %c4 = arith.constant 4 : index
    %c0_44 = arith.constant 0 : index
    %c0_45 = arith.constant 0 : index
    %67 = vector.load %arg5[%c4, %c0_44, %c0_45] : memref<9x128x128xbf16, #tpu.memory_space<vmem>>, vector<1x128x128xbf16>
    %68 = vector.shape_cast %67 : vector<1x128x128xbf16> to vector<128x128xbf16>
    %cst_46 = arith.constant dense<0.000000e+00> : vector<128x128xf32>
    %69 = tpu.matmul %66, %68, %cst_46 {dimension_numbers = #tpu.dot_dimension_numbers<[1], [0], [0], [1], [0, 0, 1, 1], [], []>} : vector<128x128xbf16>, vector<128x128xbf16>, vector<128x128xf32> -> vector<128x128xf32>
    %70 = arith.addf %64, %69 : vector<128x128xf32>
    %c25 = arith.constant 25 : index
    %c0_47 = arith.constant 0 : index
    %71 = vector.load %arg13[%c25, %c0_47] : memref<176x128xf32, #tpu.memory_space<vmem>>, vector<128x128xf32>
    %72 = arith.truncf %71 : vector<128x128xf32> to vector<128x128xbf16>
    %c5 = arith.constant 5 : index
    %c0_48 = arith.constant 0 : index
    %c0_49 = arith.constant 0 : index
    %73 = vector.load %arg5[%c5, %c0_48, %c0_49] : memref<9x128x128xbf16, #tpu.memory_space<vmem>>, vector<1x128x128xbf16>
    %74 = vector.shape_cast %73 : vector<1x128x128xbf16> to vector<128x128xbf16>
    %cst_50 = arith.constant dense<0.000000e+00> : vector<128x128xf32>
    %75 = tpu.matmul %72, %74, %cst_50 {dimension_numbers = #tpu.dot_dimension_numbers<[1], [0], [0], [1], [0, 0, 1, 1], [], []>} : vector<128x128xbf16>, vector<128x128xbf16>, vector<128x128xf32> -> vector<128x128xf32>
    %76 = arith.addf %70, %75 : vector<128x128xf32>
    %c39 = arith.constant 39 : index
    %c0_51 = arith.constant 0 : index
    %77 = vector.load %arg13[%c39, %c0_51] : memref<176x128xf32, #tpu.memory_space<vmem>>, vector<128x128xf32>
    %78 = arith.truncf %77 : vector<128x128xf32> to vector<128x128xbf16>
    %c6 = arith.constant 6 : index
    %c0_52 = arith.constant 0 : index
    %c0_53 = arith.constant 0 : index
    %79 = vector.load %arg5[%c6, %c0_52, %c0_53] : memref<9x128x128xbf16, #tpu.memory_space<vmem>>, vector<1x128x128xbf16>
    %80 = vector.shape_cast %79 : vector<1x128x128xbf16> to vector<128x128xbf16>
    %cst_54 = arith.constant dense<0.000000e+00> : vector<128x128xf32>
    %81 = tpu.matmul %78, %80, %cst_54 {dimension_numbers = #tpu.dot_dimension_numbers<[1], [0], [0], [1], [0, 0, 1, 1], [], []>} : vector<128x128xbf16>, vector<128x128xbf16>, vector<128x128xf32> -> vector<128x128xf32>
    %82 = arith.addf %76, %81 : vector<128x128xf32>
    %c40_55 = arith.constant 40 : index
    %c0_56 = arith.constant 0 : index
    %83 = vector.load %arg13[%c40_55, %c0_56] : memref<176x128xf32, #tpu.memory_space<vmem>>, vector<128x128xf32>
    %84 = arith.truncf %83 : vector<128x128xf32> to vector<128x128xbf16>
    %c7_57 = arith.constant 7 : index
    %c0_58 = arith.constant 0 : index
    %c0_59 = arith.constant 0 : index
    %85 = vector.load %arg5[%c7_57, %c0_58, %c0_59] : memref<9x128x128xbf16, #tpu.memory_space<vmem>>, vector<1x128x128xbf16>
    %86 = vector.shape_cast %85 : vector<1x128x128xbf16> to vector<128x128xbf16>
    %cst_60 = arith.constant dense<0.000000e+00> : vector<128x128xf32>
    %87 = tpu.matmul %84, %86, %cst_60 {dimension_numbers = #tpu.dot_dimension_numbers<[1], [0], [0], [1], [0, 0, 1, 1], [], []>} : vector<128x128xbf16>, vector<128x128xbf16>, vector<128x128xf32> -> vector<128x128xf32>
    %88 = arith.addf %82, %87 : vector<128x128xf32>
    %c41 = arith.constant 41 : index
    %c0_61 = arith.constant 0 : index
    %89 = vector.load %arg13[%c41, %c0_61] : memref<176x128xf32, #tpu.memory_space<vmem>>, vector<128x128xf32>
    %90 = arith.truncf %89 : vector<128x128xf32> to vector<128x128xbf16>
    %c8_62 = arith.constant 8 : index
    %c0_63 = arith.constant 0 : index
    %c0_64 = arith.constant 0 : index
    %91 = vector.load %arg5[%c8_62, %c0_63, %c0_64] : memref<9x128x128xbf16, #tpu.memory_space<vmem>>, vector<1x128x128xbf16>
    %92 = vector.shape_cast %91 : vector<1x128x128xbf16> to vector<128x128xbf16>
    %cst_65 = arith.constant dense<0.000000e+00> : vector<128x128xf32>
    %93 = tpu.matmul %90, %92, %cst_65 {dimension_numbers = #tpu.dot_dimension_numbers<[1], [0], [0], [1], [0, 0, 1, 1], [], []>} : vector<128x128xbf16>, vector<128x128xbf16>, vector<128x128xf32> -> vector<128x128xf32>
    %94 = arith.addf %88, %93 : vector<128x128xf32>
    %95 = vector.shape_cast %94 : vector<128x128xf32> to vector<8x16x128xf32>
    %96 = vector.extract_strided_slice %95 {offsets = [0, 0, 0], sizes = [8, 8, 128], strides = [1, 1, 1]} : vector<8x16x128xf32> to vector<8x8x128xf32>
    %97 = vector.shape_cast %96 : vector<8x8x128xf32> to vector<64x128xf32>
    %c0_66 = arith.constant 0 : index
    %c0_67 = arith.constant 0 : index
    %98 = vector.load %arg11[%c0_66, %c0_67] : memref<64x128xf32, #tpu.memory_space<vmem>>, vector<64x128xf32>
    %cst_68 = arith.constant 5.000000e-01 : f32
    %99 = vector.broadcast %cst_68 : f32 to vector<64x128xf32>
    %100 = arith.mulf %98, %99 : vector<64x128xf32>
    %101 = arith.addf %100, %97 : vector<64x128xf32>
    %cst_69 = arith.constant 1.000000e+00 : f32
    %102 = vector.broadcast %cst_69 : f32 to vector<64x128xf32>
    %103 = arith.cmpf oge, %101, %102 : vector<64x128xf32>
    %104 = arith.extui %103 : vector<64x128xi1> to vector<64x128xi32>
    %105 = arith.sitofp %104 : vector<64x128xi32> to vector<64x128xf32>
    %cst_70 = arith.constant 1.000000e+00 : f32
    %106 = vector.broadcast %cst_70 : f32 to vector<64x128xf32>
    %107 = arith.subf %106, %105 : vector<64x128xf32>
    %108 = arith.mulf %101, %107 : vector<64x128xf32>
    %c0_71 = arith.constant 0 : index
    %c0_72 = arith.constant 0 : index
    %109 = vector.load %arg11[%c0_71, %c0_72] : memref<64x128xf32, #tpu.memory_space<vmem>>, vector<64x128xf32>
    tpu.vector_store %arg11[%c0_71, %c0_72], %108 {strides = array<i32>} : memref<64x128xf32, #tpu.memory_space<vmem>>, vector<64x128xf32>,
    %110 = arith.truncf %105 : vector<64x128xf32> to vector<64x128xbf16>
    %c0_73 = arith.constant 0 : index
    %c0_74 = arith.constant 0 : index
    %111 = vector.load %arg7[%c0_73, %c0_74] : memref<128x256xbf16, #tpu.memory_space<vmem>>, vector<128x256xbf16>
    %cst_75 = arith.constant dense<0.000000e+00> : vector<64x256xf32>
    %112 = tpu.matmul %110, %111, %cst_75 {dimension_numbers = #tpu.dot_dimension_numbers<[1], [0], [0], [1], [0, 0, 1, 1], [], []>} : vector<64x128xbf16>, vector<128x256xbf16>, vector<64x256xf32> -> vector<64x256xf32>
    %c0_76 = arith.constant 0 : index
    %c0_77 = arith.constant 0 : index
    %113 = vector.load %arg8[%c0_76, %c0_77] : memref<1x256xf32, #tpu.memory_space<vmem>>, vector<1x256xf32>
    %114 = vector.broadcast %113 : vector<1x256xf32> to vector<64x256xf32>
    %115 = arith.addf %112, %114 : vector<64x256xf32>
    %c0_78 = arith.constant 0 : index
    %c0_79 = arith.constant 0 : index
    %116 = vector.load %arg12[%c0_78, %c0_79] : memref<64x256xf32, #tpu.memory_space<vmem>>, vector<64x256xf32>
    %cst_80 = arith.constant 5.000000e-01 : f32
    %117 = vector.broadcast %cst_80 : f32 to vector<64x256xf32>
    %118 = arith.mulf %116, %117 : vector<64x256xf32>
    %119 = arith.addf %118, %115 : vector<64x256xf32>
    %cst_81 = arith.constant 1.000000e+00 : f32
    %120 = vector.broadcast %cst_81 : f32 to vector<64x256xf32>
    %121 = arith.cmpf oge, %119, %120 : vector<64x256xf32>
    %122 = arith.extui %121 : vector<64x256xi1> to vector<64x256xi32>
    %123 = arith.sitofp %122 : vector<64x256xi32> to vector<64x256xf32>
    %cst_82 = arith.constant 1.000000e+00 : f32
    %124 = vector.broadcast %cst_82 : f32 to vector<64x256xf32>
    %125 = arith.subf %124, %123 : vector<64x256xf32>
    %126 = arith.mulf %119, %125 : vector<64x256xf32>
    %c0_83 = arith.constant 0 : index
    %c0_84 = arith.constant 0 : index
    %127 = vector.load %arg12[%c0_83, %c0_84] : memref<64x256xf32, #tpu.memory_space<vmem>>, vector<64x256xf32>
    tpu.vector_store %arg12[%c0_83, %c0_84], %126 {strides = array<i32>} : memref<64x256xf32, #tpu.memory_space<vmem>>, vector<64x256xf32>,
    %128 = vector.extract_strided_slice %123 {offsets = [0, 0], sizes = [64, 128], strides = [1, 1]} : vector<64x256xf32> to vector<64x128xf32>
    %129 = vector.extract_strided_slice %123 {offsets = [0, 128], sizes = [64, 128], strides = [1, 1]} : vector<64x256xf32> to vector<64x128xf32>
    %130 = arith.mulf %4, %128 : vector<64x128xf32>
    %cst_85 = arith.constant 1.000000e+00 : f32
    %131 = vector.broadcast %cst_85 : f32 to vector<64x128xf32>
    %132 = arith.subf %131, %129 : vector<64x128xf32>
    %133 = arith.addf %4, %128 : vector<64x128xf32>
    %cst_86 = arith.constant 2.000000e+00 : f32
    %134 = vector.broadcast %cst_86 : f32 to vector<64x128xf32>
    %135 = arith.mulf %134, %4 : vector<64x128xf32>
    %136 = arith.mulf %135, %128 : vector<64x128xf32>
    %137 = arith.subf %133, %136 : vector<64x128xf32>
    %138 = arith.mulf %132, %137 : vector<64x128xf32>
    %139 = arith.addf %130, %138 : vector<64x128xf32>
    %c0_87 = arith.constant 0 : index
    %c0_88 = arith.constant 0 : index
    %c0_89 = arith.constant 0 : index
    %c0_90 = arith.constant 0 : index
    %140 = vector.load %arg9[%c0_87, %c0_88, %c0_89, %c0_90] : memref<1x1x64x128xf32, #tpu.memory_space<vmem>>, vector<1x1x64x128xf32>
    %141 = vector.shape_cast %140 : vector<1x1x64x128xf32> to vector<64x128xf32>
    %142 = vector.shape_cast %139 : vector<64x128xf32> to vector<1x1x64x128xf32>
    tpu.vector_store %arg9[%c0_87, %c0_88, %c0_89, %c0_90], %142 {strides = array<i32>} : memref<1x1x64x128xf32, #tpu.memory_space<vmem>>, vector<1x1x64x128xf32>,
    return
  }
  func.func @transform_0(%arg0: i32, %arg1: i32) -> (i32, i32, i32, i32) {
    %c0_i32 = arith.constant 0 : i32
    %c0_i32_0 = arith.constant 0 : i32
    %c0_i32_1 = arith.constant 0 : i32
    return %arg1, %arg0, %c0_i32, %c0_i32_0 : i32, i32, i32, i32
  }
  func.func @transform_1(%arg0: i32, %arg1: i32) -> (i32, i32) {
    %c0_i32 = arith.constant 0 : i32
    %c0_i32_0 = arith.constant 0 : i32
    %c0_i32_1 = arith.constant 0 : i32
    return %c0_i32, %c0_i32_0 : i32, i32
  }
  func.func @transform_2(%arg0: i32, %arg1: i32) -> (i32, i32) {
    %c0_i32 = arith.constant 0 : i32
    %c0_i32_0 = arith.constant 0 : i32
    %c0_i32_1 = arith.constant 0 : i32
    return %c0_i32, %c0_i32_0 : i32, i32
  }
  func.func @transform_3(%arg0: i32, %arg1: i32) -> (i32, i32, i32) {
    %c0_i32 = arith.constant 0 : i32
    %c0_i32_0 = arith.constant 0 : i32
    %c0_i32_1 = arith.constant 0 : i32
    %c0_i32_2 = arith.constant 0 : i32
    return %c0_i32, %c0_i32_0, %c0_i32_1 : i32, i32, i32
  }
  func.func @transform_4(%arg0: i32, %arg1: i32) -> (i32, i32) {
    %c0_i32 = arith.constant 0 : i32
    %c0_i32_0 = arith.constant 0 : i32
    %c0_i32_1 = arith.constant 0 : i32
    return %c0_i32, %c0_i32_0 : i32, i32
  }
  func.func @transform_5(%arg0: i32, %arg1: i32) -> (i32, i32) {
    %c0_i32 = arith.constant 0 : i32
    %c0_i32_0 = arith.constant 0 : i32
    %c0_i32_1 = arith.constant 0 : i32
    return %c0_i32, %c0_i32_0 : i32, i32
  }
  func.func @transform_6(%arg0: i32, %arg1: i32) -> (i32, i32) {
    %c0_i32 = arith.constant 0 : i32
    %c0_i32_0 = arith.constant 0 : i32
    %c0_i32_1 = arith.constant 0 : i32
    return %c0_i32, %c0_i32_0 : i32, i32
  }
  func.func @transform_7(%arg0: i32, %arg1: i32) -> (i32, i32, i32, i32) {
    %c0_i32 = arith.constant 0 : i32
    %c0_i32_0 = arith.constant 0 : i32
    %c0_i32_1 = arith.constant 0 : i32
    return %arg1, %arg0, %c0_i32, %c0_i32_0 : i32, i32, i32, i32
  }
}

</mosaic_0001>

<llo_original>
// kernel: _lambda_.1
$region0: #{_lambda_.1}
  #allocation0 [shape = 'u32[]', space=smem, size = 0x4, offset = 0x4, fixed_abs, tag = 'smem constant byte address 0x4 - core index']
  #allocation1 [shape = 'u32[144,128]{1,0:T(1,128)}', space=vmem, size = 0x12000, scoped, tag = 'internal scratch']
  #allocation2 [shape = 'f32[64,128]{1,0:T(8,128)}', space=vmem, size = 0x8000, scoped, tag = 'scratch operand']
  #allocation3 [shape = 'f32[64,128]{1,0:T(8,128)}', space=vmem, size = 0x8000, scoped, tag = 'scratch operand']
  #allocation4 [shape = 'f32[64,256]{1,0:T(8,128)}', space=vmem, size = 0x10000, scoped, tag = 'scratch operand']
  #allocation5 [shape = 'f32[176,128]{1,0:T(8,128)}', space=vmem, size = 0x16000, scoped, tag = 'scratch operand']
  %s0 = inlined_call_operand.vmem [shape: f32[4,2,64,128], index: 0, kind: input, shape index: {}]
  %s1 = inlined_call_operand.vmem [shape: bf16[128,128], index: 1, kind: input, shape index: {}]
  %s2 = inlined_call_operand.vmem [shape: f32[1,128], index: 2, kind: input, shape index: {}]
  %s3 = inlined_call_operand.vmem [shape: bf16[9,128,128], index: 3, kind: input, shape index: {}]
  %s4 = inlined_call_operand.vmem [shape: f32[1,128], index: 4, kind: input, shape index: {}]
  %s5 = inlined_call_operand.vmem [shape: bf16[128,256], index: 5, kind: input, shape index: {}]
  %s6 = inlined_call_operand.vmem [shape: f32[1,256], index: 6, kind: input, shape index: {}]
  %s7 = inlined_call_operand.vmem [shape: f32[4,2,64,128], index: 7, kind: output, shape index: {}]
  %s8 = sld [smem:[#allocation0]]
  $region65: #{_lambda_.1} parent=0
    _
  %s10 = ssub.s32 1, %s8
  %s11 = scalar_select 0, %s10, %s8
  loop: start=0, step=1, limit=10
  $region2: #{_lambda_.1} parent=0 // loop_pre_header
    _
  $region3: #{_lambda_.1} parent=0 // loop_header
    %s13 = sphi 0, %s17
    %p14 = scmp.ge.s32.totalorder %s13, 10
    %s20 = sphi 0, %s32
    %s21 = sphi 0, %s28
    %s22 = sphi 0, %s20
    %s23 = sphi 0, %s21
    %s24 = sphi 0, %s22
    %s25 = sphi 0, %s23
    %s37 = sphi 0, %s39
    %s40 = sphi 0, %s37
    %s41 = sphi 0, %s40
    %s57 = sphi 0, %s41
    %s61 = sphi 0, %s61
    %s63 = sphi 0, %s61
    %s64 = sphi 0, %s63
    %s78 = sphi 0, %s64
    %s82 = sphi 0, %s82
    %s84 = sphi 0, %s82
    %s85 = sphi 0, %s84
    %s99 = sphi 0, %s85
    %s103 = sphi 0, %s103
    %s105 = sphi 0, %s103
    %s106 = sphi 0, %s105
    %s120 = sphi 0, %s106
    %s124 = sphi 0, %s124
    %s126 = sphi 0, %s124
    %s127 = sphi 0, %s126
    %s141 = sphi 0, %s127
    %s145 = sphi 0, %s145
    %s147 = sphi 0, %s145
    %s148 = sphi 0, %s147
    %s162 = sphi 0, %s148
    %s166 = sphi 0, %s166
    %s168 = sphi 0, %s166
    %s169 = sphi 0, %s168
    %s183 = sphi 0, %s169
    %s191 = sphi 0, %s193
    %s194 = sphi 0, %s191
    %s195 = sphi 0, %s194
    %s211 = sphi 0, %s195
  $region4: #{_lambda_.1} parent=0 // loop_header_branch
    %16 = sbr.rel (%p14) target = $region8
  $region5: #{_lambda_.1} parent=0 // loop_body
    %s18 = ssub.s32 %s13, 1
    %s19 = ssub.s32 %s13, 2
    %s26 = sadd.s32 1, %s21
    %p27 = scmp.ge.s32.totalorder %s26, 4
    %s28 = scalar_select %p27, 0, %s26
    %s29 = sadd.s32 1, %s20
    %s30 = scalar_select %p27, %s29, %s20
    %p31 = scmp.ge.s32.totalorder %s30, 2
    %s32 = scalar_select %p31, 0, %s30
    %s33 = ssub.s32 %s21, %s28
    %s34 = ssub.s32 %s20, %s32
    %s35 = sor.u32 %s33, %s34
    %p36 = scmp.eq.s32.totalorder %s35, 0
    %s38 = sadd.s32 %s37, 1
    %s39 = scalar_select %p36, %s37, %s38
    %p42 = pneg %p36
    %p43 = scmp.eq.s32.totalorder %s13, 7
    %p44 = por %p42, %p43
    %p45 = scmp.ne.s32.totalorder %s37, %s40
    %p46 = scmp.eq.s32.totalorder %s13, 0
    %p47 = por %p45, %p46
    %p48 = scmp.ne.s32.totalorder %s37, %s40
    %p49 = scmp.eq.s32.totalorder %s18, 7
    %p50 = por %p48, %p49
    %p51 = scmp.ne.s32.totalorder %s40, %s41
    %p52 = scmp.eq.s32.totalorder %s18, 0
    %p53 = por %p51, %p52
    %p54 = scmp.ne.s32.totalorder %s40, %s41
    %p55 = scmp.eq.s32.totalorder %s19, 7
    %p56 = por %p54, %p55
    %p58 = scmp.ne.s32.totalorder %s41, %s57
    %p59 = scmp.eq.s32.totalorder %s19, 0
    %p60 = por %p58, %p59
    %s62 = sadd.s32 %s61, 1
    %p65 = scmp.eq.s32.totalorder %s13, 7
    %p66 = scmp.ne.s32.totalorder %s61, %s63
    %p67 = scmp.eq.s32.totalorder %s13, 0
    %p68 = por %p66, %p67
    %p69 = scmp.ne.s32.totalorder %s61, %s63
    %p70 = scmp.eq.s32.totalorder %s18, 7
    %p71 = por %p69, %p70
    %p72 = scmp.ne.s32.totalorder %s63, %s64
    %p73 = scmp.eq.s32.totalorder %s18, 0
    %p74 = por %p72, %p73
    %p75 = scmp.ne.s32.totalorder %s63, %s64
    %p76 = scmp.eq.s32.totalorder %s19, 7
    %p77 = por %p75, %p76
    %p79 = scmp.ne.s32.totalorder %s64, %s78
    %p80 = scmp.eq.s32.totalorder %s19, 0
    %p81 = por %p79, %p80
    %s83 = sadd.s32 %s82, 1
    %p86 = scmp.eq.s32.totalorder %s13, 7
    %p87 = scmp.ne.s32.totalorder %s82, %s84
    %p88 = scmp.eq.s32.totalorder %s13, 0
    %p89 = por %p87, %p88
    %p90 = scmp.ne.s32.totalorder %s82, %s84
    %p91 = scmp.eq.s32.totalorder %s18, 7
    %p92 = por %p90, %p91
    %p93 = scmp.ne.s32.totalorder %s84, %s85
    %p94 = scmp.eq.s32.totalorder %s18, 0
    %p95 = por %p93, %p94
    %p96 = scmp.ne.s32.totalorder %s84, %s85
    %p97 = scmp.eq.s32.totalorder %s19, 7
    %p98 = por %p96, %p97
    %p100 = scmp.ne.s32.totalorder %s85, %s99
    %p101 = scmp.eq.s32.totalorder %s19, 0
    %p102 = por %p100, %p101
    %s104 = sadd.s32 %s103, 1
    %p107 = scmp.eq.s32.totalorder %s13, 7
    %p108 = scmp.ne.s32.totalorder %s103, %s105
    %p109 = scmp.eq.s32.totalorder %s13, 0
    %p110 = por %p108, %p109
    %p111 = scmp.ne.s32.totalorder %s103, %s105
    %p112 = scmp.eq.s32.totalorder %s18, 7
    %p113 = por %p111, %p112
    %p114 = scmp.ne.s32.totalorder %s105, %s106
    %p115 = scmp.eq.s32.totalorder %s18, 0
    %p116 = por %p114, %p115
    %p117 = scmp.ne.s32.totalorder %s105, %s106
    %p118 = scmp.eq.s32.totalorder %s19, 7
    %p119 = por %p117, %p118
    %p121 = scmp.ne.s32.totalorder %s106, %s120
    %p122 = scmp.eq.s32.totalorder %s19, 0
    %p123 = por %p121, %p122
    %s125 = sadd.s32 %s124, 1
    %p128 = scmp.eq.s32.totalorder %s13, 7
    %p129 = scmp.ne.s32.totalorder %s124, %s126
    %p130 = scmp.eq.s32.totalorder %s13, 0
    %p131 = por %p129, %p130
    %p132 = scmp.ne.s32.totalorder %s124, %s126
    %p133 = scmp.eq.s32.totalorder %s18, 7
    %p134 = por %p132, %p133
    %p135 = scmp.ne.s32.totalorder %s126, %s127
    %p136 = scmp.eq.s32.totalorder %s18, 0
    %p137 = por %p135, %p136
    %p138 = scmp.ne.s32.totalorder %s126, %s127
    %p139 = scmp.eq.s32.totalorder %s19, 7
    %p140 = por %p138, %p139
    %p142 = scmp.ne.s32.totalorder %s127, %s141
    %p143 = scmp.eq.s32.totalorder %s19, 0
    %p144 = por %p142, %p143
    %s146 = sadd.s32 %s145, 1
    %p149 = scmp.eq.s32.totalorder %s13, 7
    %p150 = scmp.ne.s32.totalorder %s145, %s147
    %p151 = scmp.eq.s32.totalorder %s13, 0
    %p152 = por %p150, %p151
    %p153 = scmp.ne.s32.totalorder %s145, %s147
    %p154 = scmp.eq.s32.totalorder %s18, 7
    %p155 = por %p153, %p154
    %p156 = scmp.ne.s32.totalorder %s147, %s148
    %p157 = scmp.eq.s32.totalorder %s18, 0
    %p158 = por %p156, %p157
    %p159 = scmp.ne.s32.totalorder %s147, %s148
    %p160 = scmp.eq.s32.totalorder %s19, 7
    %p161 = por %p159, %p160
    %p163 = scmp.ne.s32.totalorder %s148, %s162
    %p164 = scmp.eq.s32.totalorder %s19, 0
    %p165 = por %p163, %p164
    %s167 = sadd.s32 %s166, 1
    %p170 = scmp.eq.s32.totalorder %s13, 7
    %p171 = scmp.ne.s32.totalorder %s166, %s168
    %p172 = scmp.eq.s32.totalorder %s13, 0
    %p173 = por %p171, %p172
    %p174 = scmp.ne.s32.totalorder %s166, %s168
    %p175 = scmp.eq.s32.totalorder %s18, 7
    %p176 = por %p174, %p175
    %p177 = scmp.ne.s32.totalorder %s168, %s169
    %p178 = scmp.eq.s32.totalorder %s18, 0
    %p179 = por %p177, %p178
    %p180 = scmp.ne.s32.totalorder %s168, %s169
    %p181 = scmp.eq.s32.totalorder %s19, 7
    %p182 = por %p180, %p181
    %p184 = scmp.ne.s32.totalorder %s169, %s183
    %p185 = scmp.eq.s32.totalorder %s19, 0
    %p186 = por %p184, %p185
    %s187 = ssub.s32 %s21, %s28
    %s188 = ssub.s32 %s20, %s32
    %s189 = sor.u32 %s187, %s188
    %p190 = scmp.eq.s32.totalorder %s189, 0
    %s192 = sadd.s32 %s191, 1
    %s193 = scalar_select %p190, %s191, %s192
    %p196 = pneg %p190
    %p197 = scmp.eq.s32.totalorder %s13, 7
    %p198 = por %p196, %p197
    %p199 = scmp.ne.s32.totalorder %s191, %s194
    %p200 = scmp.eq.s32.totalorder %s13, 0
    %p201 = por %p199, %p200
    %p202 = scmp.ne.s32.totalorder %s191, %s194
    %p203 = scmp.eq.s32.totalorder %s18, 7
    %p204 = por %p202, %p203
    %p205 = scmp.ne.s32.totalorder %s194, %s195
    %p206 = scmp.eq.s32.totalorder %s18, 0
    %p207 = por %p205, %p206
    %p208 = scmp.ne.s32.totalorder %s194, %s195
    %p209 = scmp.eq.s32.totalorder %s19, 7
    %p210 = por %p208, %p209
    %p212 = scmp.ne.s32.totalorder %s195, %s211
    %p213 = scmp.eq.s32.totalorder %s19, 0
    %p214 = por %p212, %p213
    %p215 = scmp.le.s32.totalorder 1, %s13
    %p216 = scmp.lt.s32.totalorder %s13, 9
    %p217 = pnand %p215, %p216
    %p218 = pneg %p217
    // Predicated region
    $region9: #{_lambda_.1} parent=5 // pred_check
      _
    $region10: #{_lambda_.1} parent=5 // pred_check_branch
      %220 = sbr.rel (%p217) target = $region12
    $region11: #{_lambda_.1} parent=5 // pred_region
      %s221 = ssub.s32 %s13, 1
      // Predicated region
      $region13: #{_lambda_.1} parent=11 // pred_check
        %p222 = pneg %p74
      $region14: #{_lambda_.1} parent=11 // pred_check_branch
        %224 = sbr.rel (%p222) target = $region16
      $region15: #{_lambda_.1} parent=11 // pred_region
        _
      $region16: #{_lambda_.1} parent=11 // pred_fallthru
        _
      // Predicated region
      $region17: #{_lambda_.1} parent=11 // pred_check
        %p225 = pneg %p95
      $region18: #{_lambda_.1} parent=11 // pred_check_branch
        %227 = sbr.rel (%p225) target = $region20
      $region19: #{_lambda_.1} parent=11 // pred_region
        _
      $region20: #{_lambda_.1} parent=11 // pred_fallthru
        _
      // Predicated region
      $region21: #{_lambda_.1} parent=11 // pred_check
        %p228 = pneg %p116
      $region22: #{_lambda_.1} parent=11 // pred_check_branch
        %230 = sbr.rel (%p228) target = $region24
      $region23: #{_lambda_.1} parent=11 // pred_region
        _
      $region24: #{_lambda_.1} parent=11 // pred_fallthru
        _
      // Predicated region
      $region25: #{_lambda_.1} parent=11 // pred_check
        %p231 = pneg %p137
      $region26: #{_lambda_.1} parent=11 // pred_check_branch
        %233 = sbr.rel (%p231) target = $region28
      $region27: #{_lambda_.1} parent=11 // pred_region
        _
      $region28: #{_lambda_.1} parent=11 // pred_fallthru
        _
      // Predicated region
      $region29: #{_lambda_.1} parent=11 // pred_check
        %p234 = pneg %p158
      $region30: #{_lambda_.1} parent=11 // pred_check_branch
        %236 = sbr.rel (%p234) target = $region32
      $region31: #{_lambda_.1} parent=11 // pred_region
        _
      $region32: #{_lambda_.1} parent=11 // pred_fallthru
        _
      // Predicated region
      $region33: #{_lambda_.1} parent=11 // pred_check
        %p237 = pneg %p179
      $region34: #{_lambda_.1} parent=11 // pred_check_branch
        %239 = sbr.rel (%p237) target = $region36
      $region35: #{_lambda_.1} parent=11 // pred_region
        _
      $region36: #{_lambda_.1} parent=11 // pred_fallthru
        _
    $region12: #{_lambda_.1} parent=5 // pred_fallthru
      _
    %p240 = scmp.lt.s32.totalorder %s13, 8
    // Predicated region
    $region37: #{_lambda_.1} parent=5 // pred_check
      %p241 = pneg %p240
    $region38: #{_lambda_.1} parent=5 // pred_check_branch
      %243 = sbr.rel (%p241) target = $region40
    $region39: #{_lambda_.1} parent=5 // pred_region
      // Predicated region
      $region41: #{_lambda_.1} parent=39 // pred_check
        %p244 = pneg %p47
      $region42: #{_lambda_.1} parent=39 // pred_check_branch
        %246 = sbr.rel (%p244) target = $region44
      $region43: #{_lambda_.1} parent=39 // pred_region
        %p247 = scmp.lt.s32.totalorder %s21, 3
        %s248 = scalar_select %p247, %s21, 3
        %p249 = scmp.lt.s32.totalorder %s20, 1
        %s250 = scalar_select %p249, %s20, 1
        %s251 = smul.addr %s250, 8
        %s252 = smul.addr %s248, 16
        %s253 = sadd.s32 %s251, %s252
        %s254 = smul.addr %s253, 8
        %s255 = scalar_lea.vmem %s0, %s254
      $region44: #{_lambda_.1} parent=39 // pred_fallthru
        _
    $region40: #{_lambda_.1} parent=5 // pred_fallthru
      _
    %p256 = scmp.le.s32.totalorder 1, %s13
    %p257 = scmp.lt.s32.totalorder %s13, 9
    %p258 = pnand %p256, %p257
    %p259 = pneg %p258
    // Predicated region
    $region45: #{_lambda_.1} parent=5 // pred_check
      _
    $region46: #{_lambda_.1} parent=5 // pred_check_branch
      %261 = sbr.rel (%p258) target = $region48
    $region47: #{_lambda_.1} parent=5 // pred_region
      %s262 = ssub.s32 %s13, 1
      %p263 = scmp.lt.s32.totalorder %s23, 3
      %s264 = scalar_select %p263, %s23, 3
      %p265 = scmp.lt.s32.totalorder %s22, 1
      %s266 = scalar_select %p265, %s22, 1
      %s267 = smul.addr %s266, 8
      %s268 = smul.addr %s264, 16
      %s269 = sadd.s32 %s267, %s268
      %s270 = smul.addr %s269, 8
      %s271 = scalar_lea.vmem %s0, %s270
      %p272 = pneg %p53
      %p273 = pneg %p50
      %p274 = pneg %p74
      %p275 = pneg %p71
      %p276 = pneg %p95
      %p277 = pneg %p92
      %p278 = pneg %p116
      %p279 = pneg %p113
      %p280 = pneg %p137
      %p281 = pneg %p134
      %p282 = pneg %p158
      %p283 = pneg %p155
      %p284 = pneg %p179
      %p285 = pneg %p176
      %p286 = pneg %p207
      %p287 = pneg %p204
      %p288 = scmp.lt.s32.totalorder %s23, 3
      %s289 = scalar_select %p288, %s23, 3
      %p290 = scmp.lt.s32.totalorder %s22, 1
      %s291 = scalar_select %p290, %s22, 1
      %s292 = smul.addr %s291, 8
      %s293 = smul.addr %s289, 16
      %s294 = sadd.s32 %s292, %s293
      %s295 = smul.addr %s294, 8
      %s296 = scalar_lea.vmem %s7, %s295
      %p297 = scmp.lt.s32.totalorder %s23, 3
      %s298 = scalar_select %p297, %s23, 3
      %p299 = scmp.lt.s32.totalorder %s22, 1
      %s300 = scalar_select %p299, %s22, 1
      %s301 = smul.addr %s300, 8
      %s302 = smul.addr %s298, 16
      %s303 = sadd.s32 %s301, %s302
      %s304 = smul.addr %s303, 8
      %s305 = scalar_lea.vmem %s0, %s304
      %p306 = scmp.lt.s32.totalorder %s23, 3
      %s307 = scalar_select %p306, %s23, 3
      %p308 = scmp.lt.s32.totalorder %s22, 1
      %s309 = scalar_select %p308, %s22, 1
      %s310 = smul.addr %s309, 8
      %s311 = smul.addr %s307, 16
      %s312 = sadd.s32 %s310, %s311
      %s313 = smul.addr %s312, 8
      %s314 = scalar_lea.vmem %s7, %s313
      %p316 = scmp.eq.s32.totalorder %s23, 0
      // Predicated region
      $region49: #{_lambda_.1} parent=47 // pred_check
        %p317 = pneg %p316
      $region50: #{_lambda_.1} parent=47 // pred_check_branch
        %319 = sbr.rel (%p317) target = $region52
      $region51: #{_lambda_.1} parent=47 // pred_region
        %320 = vst [vmem:[#allocation2] sm:$0xff] 0.0
        %321 = vst [vmem:[#allocation2 + $0x8] sm:$0xff] 0.0
        %322 = vst [vmem:[#allocation2 + $0x10] sm:$0xff] 0.0
        %323 = vst [vmem:[#allocation2 + $0x18] sm:$0xff] 0.0
        %324 = vst [vmem:[#allocation2 + $0x20] sm:$0xff] 0.0
        %325 = vst [vmem:[#allocation2 + $0x28] sm:$0xff] 0.0
        %326 = vst [vmem:[#allocation2 + $0x30] sm:$0xff] 0.0
        %327 = vst [vmem:[#allocation2 + $0x38] sm:$0xff] 0.0
        %328 = vst [vmem:[#allocation3] sm:$0xff] 0.0
        %329 = vst [vmem:[#allocation3 + $0x8] sm:$0xff] 0.0
        %330 = vst [vmem:[#allocation3 + $0x10] sm:$0xff] 0.0
        %331 = vst [vmem:[#allocation3 + $0x18] sm:$0xff] 0.0
        %332 = vst [vmem:[#allocation3 + $0x20] sm:$0xff] 0.0
        %333 = vst [vmem:[#allocation3 + $0x28] sm:$0xff] 0.0
        %334 = vst [vmem:[#allocation3 + $0x30] sm:$0xff] 0.0
        %335 = vst [vmem:[#allocation3 + $0x38] sm:$0xff] 0.0
        %336 = vst [vmem:[#allocation4] sm:$0xff] 0.0
        %337 = vst [vmem:[#allocation4 + $0x8] sm:$0xff] 0.0
        %338 = vst [vmem:[#allocation4 + $0x10] sm:$0xff] 0.0
        %339 = vst [vmem:[#allocation4 + $0x18] sm:$0xff] 0.0
        %340 = vst [vmem:[#allocation4 + $0x20] sm:$0xff] 0.0
        %341 = vst [vmem:[#allocation4 + $0x28] sm:$0xff] 0.0
        %342 = vst [vmem:[#allocation4 + $0x30] sm:$0xff] 0.0
        %343 = vst [vmem:[#allocation4 + $0x38] sm:$0xff] 0.0
        %344 = vst [vmem:[#allocation4 + $0x40] sm:$0xff] 0.0
        %345 = vst [vmem:[#allocation4 + $0x48] sm:$0xff] 0.0
        %346 = vst [vmem:[#allocation4 + $0x50] sm:$0xff] 0.0
        %347 = vst [vmem:[#allocation4 + $0x58] sm:$0xff] 0.0
        %348 = vst [vmem:[#allocation4 + $0x60] sm:$0xff] 0.0
        %349 = vst [vmem:[#allocation4 + $0x68] sm:$0xff] 0.0
        %350 = vst [vmem:[#allocation4 + $0x70] sm:$0xff] 0.0
        %351 = vst [vmem:[#allocation4 + $0x78] sm:$0xff] 0.0
        %352 = vst [vmem:[#allocation5] sm:$0xff] 0.0
        %353 = vst [vmem:[#allocation5 + $0x8] sm:$0xff] 0.0
        %354 = vst [vmem:[#allocation5 + $0x10] sm:$0xff] 0.0
        %355 = vst [vmem:[#allocation5 + $0x18] sm:$0xff] 0.0
        %356 = vst [vmem:[#allocation5 + $0x20] sm:$0xff] 0.0
        %357 = vst [vmem:[#allocation5 + $0x28] sm:$0xff] 0.0
        %358 = vst [vmem:[#allocation5 + $0x30] sm:$0xff] 0.0
        %359 = vst [vmem:[#allocation5 + $0x38] sm:$0xff] 0.0
        %360 = vst [vmem:[#allocation5 + $0x40] sm:$0xff] 0.0
        %361 = vst [vmem:[#allocation5 + $0x48] sm:$0xff] 0.0
        %362 = vst [vmem:[#allocation5 + $0x50] sm:$0xff] 0.0
        %363 = vst [vmem:[#allocation5 + $0x58] sm:$0xff] 0.0
        %364 = vst [vmem:[#allocation5 + $0x60] sm:$0xff] 0.0
        %365 = vst [vmem:[#allocation5 + $0x68] sm:$0xff] 0.0
        %366 = vst [vmem:[#allocation5 + $0x70] sm:$0xff] 0.0
        %367 = vst [vmem:[#allocation5 + $0x78] sm:$0xff] 0.0
        %368 = vst [vmem:[#allocation5 + $0x80] sm:$0xff] 0.0
        %369 = vst [vmem:[#allocation5 + $0x88] sm:$0xff] 0.0
        %370 = vst [vmem:[#allocation5 + $0x90] sm:$0xff] 0.0
        %371 = vst [vmem:[#allocation5 + $0x98] sm:$0xff] 0.0
        %372 = vst [vmem:[#allocation5 + $0xa0] sm:$0xff] 0.0
        %373 = vst [vmem:[#allocation5 + $0xa8] sm:$0xff] 0.0
      $region52: #{_lambda_.1} parent=47 // pred_fallthru
        _
      %v374 = vld [vmem:[%s305] sm:$0xff]
      %v375 = vld [vmem:[%s305 + $0x8] sm:$0xff]
      %v376 = vld [vmem:[%s305 + $0x10] sm:$0xff]
      %v377 = vld [vmem:[%s305 + $0x18] sm:$0xff]
      %v378 = vld [vmem:[%s305 + $0x20] sm:$0xff]
      %v379 = vld [vmem:[%s305 + $0x28] sm:$0xff]
      %v380 = vld [vmem:[%s305 + $0x30] sm:$0xff]
      %v381 = vld [vmem:[%s305 + $0x38] sm:$0xff]
      %v382 = vpack.c.bf16 %v375, %v374
      %v383 = vpack.c.bf16 %v377, %v376
      %v384 = vpack.c.bf16 %v379, %v378
      %v385 = vpack.c.bf16 %v381, %v380
      %v386 = vld [vmem:[%s1] sm:$0xf]
      %v387 = vld [vmem:[%s1 + $0x4] sm:$0xf]
      %v388 = vld [vmem:[%s1 + $0x8] sm:$0xf]
      %v389 = vld [vmem:[%s1 + $0xc] sm:$0xf]
      %v390 = vld [vmem:[%s1 + $0x10] sm:$0xf]
      %v391 = vld [vmem:[%s1 + $0x14] sm:$0xf]
      %v392 = vld [vmem:[%s1 + $0x18] sm:$0xf]
      %v393 = vld [vmem:[%s1 + $0x1c] sm:$0xf]
      %v394 = vld [vmem:[%s1 + $0x20] sm:$0xf]
      %v395 = vld [vmem:[%s1 + $0x24] sm:$0xf]
      %v396 = vld [vmem:[%s1 + $0x28] sm:$0xf]
      %v397 = vld [vmem:[%s1 + $0x2c] sm:$0xf]
      %v398 = vld [vmem:[%s1 + $0x30] sm:$0xf]
      %v399 = vld [vmem:[%s1 + $0x34] sm:$0xf]
      %v400 = vld [vmem:[%s1 + $0x38] sm:$0xf]
      %v401 = vld [vmem:[%s1 + $0x3c] sm:$0xf]
      %v402 = vld [vmem:[%s2] sm:$0x1]
      %v404 = vlaneseq
      %v405 = vshrl.u32 %v404, 7
      %v406 = vsub.s32 0, %v405
      %v407 = vrot.slane %v402, %v406
      %v425 = vunpack.c.l.b16 %v386
      %v426 = vunpack.c.l.b16 %v387
      %v427 = vunpack.c.l.b16 %v388
      %v428 = vunpack.c.l.b16 %v389
      %v429 = vunpack.c.l.b16 %v390
      %v430 = vunpack.c.l.b16 %v391
      %v431 = vunpack.c.l.b16 %v392
      %v432 = vunpack.c.l.b16 %v393
      %v433 = vunpack.c.l.b16 %v394
      %v434 = vunpack.c.l.b16 %v395
      %v435 = vunpack.c.l.b16 %v396
      %v436 = vunpack.c.l.b16 %v397
      %v437 = vunpack.c.l.b16 %v398
      %v438 = vunpack.c.l.b16 %v399
      %v439 = vunpack.c.l.b16 %v400
      %v440 = vunpack.c.l.b16 %v401
      %v441 = vpack.c.b16 %v426, %v425
      %v442 = vpack.c.b16 %v428, %v427
      %v443 = vpack.c.b16 %v430, %v429
      %v444 = vpack.c.b16 %v432, %v431
      %v445 = vpack.c.b16 %v434, %v433
      %v446 = vpack.c.b16 %v436, %v435
      %v447 = vpack.c.b16 %v438, %v437
      %v448 = vpack.c.b16 %v440, %v439
      %457 = vmatprep.subr.bf16.mxu0 0
      %458 = vmatpush1.bf16.msra.mxu0 %v441
      %459 = vmatprep.subr.bf16.mxu0 0
      %460 = vmatpush1.bf16.msra.mxu0 %v442
      %461 = vmatprep.subr.bf16.mxu0 0
      %462 = vmatpush1.bf16.msra.mxu0 %v443
      %463 = vmatprep.subr.bf16.mxu0 0
      %464 = vmatpush1.bf16.msra.mxu0 %v444
      %465 = vmatprep.subr.bf16.mxu0 0
      %466 = vmatpush1.bf16.msra.mxu0 %v445
      %467 = vmatprep.subr.bf16.mxu0 0
      %468 = vmatpush1.bf16.msra.mxu0 %v446
      %469 = vmatprep.subr.bf16.mxu0 0
      %470 = vmatpush1.bf16.msra.mxu0 %v447
      %471 = vmatprep.subr.bf16.mxu0 0
      %472 = vmatpush1.bf16.msra.mxu0 %v448
      %473 = vmatprep.subr.bf16.mxu0 0
      %474 = vmatpush1.bf16.msra.mxu0 0
      %475 = vmatprep.subr.bf16.mxu0 0
      %476 = vmatpush1.bf16.msra.mxu0 0
      %477 = vmatprep.subr.bf16.mxu0 0
      %478 = vmatpush1.bf16.msra.mxu0 0
      %479 = vmatprep.subr.bf16.mxu0 0
      %480 = vmatpush1.bf16.msra.mxu0 0
      %481 = vmatprep.subr.bf16.mxu0 0
      %482 = vmatpush1.bf16.msra.mxu0 0
      %483 = vmatprep.subr.bf16.mxu0 0
      %484 = vmatpush1.bf16.msra.mxu0 0
      %485 = vmatprep.subr.bf16.mxu0 0
      %486 = vmatpush1.bf16.msra.mxu0 0
      %487 = vmatprep.subr.bf16.mxu0 0
      %488 = vmatpush1.bf16.msra.mxu0 0
      %489 = vmatprep.mubr.bf16.mxu0 0
      %490 = vmatmul.mubr.bf16.gmra.mrb[0].mxu0 %v382
      %v491 = vpop.f32.mrb[0].mxu0
      %v492 = vadd.f32 %v407, %v491
      %v493 = vpop.f32.mrb[0].mxu0
      %v494 = vpop.f32.mrb[0].mxu0
      %v495 = vadd.f32 %v407, %v494
      %v496 = vpop.f32.mrb[0].mxu0
      %497 = vmatprep.mubr.bf16.mxu0 0
      %498 = vmatmul.mubr.bf16.gmra.mrb[0].mxu0 %v383
      %v499 = vpop.f32.mrb[0].mxu0
      %v500 = vadd.f32 %v407, %v499
      %v501 = vpop.f32.mrb[0].mxu0
      %v502 = vpop.f32.mrb[0].mxu0
      %v503 = vadd.f32 %v407, %v502
      %v504 = vpop.f32.mrb[0].mxu0
      %505 = vmatprep.mubr.bf16.mxu0 0
      %506 = vmatmul.mubr.bf16.gmra.mrb[0].mxu0 %v384
      %v507 = vpop.f32.mrb[0].mxu0
      %v508 = vadd.f32 %v407, %v507
      %v509 = vpop.f32.mrb[0].mxu0
      %v510 = vpop.f32.mrb[0].mxu0
      %v511 = vadd.f32 %v407, %v510
      %v512 = vpop.f32.mrb[0].mxu0
      %513 = vmatprep.mubr.bf16.mxu0 0
      %514 = vmatmul.mubr.bf16.gmra.mrb[0].mxu0 %v385
      %v515 = vpop.f32.mrb[0].mxu0
      %v516 = vadd.f32 %v407, %v515
      %v517 = vpop.f32.mrb[0].mxu0
      %v518 = vpop.f32.mrb[0].mxu0
      %v519 = vadd.f32 %v407, %v518
      %v520 = vpop.f32.mrb[0].mxu0
      %521 = vdwg.mxu0
      %v522 = vld [vmem:[#allocation2] sm:$0xff]
      %v523 = vld [vmem:[#allocation2 + $0x8] sm:$0xff]
      %v524 = vld [vmem:[#allocation2 + $0x10] sm:$0xff]
      %v525 = vld [vmem:[#allocation2 + $0x18] sm:$0xff]
      %v526 = vld [vmem:[#allocation2 + $0x20] sm:$0xff]
      %v527 = vld [vmem:[#allocation2 + $0x28] sm:$0xff]
      %v528 = vld [vmem:[#allocation2 + $0x30] sm:$0xff]
      %v529 = vld [vmem:[#allocation2 + $0x38] sm:$0xff]
      %v530 = vmul.f32 %v522, 0.5
      %v531 = vmul.f32 %v523, 0.5
      %v532 = vmul.f32 %v524, 0.5
      %v533 = vmul.f32 %v525, 0.5
      %v534 = vmul.f32 %v526, 0.5
      %v535 = vmul.f32 %v527, 0.5
      %v536 = vmul.f32 %v528, 0.5
      %v537 = vmul.f32 %v529, 0.5
      %v538 = vadd.f32 %v530, %v492
      %v539 = vadd.f32 %v531, %v495
      %v540 = vadd.f32 %v532, %v500
      %v541 = vadd.f32 %v533, %v503
      %v542 = vadd.f32 %v534, %v508
      %v543 = vadd.f32 %v535, %v511
      %v544 = vadd.f32 %v536, %v516
      %v545 = vadd.f32 %v537, %v519
      %vm546 = vcmp.ge.f32.partialorder %v538, 1.0
      %vm547 = vcmp.ge.f32.partialorder %v539, 1.0
      %vm548 = vcmp.ge.f32.partialorder %v540, 1.0
      %vm549 = vcmp.ge.f32.partialorder %v541, 1.0
      %vm550 = vcmp.ge.f32.partialorder %v542, 1.0
      %vm551 = vcmp.ge.f32.partialorder %v543, 1.0
      %vm552 = vcmp.ge.f32.partialorder %v544, 1.0
      %vm553 = vcmp.ge.f32.partialorder %v545, 1.0
      %v554 = vsel %vm546, 1, 0
      %v555 = vsel %vm547, 1, 0
      %v556 = vsel %vm548, 1, 0
      %v557 = vsel %vm549, 1, 0
      %v558 = vsel %vm550, 1, 0
      %v559 = vsel %vm551, 1, 0
      %v560 = vsel %vm552, 1, 0
      %v561 = vsel %vm553, 1, 0
      %v562 = vcvt.s32.f32 %v554
      %v563 = vcvt.s32.f32 %v555
      %v564 = vcvt.s32.f32 %v556
      %v565 = vcvt.s32.f32 %v557
      %v566 = vcvt.s32.f32 %v558
      %v567 = vcvt.s32.f32 %v559
      %v568 = vcvt.s32.f32 %v560
      %v569 = vcvt.s32.f32 %v561
      %v570 = vsub.f32 1.0, %v562
      %v571 = vsub.f32 1.0, %v563
      %v572 = vsub.f32 1.0, %v564
      %v573 = vsub.f32 1.0, %v565
      %v574 = vsub.f32 1.0, %v566
      %v575 = vsub.f32 1.0, %v567
      %v576 = vsub.f32 1.0, %v568
      %v577 = vsub.f32 1.0, %v569
      %v578 = vmul.f32 %v538, %v570
      %v579 = vmul.f32 %v539, %v571
      %v580 = vmul.f32 %v540, %v572
      %v581 = vmul.f32 %v541, %v573
      %v582 = vmul.f32 %v542, %v574
      %v583 = vmul.f32 %v543, %v575
      %v584 = vmul.f32 %v544, %v576
      %v585 = vmul.f32 %v545, %v577
      %586 = vst [vmem:[#allocation2] sm:$0xff] %v578
      %587 = vst [vmem:[#allocation2 + $0x8] sm:$0xff] %v579
      %588 = vst [vmem:[#allocation2 + $0x10] sm:$0xff] %v580
      %589 = vst [vmem:[#allocation2 + $0x18] sm:$0xff] %v581
      %590 = vst [vmem:[#allocation2 + $0x20] sm:$0xff] %v582
      %591 = vst [vmem:[#allocation2 + $0x28] sm:$0xff] %v583
      %592 = vst [vmem:[#allocation2 + $0x30] sm:$0xff] %v584
      %593 = vst [vmem:[#allocation2 + $0x38] sm:$0xff] %v585
      %594 = vst [vmem:[#allocation5 + $0x18] sm:$0xff] %v562
      %595 = vst [vmem:[#allocation5 + $0x28] sm:$0xff] %v563
      %596 = vst [vmem:[#allocation5 + $0x38] sm:$0xff] %v564
      %597 = vst [vmem:[#allocation5 + $0x48] sm:$0xff] %v565
      %598 = vst [vmem:[#allocation5 + $0x58] sm:$0xff] %v566
      %599 = vst [vmem:[#allocation5 + $0x68] sm:$0xff] %v567
      %600 = vst [vmem:[#allocation5 + $0x78] sm:$0xff] %v568
      %601 = vst [vmem:[#allocation5 + $0x88] sm:$0xff] %v569
      %v602 = vld [vmem:[#allocation5 + $0x7] sm:$0xff]
      %v603 = vld [vmem:[#allocation5 + $0xf] sm:$0xff]
      %v604 = vld [vmem:[#allocation5 + $0x17] sm:$0xff]
      %v605 = vld [vmem:[#allocation5 + $0x1f] sm:$0xff]
      %v606 = vld [vmem:[#allocation5 + $0x27] sm:$0xff]
      %v607 = vld [vmem:[#allocation5 + $0x2f] sm:$0xff]
      %v608 = vld [vmem:[#allocation5 + $0x37] sm:$0xff]
      %v609 = vld [vmem:[#allocation5 + $0x3f] sm:$0xff]
      %v610 = vld [vmem:[#allocation5 + $0x47] sm:$0xff]
      %v611 = vld [vmem:[#allocation5 + $0x4f] sm:$0xff]
      %v612 = vld [vmem:[#allocation5 + $0x57] sm:$0xff]
      %v613 = vld [vmem:[#allocation5 + $0x5f] sm:$0xff]
      %v614 = vld [vmem:[#allocation5 + $0x67] sm:$0xff]
      %v615 = vld [vmem:[#allocation5 + $0x6f] sm:$0xff]
      %v616 = vld [vmem:[#allocation5 + $0x77] sm:$0xff]
      %v617 = vld [vmem:[#allocation5 + $0x7f] sm:$0xff]
      %v618 = vpack.c.bf16 %v603, %v602
      %v619 = vpack.c.bf16 %v605, %v604
      %v620 = vpack.c.bf16 %v607, %v606
      %v621 = vpack.c.bf16 %v609, %v608
      %v622 = vpack.c.bf16 %v611, %v610
      %v623 = vpack.c.bf16 %v613, %v612
      %v624 = vpack.c.bf16 %v615, %v614
      %v625 = vpack.c.bf16 %v617, %v616
      %v626 = vld [vmem:[%s3] sm:$0xf]
      %v627 = vld [vmem:[%s3 + $0x4] sm:$0xf]
      %v628 = vld [vmem:[%s3 + $0x8] sm:$0xf]
      %v629 = vld [vmem:[%s3 + $0xc] sm:$0xf]
      %v630 = vld [vmem:[%s3 + $0x10] sm:$0xf]
      %v631 = vld [vmem:[%s3 + $0x14] sm:$0xf]
      %v632 = vld [vmem:[%s3 + $0x18] sm:$0xf]
      %v633 = vld [vmem:[%s3 + $0x1c] sm:$0xf]
      %v634 = vld [vmem:[%s3 + $0x20] sm:$0xf]
      %v635 = vld [vmem:[%s3 + $0x24] sm:$0xf]
      %v636 = vld [vmem:[%s3 + $0x28] sm:$0xf]
      %v637 = vld [vmem:[%s3 + $0x2c] sm:$0xf]
      %v638 = vld [vmem:[%s3 + $0x30] sm:$0xf]
      %v639 = vld [vmem:[%s3 + $0x34] sm:$0xf]
      %v640 = vld [vmem:[%s3 + $0x38] sm:$0xf]
      %v641 = vld [vmem:[%s3 + $0x3c] sm:$0xf]
      %v642 = vld [vmem:[%s4] sm:$0x1]
      %v644 = vlaneseq
      %v645 = vshrl.u32 %v644, 7
      %v646 = vsub.s32 0, %v645
      %v647 = vrot.slane %v642, %v646
      %v665 = vunpack.c.l.b16 %v626
      %v666 = vunpack.c.l.b16 %v627
      %v667 = vunpack.c.l.b16 %v628
      %v668 = vunpack.c.l.b16 %v629
      %v669 = vunpack.c.l.b16 %v630
      %v670 = vunpack.c.l.b16 %v631
      %v671 = vunpack.c.l.b16 %v632
      %v672 = vunpack.c.l.b16 %v633
      %v673 = vunpack.c.l.b16 %v634
      %v674 = vunpack.c.l.b16 %v635
      %v675 = vunpack.c.l.b16 %v636
      %v676 = vunpack.c.l.b16 %v637
      %v677 = vunpack.c.l.b16 %v638
      %v678 = vunpack.c.l.b16 %v639
      %v679 = vunpack.c.l.b16 %v640
      %v680 = vunpack.c.l.b16 %v641
      %v681 = vpack.c.b16 %v666, %v665
      %v682 = vpack.c.b16 %v668, %v667
      %v683 = vpack.c.b16 %v670, %v669
      %v684 = vpack.c.b16 %v672, %v671
      %v685 = vpack.c.b16 %v674, %v673
      %v686 = vpack.c.b16 %v676, %v675
      %v687 = vpack.c.b16 %v678, %v677
      %v688 = vpack.c.b16 %v680, %v679
      %697 = vmatprep.subr.bf16.mxu0 0
      %698 = vmatpush1.bf16.msra.mxu0 %v681
      %699 = vmatprep.subr.bf16.mxu0 0
      %700 = vmatpush1.bf16.msra.mxu0 %v682
      %701 = vmatprep.subr.bf16.mxu0 0
      %702 = vmatpush1.bf16.msra.mxu0 %v683
      %703 = vmatprep.subr.bf16.mxu0 0
      %704 = vmatpush1.bf16.msra.mxu0 %v684
      %705 = vmatprep.subr.bf16.mxu0 0
      %706 = vmatpush1.bf16.msra.mxu0 %v685
      %707 = vmatprep.subr.bf16.mxu0 0
      %708 = vmatpush1.bf16.msra.mxu0 %v686
      %709 = vmatprep.subr.bf16.mxu0 0
      %710 = vmatpush1.bf16.msra.mxu0 %v687
      %711 = vmatprep.subr.bf16.mxu0 0
      %712 = vmatpush1.bf16.msra.mxu0 %v688
      %713 = vmatprep.subr.bf16.mxu0 0
      %714 = vmatpush1.bf16.msra.mxu0 0
      %715 = vmatprep.subr.bf16.mxu0 0
      %716 = vmatpush1.bf16.msra.mxu0 0
      %717 = vmatprep.subr.bf16.mxu0 0
      %718 = vmatpush1.bf16.msra.mxu0 0
      %719 = vmatprep.subr.bf16.mxu0 0
      %720 = vmatpush1.bf16.msra.mxu0 0
      %721 = vmatprep.subr.bf16.mxu0 0
      %722 = vmatpush1.bf16.msra.mxu0 0
      %723 = vmatprep.subr.bf16.mxu0 0
      %724 = vmatpush1.bf16.msra.mxu0 0
      %725 = vmatprep.subr.bf16.mxu0 0
      %726 = vmatpush1.bf16.msra.mxu0 0
      %727 = vmatprep.subr.bf16.mxu0 0
      %728 = vmatpush1.bf16.msra.mxu0 0
      %729 = vmatprep.mubr.bf16.mxu0 0
      %730 = vmatmul.mubr.bf16.gmra.mrb[0].mxu0 %v618
      %v731 = vpop.f32.mrb[0].mxu0
      %v732 = vadd.f32 %v647, %v731
      %v733 = vpop.f32.mrb[0].mxu0
      %v734 = vpop.f32.mrb[0].mxu0
      %v735 = vpop.f32.mrb[0].mxu0
      %736 = vmatprep.mubr.bf16.mxu0 0
      %737 = vmatmul.mubr.bf16.gmra.mrb[0].mxu0 %v619
      %v738 = vpop.f32.mrb[0].mxu0
      %v739 = vadd.f32 %v647, %v738
      %v740 = vpop.f32.mrb[0].mxu0
      %v741 = vpop.f32.mrb[0].mxu0
      %v742 = vpop.f32.mrb[0].mxu0
      %743 = vmatprep.mubr.bf16.mxu0 0
      %744 = vmatmul.mubr.bf16.gmra.mrb[0].mxu0 %v620
      %v745 = vpop.f32.mrb[0].mxu0
      %v746 = vadd.f32 %v647, %v745
      %v747 = vpop.f32.mrb[0].mxu0
      %v748 = vpop.f32.mrb[0].mxu0
      %v749 = vpop.f32.mrb[0].mxu0
      %750 = vmatprep.mubr.bf16.mxu0 0
      %751 = vmatmul.mubr.bf16.gmra.mrb[0].mxu0 %v621
      %v752 = vpop.f32.mrb[0].mxu0
      %v753 = vadd.f32 %v647, %v752
      %v754 = vpop.f32.mrb[0].mxu0
      %v755 = vpop.f32.mrb[0].mxu0
      %v756 = vpop.f32.mrb[0].mxu0
      %757 = vmatprep.mubr.bf16.mxu0 0
      %758 = vmatmul.mubr.bf16.gmra.mrb[0].mxu0 %v622
      %v759 = vpop.f32.mrb[0].mxu0
      %v760 = vadd.f32 %v647, %v759
      %v761 = vpop.f32.mrb[0].mxu0
      %v762 = vpop.f32.mrb[0].mxu0
      %v763 = vpop.f32.mrb[0].mxu0
      %764 = vmatprep.mubr.bf16.mxu0 0
      %765 = vmatmul.mubr.bf16.gmra.mrb[0].mxu0 %v623
      %v766 = vpop.f32.mrb[0].mxu0
      %v767 = vadd.f32 %v647, %v766
      %v768 = vpop.f32.mrb[0].mxu0
      %v769 = vpop.f32.mrb[0].mxu0
      %v770 = vpop.f32.mrb[0].mxu0
      %771 = vmatprep.mubr.bf16.mxu0 0
      %772 = vmatmul.mubr.bf16.gmra.mrb[0].mxu0 %v624
      %v773 = vpop.f32.mrb[0].mxu0
      %v774 = vadd.f32 %v647, %v773
      %v775 = vpop.f32.mrb[0].mxu0
      %v776 = vpop.f32.mrb[0].mxu0
      %v777 = vpop.f32.mrb[0].mxu0
      %778 = vmatprep.mubr.bf16.mxu0 0
      %779 = vmatmul.mubr.bf16.gmra.mrb[0].mxu0 %v625
      %v780 = vpop.f32.mrb[0].mxu0
      %v781 = vadd.f32 %v647, %v780
      %v782 = vpop.f32.mrb[0].mxu0
      %v783 = vpop.f32.mrb[0].mxu0
      %v784 = vpop.f32.mrb[0].mxu0
      %785 = vdwg.mxu0
      %v786 = vld [vmem:[#allocation5 + $0x8] sm:$0xff]
      %v787 = vld [vmem:[#allocation5 + $0x10] sm:$0xff]
      %v788 = vld [vmem:[#allocation5 + $0x18] sm:$0xff]
      %v789 = vld [vmem:[#allocation5 + $0x20] sm:$0xff]
      %v790 = vld [vmem:[#allocation5 + $0x28] sm:$0xff]
      %v791 = vld [vmem:[#allocation5 + $0x30] sm:$0xff]
      %v792 = vld [vmem:[#allocation5 + $0x38] sm:$0xff]
      %v793 = vld [vmem:[#allocation5 + $0x40] sm:$0xff]
      %v794 = vld [vmem:[#allocation5 + $0x48] sm:$0xff]
      %v795 = vld [vmem:[#allocation5 + $0x50] sm:$0xff]
      %v796 = vld [vmem:[#allocation5 + $0x58] sm:$0xff]
      %v797 = vld [vmem:[#allocation5 + $0x60] sm:$0xff]
      %v798 = vld [vmem:[#allocation5 + $0x68] sm:$0xff]
      %v799 = vld [vmem:[#allocation5 + $0x70] sm:$0xff]
      %v800 = vld [vmem:[#allocation5 + $0x78] sm:$0xff]
      %v801 = vld [vmem:[#allocation5 + $0x80] sm:$0xff]
      %v802 = vpack.c.bf16 %v787, %v786
      %v803 = vpack.c.bf16 %v789, %v788
      %v804 = vpack.c.bf16 %v791, %v790
      %v805 = vpack.c.bf16 %v793, %v792
      %v806 = vpack.c.bf16 %v795, %v794
      %v807 = vpack.c.bf16 %v797, %v796
      %v808 = vpack.c.bf16 %v799, %v798
      %v809 = vpack.c.bf16 %v801, %v800
      %s810 = scalar_lea.vmem %s3, 64
      %v811 = vld [vmem:[%s810] sm:$0xf]
      %v812 = vld [vmem:[%s810 + $0x4] sm:$0xf]
      %v813 = vld [vmem:[%s810 + $0x8] sm:$0xf]
      %v814 = vld [vmem:[%s810 + $0xc] sm:$0xf]
      %v815 = vld [vmem:[%s810 + $0x10] sm:$0xf]
      %v816 = vld [vmem:[%s810 + $0x14] sm:$0xf]
      %v817 = vld [vmem:[%s810 + $0x18] sm:$0xf]
      %v818 = vld [vmem:[%s810 + $0x1c] sm:$0xf]
      %v819 = vld [vmem:[%s810 + $0x20] sm:$0xf]
      %v820 = vld [vmem:[%s810 + $0x24] sm:$0xf]
      %v821 = vld [vmem:[%s810 + $0x28] sm:$0xf]
      %v822 = vld [vmem:[%s810 + $0x2c] sm:$0xf]
      %v823 = vld [vmem:[%s810 + $0x30] sm:$0xf]
      %v824 = vld [vmem:[%s810 + $0x34] sm:$0xf]
      %v825 = vld [vmem:[%s810 + $0x38] sm:$0xf]
      %v826 = vld [vmem:[%s810 + $0x3c] sm:$0xf]
      %v843 = vunpack.c.l.b16 %v811
      %v844 = vunpack.c.l.b16 %v812
      %v845 = vunpack.c.l.b16 %v813
      %v846 = vunpack.c.l.b16 %v814
      %v847 = vunpack.c.l.b16 %v815
      %v848 = vunpack.c.l.b16 %v816
      %v849 = vunpack.c.l.b16 %v817
      %v850 = vunpack.c.l.b16 %v818
      %v851 = vunpack.c.l.b16 %v819
      %v852 = vunpack.c.l.b16 %v820
      %v853 = vunpack.c.l.b16 %v821
      %v854 = vunpack.c.l.b16 %v822
      %v855 = vunpack.c.l.b16 %v823
      %v856 = vunpack.c.l.b16 %v824
      %v857 = vunpack.c.l.b16 %v825
      %v858 = vunpack.c.l.b16 %v826
      %v859 = vpack.c.b16 %v844, %v843
      %v860 = vpack.c.b16 %v846, %v845
      %v861 = vpack.c.b16 %v848, %v847
      %v862 = vpack.c.b16 %v850, %v849
      %v863 = vpack.c.b16 %v852, %v851
      %v864 = vpack.c.b16 %v854, %v853
      %v865 = vpack.c.b16 %v856, %v855
      %v866 = vpack.c.b16 %v858, %v857
      %875 = vmatprep.subr.bf16.mxu0 0
      %876 = vmatpush1.bf16.msra.mxu0 %v859
      %877 = vmatprep.subr.bf16.mxu0 0
      %878 = vmatpush1.bf16.msra.mxu0 %v860
      %879 = vmatprep.subr.bf16.mxu0 0
      %880 = vmatpush1.bf16.msra.mxu0 %v861
      %881 = vmatprep.subr.bf16.mxu0 0
      %882 = vmatpush1.bf16.msra.mxu0 %v862
      %883 = vmatprep.subr.bf16.mxu0 0
      %884 = vmatpush1.bf16.msra.mxu0 %v863
      %885 = vmatprep.subr.bf16.mxu0 0
      %886 = vmatpush1.bf16.msra.mxu0 %v864
      %887 = vmatprep.subr.bf16.mxu0 0
      %888 = vmatpush1.bf16.msra.mxu0 %v865
      %889 = vmatprep.subr.bf16.mxu0 0
      %890 = vmatpush1.bf16.msra.mxu0 %v866
      %891 = vmatprep.subr.bf16.mxu0 0
      %892 = vmatpush1.bf16.msra.mxu0 0
      %893 = vmatprep.subr.bf16.mxu0 0
      %894 = vmatpush1.bf16.msra.mxu0 0
      %895 = vmatprep.subr.bf16.mxu0 0
      %896 = vmatpush1.bf16.msra.mxu0 0
      %897 = vmatprep.subr.bf16.mxu0 0
      %898 = vmatpush1.bf16.msra.mxu0 0
      %899 = vmatprep.subr.bf16.mxu0 0
      %900 = vmatpush1.bf16.msra.mxu0 0
      %901 = vmatprep.subr.bf16.mxu0 0
      %902 = vmatpush1.bf16.msra.mxu0 0
      %903 = vmatprep.subr.bf16.mxu0 0
      %904 = vmatpush1.bf16.msra.mxu0 0
      %905 = vmatprep.subr.bf16.mxu0 0
      %906 = vmatpush1.bf16.msra.mxu0 0
      %907 = vmatprep.mubr.bf16.mxu0 0
      %908 = vmatmul.mubr.bf16.gmra.mrb[0].mxu0 %v802
      %v909 = vpop.f32.mrb[0].mxu0
      %v910 = vadd.f32 0.0, %v909
      %v911 = vpop.f32.mrb[0].mxu0
      %v912 = vpop.f32.mrb[0].mxu0
      %v913 = vpop.f32.mrb[0].mxu0
      %914 = vmatprep.mubr.bf16.mxu0 0
      %915 = vmatmul.mubr.bf16.gmra.mrb[0].mxu0 %v803
      %v916 = vpop.f32.mrb[0].mxu0
      %v917 = vadd.f32 0.0, %v916
      %v918 = vpop.f32.mrb[0].mxu0
      %v919 = vpop.f32.mrb[0].mxu0
      %v920 = vpop.f32.mrb[0].mxu0
      %921 = vmatprep.mubr.bf16.mxu0 0
      %922 = vmatmul.mubr.bf16.gmra.mrb[0].mxu0 %v804
      %v923 = vpop.f32.mrb[0].mxu0
      %v924 = vadd.f32 0.0, %v923
      %v925 = vpop.f32.mrb[0].mxu0
      %v926 = vpop.f32.mrb[0].mxu0
      %v927 = vpop.f32.mrb[0].mxu0
      %928 = vmatprep.mubr.bf16.mxu0 0
      %929 = vmatmul.mubr.bf16.gmra.mrb[0].mxu0 %v805
      %v930 = vpop.f32.mrb[0].mxu0
      %v931 = vadd.f32 0.0, %v930
      %v932 = vpop.f32.mrb[0].mxu0
      %v933 = vpop.f32.mrb[0].mxu0
      %v934 = vpop.f32.mrb[0].mxu0
      %935 = vmatprep.mubr.bf16.mxu0 0
      %936 = vmatmul.mubr.bf16.gmra.mrb[0].mxu0 %v806
      %v937 = vpop.f32.mrb[0].mxu0
      %v938 = vadd.f32 0.0, %v937
      %v939 = vpop.f32.mrb[0].mxu0
      %v940 = vpop.f32.mrb[0].mxu0
      %v941 = vpop.f32.mrb[0].mxu0
      %942 = vmatprep.mubr.bf16.mxu0 0
      %943 = vmatmul.mubr.bf16.gmra.mrb[0].mxu0 %v807
      %v944 = vpop.f32.mrb[0].mxu0
      %v945 = vadd.f32 0.0, %v944
      %v946 = vpop.f32.mrb[0].mxu0
      %v947 = vpop.f32.mrb[0].mxu0
      %v948 = vpop.f32.mrb[0].mxu0
      %949 = vmatprep.mubr.bf16.mxu0 0
      %950 = vmatmul.mubr.bf16.gmra.mrb[0].mxu0 %v808
      %v951 = vpop.f32.mrb[0].mxu0
      %v952 = vadd.f32 0.0, %v951
      %v953 = vpop.f32.mrb[0].mxu0
      %v954 = vpop.f32.mrb[0].mxu0
      %v955 = vpop.f32.mrb[0].mxu0
      %956 = vmatprep.mubr.bf16.mxu0 0
      %957 = vmatmul.mubr.bf16.gmra.mrb[0].mxu0 %v809
      %v958 = vpop.f32.mrb[0].mxu0
      %v959 = vadd.f32 0.0, %v958
      %v960 = vpop.f32.mrb[0].mxu0
      %v961 = vpop.f32.mrb[0].mxu0
      %v962 = vpop.f32.mrb[0].mxu0
      %963 = vdwg.mxu0
      %v964 = vadd.f32 %v732, %v910
      %v965 = vadd.f32 %v739, %v917
      %v966 = vadd.f32 %v746, %v924
      %v967 = vadd.f32 %v753, %v931
      %v968 = vadd.f32 %v760, %v938
      %v969 = vadd.f32 %v767, %v945
      %v970 = vadd.f32 %v774, %v952
      %v971 = vadd.f32 %v781, %v959
      %v972 = vld [vmem:[#allocation5 + $0x9] sm:$0xff]
      %v973 = vld [vmem:[#allocation5 + $0x11] sm:$0xff]
      %v974 = vld [vmem:[#allocation5 + $0x19] sm:$0xff]
      %v975 = vld [vmem:[#allocation5 + $0x21] sm:$0xff]
      %v976 = vld [vmem:[#allocation5 + $0x29] sm:$0xff]
      %v977 = vld [vmem:[#allocation5 + $0x31] sm:$0xff]
      %v978 = vld [vmem:[#allocation5 + $0x39] sm:$0xff]
      %v979 = vld [vmem:[#allocation5 + $0x41] sm:$0xff]
      %v980 = vld [vmem:[#allocation5 + $0x49] sm:$0xff]
      %v981 = vld [vmem:[#allocation5 + $0x51] sm:$0xff]
      %v982 = vld [vmem:[#allocation5 + $0x59] sm:$0xff]
      %v983 = vld [vmem:[#allocation5 + $0x61] sm:$0xff]
      %v984 = vld [vmem:[#allocation5 + $0x69] sm:$0xff]
      %v985 = vld [vmem:[#allocation5 + $0x71] sm:$0xff]
      %v986 = vld [vmem:[#allocation5 + $0x79] sm:$0xff]
      %v987 = vld [vmem:[#allocation5 + $0x81] sm:$0xff]
      %v988 = vpack.c.bf16 %v973, %v972
      %v989 = vpack.c.bf16 %v975, %v974
      %v990 = vpack.c.bf16 %v977, %v976
      %v991 = vpack.c.bf16 %v979, %v978
      %v992 = vpack.c.bf16 %v981, %v980
      %v993 = vpack.c.bf16 %v983, %v982
      %v994 = vpack.c.bf16 %v985, %v984
      %v995 = vpack.c.bf16 %v987, %v986
      %s996 = scalar_lea.vmem %s3, 128
      %v997 = vld [vmem:[%s996] sm:$0xf]
      %v998 = vld [vmem:[%s996 + $0x4] sm:$0xf]
      %v999 = vld [vmem:[%s996 + $0x8] sm:$0xf]
      %v1000 = vld [vmem:[%s996 + $0xc] sm:$0xf]
      %v1001 = vld [vmem:[%s996 + $0x10] sm:$0xf]
      %v1002 = vld [vmem:[%s996 + $0x14] sm:$0xf]
      %v1003 = vld [vmem:[%s996 + $0x18] sm:$0xf]
      %v1004 = vld [vmem:[%s996 + $0x1c] sm:$0xf]
      %v1005 = vld [vmem:[%s996 + $0x20] sm:$0xf]
      %v1006 = vld [vmem:[%s996 + $0x24] sm:$0xf]
      %v1007 = vld [vmem:[%s996 + $0x28] sm:$0xf]
      %v1008 = vld [vmem:[%s996 + $0x2c] sm:$0xf]
      %v1009 = vld [vmem:[%s996 + $0x30] sm:$0xf]
      %v1010 = vld [vmem:[%s996 + $0x34] sm:$0xf]
      %v1011 = vld [vmem:[%s996 + $0x38] sm:$0xf]
      %v1012 = vld [vmem:[%s996 + $0x3c] sm:$0xf]
      %v1029 = vunpack.c.l.b16 %v997
      %v1030 = vunpack.c.l.b16 %v998
      %v1031 = vunpack.c.l.b16 %v999
      %v1032 = vunpack.c.l.b16 %v1000
      %v1033 = vunpack.c.l.b16 %v1001
      %v1034 = vunpack.c.l.b16 %v1002
      %v1035 = vunpack.c.l.b16 %v1003
      %v1036 = vunpack.c.l.b16 %v1004
      %v1037 = vunpack.c.l.b16 %v1005
      %v1038 = vunpack.c.l.b16 %v1006
      %v1039 = vunpack.c.l.b16 %v1007
      %v1040 = vunpack.c.l.b16 %v1008
      %v1041 = vunpack.c.l.b16 %v1009
      %v1042 = vunpack.c.l.b16 %v1010
      %v1043 = vunpack.c.l.b16 %v1011
      %v1044 = vunpack.c.l.b16 %v1012
      %v1045 = vpack.c.b16 %v1030, %v1029
      %v1046 = vpack.c.b16 %v1032, %v1031
      %v1047 = vpack.c.b16 %v1034, %v1033
      %v1048 = vpack.c.b16 %v1036, %v1035
      %v1049 = vpack.c.b16 %v1038, %v1037
      %v1050 = vpack.c.b16 %v1040, %v1039
      %v1051 = vpack.c.b16 %v1042, %v1041
      %v1052 = vpack.c.b16 %v1044, %v1043
      %1061 = vmatprep.subr.bf16.mxu0 0
      %1062 = vmatpush1.bf16.msra.mxu0 %v1045
      %1063 = vmatprep.subr.bf16.mxu0 0
      %1064 = vmatpush1.bf16.msra.mxu0 %v1046
      %1065 = vmatprep.subr.bf16.mxu0 0
      %1066 = vmatpush1.bf16.msra.mxu0 %v1047
      %1067 = vmatprep.subr.bf16.mxu0 0
      %1068 = vmatpush1.bf16.msra.mxu0 %v1048
      %1069 = vmatprep.subr.bf16.mxu0 0
      %1070 = vmatpush1.bf16.msra.mxu0 %v1049
      %1071 = vmatprep.subr.bf16.mxu0 0
      %1072 = vmatpush1.bf16.msra.mxu0 %v1050
      %1073 = vmatprep.subr.bf16.mxu0 0
      %1074 = vmatpush1.bf16.msra.mxu0 %v1051
      %1075 = vmatprep.subr.bf16.mxu0 0
      %1076 = vmatpush1.bf16.msra.mxu0 %v1052
      %1077 = vmatprep.subr.bf16.mxu0 0
      %1078 = vmatpush1.bf16.msra.mxu0 0
      %1079 = vmatprep.subr.bf16.mxu0 0
      %1080 = vmatpush1.bf16.msra.mxu0 0
      %1081 = vmatprep.subr.bf16.mxu0 0
      %1082 = vmatpush1.bf16.msra.mxu0 0
      %1083 = vmatprep.subr.bf16.mxu0 0
      %1084 = vmatpush1.bf16.msra.mxu0 0
      %1085 = vmatprep.subr.bf16.mxu0 0
      %1086 = vmatpush1.bf16.msra.mxu0 0
      %1087 = vmatprep.subr.bf16.mxu0 0
      %1088 = vmatpush1.bf16.msra.mxu0 0
      %1089 = vmatprep.subr.bf16.mxu0 0
      %1090 = vmatpush1.bf16.msra.mxu0 0
      %1091 = vmatprep.subr.bf16.mxu0 0
      %1092 = vmatpush1.bf16.msra.mxu0 0
      %1093 = vmatprep.mubr.bf16.mxu0 0
      %1094 = vmatmul.mubr.bf16.gmra.mrb[0].mxu0 %v988
      %v1095 = vpop.f32.mrb[0].mxu0
      %v1096 = vadd.f32 0.0, %v1095
      %v1097 = vpop.f32.mrb[0].mxu0
      %v1098 = vpop.f32.mrb[0].mxu0
      %v1099 = vpop.f32.mrb[0].mxu0
      %1100 = vmatprep.mubr.bf16.mxu0 0
      %1101 = vmatmul.mubr.bf16.gmra.mrb[0].mxu0 %v989
      %v1102 = vpop.f32.mrb[0].mxu0
      %v1103 = vadd.f32 0.0, %v1102
      %v1104 = vpop.f32.mrb[0].mxu0
      %v1105 = vpop.f32.mrb[0].mxu0
      %v1106 = vpop.f32.mrb[0].mxu0
      %1107 = vmatprep.mubr.bf16.mxu0 0
      %1108 = vmatmul.mubr.bf16.gmra.mrb[0].mxu0 %v990
      %v1109 = vpop.f32.mrb[0].mxu0
      %v1110 = vadd.f32 0.0, %v1109
      %v1111 = vpop.f32.mrb[0].mxu0
      %v1112 = vpop.f32.mrb[0].mxu0
      %v1113 = vpop.f32.mrb[0].mxu0
      %1114 = vmatprep.mubr.bf16.mxu0 0
      %1115 = vmatmul.mubr.bf16.gmra.mrb[0].mxu0 %v991
      %v1116 = vpop.f32.mrb[0].mxu0
      %v1117 = vadd.f32 0.0, %v1116
      %v1118 = vpop.f32.mrb[0].mxu0
      %v1119 = vpop.f32.mrb[0].mxu0
      %v1120 = vpop.f32.mrb[0].mxu0
      %1121 = vmatprep.mubr.bf16.mxu0 0
      %1122 = vmatmul.mubr.bf16.gmra.mrb[0].mxu0 %v992
      %v1123 = vpop.f32.mrb[0].mxu0
      %v1124 = vadd.f32 0.0, %v1123
      %v1125 = vpop.f32.mrb[0].mxu0
      %v1126 = vpop.f32.mrb[0].mxu0
      %v1127 = vpop.f32.mrb[0].mxu0
      %1128 = vmatprep.mubr.bf16.mxu0 0
      %1129 = vmatmul.mubr.bf16.gmra.mrb[0].mxu0 %v993
      %v1130 = vpop.f32.mrb[0].mxu0
      %v1131 = vadd.f32 0.0, %v1130
      %v1132 = vpop.f32.mrb[0].mxu0
      %v1133 = vpop.f32.mrb[0].mxu0
      %v1134 = vpop.f32.mrb[0].mxu0
      %1135 = vmatprep.mubr.bf16.mxu0 0
      %1136 = vmatmul.mubr.bf16.gmra.mrb[0].mxu0 %v994
      %v1137 = vpop.f32.mrb[0].mxu0
      %v1138 = vadd.f32 0.0, %v1137
      %v1139 = vpop.f32.mrb[0].mxu0
      %v1140 = vpop.f32.mrb[0].mxu0
      %v1141 = vpop.f32.mrb[0].mxu0
      %1142 = vmatprep.mubr.bf16.mxu0 0
      %1143 = vmatmul.mubr.bf16.gmra.mrb[0].mxu0 %v995
      %v1144 = vpop.f32.mrb[0].mxu0
      %v1145 = vadd.f32 0.0, %v1144
      %v1146 = vpop.f32.mrb[0].mxu0
      %v1147 = vpop.f32.mrb[0].mxu0
      %v1148 = vpop.f32.mrb[0].mxu0
      %1149 = vdwg.mxu0
      %v1150 = vadd.f32 %v964, %v1096
      %v1151 = vadd.f32 %v965, %v1103
      %v1152 = vadd.f32 %v966, %v1110
      %v1153 = vadd.f32 %v967, %v1117
      %v1154 = vadd.f32 %v968, %v1124
      %v1155 = vadd.f32 %v969, %v1131
      %v1156 = vadd.f32 %v970, %v1138
      %v1157 = vadd.f32 %v971, %v1145
      %v1158 = vld [vmem:[#allocation5 + $0x17] sm:$0xff]
      %v1159 = vld [vmem:[#allocation5 + $0x1f] sm:$0xff]
      %v1160 = vld [vmem:[#allocation5 + $0x27] sm:$0xff]
      %v1161 = vld [vmem:[#allocation5 + $0x2f] sm:$0xff]
      %v1162 = vld [vmem:[#allocation5 + $0x37] sm:$0xff]
      %v1163 = vld [vmem:[#allocation5 + $0x3f] sm:$0xff]
      %v1164 = vld [vmem:[#allocation5 + $0x47] sm:$0xff]
      %v1165 = vld [vmem:[#allocation5 + $0x4f] sm:$0xff]
      %v1166 = vld [vmem:[#allocation5 + $0x57] sm:$0xff]
      %v1167 = vld [vmem:[#allocation5 + $0x5f] sm:$0xff]
      %v1168 = vld [vmem:[#allocation5 + $0x67] sm:$0xff]
      %v1169 = vld [vmem:[#allocation5 + $0x6f] sm:$0xff]
      %v1170 = vld [vmem:[#allocation5 + $0x77] sm:$0xff]
      %v1171 = vld [vmem:[#allocation5 + $0x7f] sm:$0xff]
      %v1172 = vld [vmem:[#allocation5 + $0x87] sm:$0xff]
      %v1173 = vld [vmem:[#allocation5 + $0x8f] sm:$0xff]
      %v1174 = vpack.c.bf16 %v1159, %v1158
      %v1175 = vpack.c.bf16 %v1161, %v1160
      %v1176 = vpack.c.bf16 %v1163, %v1162
      %v1177 = vpack.c.bf16 %v1165, %v1164
      %v1178 = vpack.c.bf16 %v1167, %v1166
      %v1179 = vpack.c.bf16 %v1169, %v1168
      %v1180 = vpack.c.bf16 %v1171, %v1170
      %v1181 = vpack.c.bf16 %v1173, %v1172
      %s1182 = scalar_lea.vmem %s3, 192
      %v1183 = vld [vmem:[%s1182] sm:$0xf]
      %v1184 = vld [vmem:[%s1182 + $0x4] sm:$0xf]
      %v1185 = vld [vmem:[%s1182 + $0x8] sm:$0xf]
      %v1186 = vld [vmem:[%s1182 + $0xc] sm:$0xf]
      %v1187 = vld [vmem:[%s1182 + $0x10] sm:$0xf]
      %v1188 = vld [vmem:[%s1182 + $0x14] sm:$0xf]
      %v1189 = vld [vmem:[%s1182 + $0x18] sm:$0xf]
      %v1190 = vld [vmem:[%s1182 + $0x1c] sm:$0xf]
      %v1191 = vld [vmem:[%s1182 + $0x20] sm:$0xf]
      %v1192 = vld [vmem:[%s1182 + $0x24] sm:$0xf]
      %v1193 = vld [vmem:[%s1182 + $0x28] sm:$0xf]
      %v1194 = vld [vmem:[%s1182 + $0x2c] sm:$0xf]
      %v1195 = vld [vmem:[%s1182 + $0x30] sm:$0xf]
      %v1196 = vld [vmem:[%s1182 + $0x34] sm:$0xf]
      %v1197 = vld [vmem:[%s1182 + $0x38] sm:$0xf]
      %v1198 = vld [vmem:[%s1182 + $0x3c] sm:$0xf]
      %v1215 = vunpack.c.l.b16 %v1183
      %v1216 = vunpack.c.l.b16 %v1184
      %v1217 = vunpack.c.l.b16 %v1185
      %v1218 = vunpack.c.l.b16 %v1186
      %v1219 = vunpack.c.l.b16 %v1187
      %v1220 = vunpack.c.l.b16 %v1188
      %v1221 = vunpack.c.l.b16 %v1189
      %v1222 = vunpack.c.l.b16 %v1190
      %v1223 = vunpack.c.l.b16 %v1191
      %v1224 = vunpack.c.l.b16 %v1192
      %v1225 = vunpack.c.l.b16 %v1193
      %v1226 = vunpack.c.l.b16 %v1194
      %v1227 = vunpack.c.l.b16 %v1195
      %v1228 = vunpack.c.l.b16 %v1196
      %v1229 = vunpack.c.l.b16 %v1197
      %v1230 = vunpack.c.l.b16 %v1198
      %v1231 = vpack.c.b16 %v1216, %v1215
      %v1232 = vpack.c.b16 %v1218, %v1217
      %v1233 = vpack.c.b16 %v1220, %v1219
      %v1234 = vpack.c.b16 %v1222, %v1221
      %v1235 = vpack.c.b16 %v1224, %v1223
      %v1236 = vpack.c.b16 %v1226, %v1225
      %v1237 = vpack.c.b16 %v1228, %v1227
      %v1238 = vpack.c.b16 %v1230, %v1229
      %1247 = vmatprep.subr.bf16.mxu0 0
      %1248 = vmatpush1.bf16.msra.mxu0 %v1231
      %1249 = vmatprep.subr.bf16.mxu0 0
      %1250 = vmatpush1.bf16.msra.mxu0 %v1232
      %1251 = vmatprep.subr.bf16.mxu0 0
      %1252 = vmatpush1.bf16.msra.mxu0 %v1233
      %1253 = vmatprep.subr.bf16.mxu0 0
      %1254 = vmatpush1.bf16.msra.mxu0 %v1234
      %1255 = vmatprep.subr.bf16.mxu0 0
      %1256 = vmatpush1.bf16.msra.mxu0 %v1235
      %1257 = vmatprep.subr.bf16.mxu0 0
      %1258 = vmatpush1.bf16.msra.mxu0 %v1236
      %1259 = vmatprep.subr.bf16.mxu0 0
      %1260 = vmatpush1.bf16.msra.mxu0 %v1237
      %1261 = vmatprep.subr.bf16.mxu0 0
      %1262 = vmatpush1.bf16.msra.mxu0 %v1238
      %1263 = vmatprep.subr.bf16.mxu0 0
      %1264 = vmatpush1.bf16.msra.mxu0 0
      %1265 = vmatprep.subr.bf16.mxu0 0
      %1266 = vmatpush1.bf16.msra.mxu0 0
      %1267 = vmatprep.subr.bf16.mxu0 0
      %1268 = vmatpush1.bf16.msra.mxu0 0
      %1269 = vmatprep.subr.bf16.mxu0 0
      %1270 = vmatpush1.bf16.msra.mxu0 0
      %1271 = vmatprep.subr.bf16.mxu0 0
      %1272 = vmatpush1.bf16.msra.mxu0 0
      %1273 = vmatprep.subr.bf16.mxu0 0
      %1274 = vmatpush1.bf16.msra.mxu0 0
      %1275 = vmatprep.subr.bf16.mxu0 0
      %1276 = vmatpush1.bf16.msra.mxu0 0
      %1277 = vmatprep.subr.bf16.mxu0 0
      %1278 = vmatpush1.bf16.msra.mxu0 0
      %1279 = vmatprep.mubr.bf16.mxu0 0
      %1280 = vmatmul.mubr.bf16.gmra.mrb[0].mxu0 %v1174
      %v1281 = vpop.f32.mrb[0].mxu0
      %v1282 = vadd.f32 0.0, %v1281
      %v1283 = vpop.f32.mrb[0].mxu0
      %v1284 = vpop.f32.mrb[0].mxu0
      %v1285 = vpop.f32.mrb[0].mxu0
      %1286 = vmatprep.mubr.bf16.mxu0 0
      %1287 = vmatmul.mubr.bf16.gmra.mrb[0].mxu0 %v1175
      %v1288 = vpop.f32.mrb[0].mxu0
      %v1289 = vadd.f32 0.0, %v1288
      %v1290 = vpop.f32.mrb[0].mxu0
      %v1291 = vpop.f32.mrb[0].mxu0
      %v1292 = vpop.f32.mrb[0].mxu0
      %1293 = vmatprep.mubr.bf16.mxu0 0
      %1294 = vmatmul.mubr.bf16.gmra.mrb[0].mxu0 %v1176
      %v1295 = vpop.f32.mrb[0].mxu0
      %v1296 = vadd.f32 0.0, %v1295
      %v1297 = vpop.f32.mrb[0].mxu0
      %v1298 = vpop.f32.mrb[0].mxu0
      %v1299 = vpop.f32.mrb[0].mxu0
      %1300 = vmatprep.mubr.bf16.mxu0 0
      %1301 = vmatmul.mubr.bf16.gmra.mrb[0].mxu0 %v1177
      %v1302 = vpop.f32.mrb[0].mxu0
      %v1303 = vadd.f32 0.0, %v1302
      %v1304 = vpop.f32.mrb[0].mxu0
      %v1305 = vpop.f32.mrb[0].mxu0
      %v1306 = vpop.f32.mrb[0].mxu0
      %1307 = vmatprep.mubr.bf16.mxu0 0
      %1308 = vmatmul.mubr.bf16.gmra.mrb[0].mxu0 %v1178
      %v1309 = vpop.f32.mrb[0].mxu0
      %v1310 = vadd.f32 0.0, %v1309
      %v1311 = vpop.f32.mrb[0].mxu0
      %v1312 = vpop.f32.mrb[0].mxu0
      %v1313 = vpop.f32.mrb[0].mxu0
      %1314 = vmatprep.mubr.bf16.mxu0 0
      %1315 = vmatmul.mubr.bf16.gmra.mrb[0].mxu0 %v1179
      %v1316 = vpop.f32.mrb[0].mxu0
      %v1317 = vadd.f32 0.0, %v1316
      %v1318 = vpop.f32.mrb[0].mxu0
      %v1319 = vpop.f32.mrb[0].mxu0
      %v1320 = vpop.f32.mrb[0].mxu0
      %1321 = vmatprep.mubr.bf16.mxu0 0
      %1322 = vmatmul.mubr.bf16.gmra.mrb[0].mxu0 %v1180
      %v1323 = vpop.f32.mrb[0].mxu0
      %v1324 = vadd.f32 0.0, %v1323
      %v1325 = vpop.f32.mrb[0].mxu0
      %v1326 = vpop.f32.mrb[0].mxu0
      %v1327 = vpop.f32.mrb[0].mxu0
      %1328 = vmatprep.mubr.bf16.mxu0 0
      %1329 = vmatmul.mubr.bf16.gmra.mrb[0].mxu0 %v1181
      %v1330 = vpop.f32.mrb[0].mxu0
      %v1331 = vadd.f32 0.0, %v1330
      %v1332 = vpop.f32.mrb[0].mxu0
      %v1333 = vpop.f32.mrb[0].mxu0
      %v1334 = vpop.f32.mrb[0].mxu0
      %1335 = vdwg.mxu0
      %v1336 = vadd.f32 %v1150, %v1282
      %v1337 = vadd.f32 %v1151, %v1289
      %v1338 = vadd.f32 %v1152, %v1296
      %v1339 = vadd.f32 %v1153, %v1303
      %v1340 = vadd.f32 %v1154, %v1310
      %v1341 = vadd.f32 %v1155, %v1317
      %v1342 = vadd.f32 %v1156, %v1324
      %v1343 = vadd.f32 %v1157, %v1331
      %v1344 = vld [vmem:[#allocation5 + $0x18] sm:$0xff]
      %v1345 = vld [vmem:[#allocation5 + $0x20] sm:$0xff]
      %v1346 = vld [vmem:[#allocation5 + $0x28] sm:$0xff]
      %v1347 = vld [vmem:[#allocation5 + $0x30] sm:$0xff]
      %v1348 = vld [vmem:[#allocation5 + $0x38] sm:$0xff]
      %v1349 = vld [vmem:[#allocation5 + $0x40] sm:$0xff]
      %v1350 = vld [vmem:[#allocation5 + $0x48] sm:$0xff]
      %v1351 = vld [vmem:[#allocation5 + $0x50] sm:$0xff]
      %v1352 = vld [vmem:[#allocation5 + $0x58] sm:$0xff]
      %v1353 = vld [vmem:[#allocation5 + $0x60] sm:$0xff]
      %v1354 = vld [vmem:[#allocation5 + $0x68] sm:$0xff]
      %v1355 = vld [vmem:[#allocation5 + $0x70] sm:$0xff]
      %v1356 = vld [vmem:[#allocation5 + $0x78] sm:$0xff]
      %v1357 = vld [vmem:[#allocation5 + $0x80] sm:$0xff]
      %v1358 = vld [vmem:[#allocation5 + $0x88] sm:$0xff]
      %v1359 = vld [vmem:[#allocation5 + $0x90] sm:$0xff]
      %v1360 = vpack.c.bf16 %v1345, %v1344
      %v1361 = vpack.c.bf16 %v1347, %v1346
      %v1362 = vpack.c.bf16 %v1349, %v1348
      %v1363 = vpack.c.bf16 %v1351, %v1350
      %v1364 = vpack.c.bf16 %v1353, %v1352
      %v1365 = vpack.c.bf16 %v1355, %v1354
      %v1366 = vpack.c.bf16 %v1357, %v1356
      %v1367 = vpack.c.bf16 %v1359, %v1358
      %s1368 = scalar_lea.vmem %s3, 256
      %v1369 = vld [vmem:[%s1368] sm:$0xf]
      %v1370 = vld [vmem:[%s1368 + $0x4] sm:$0xf]
      %v1371 = vld [vmem:[%s1368 + $0x8] sm:$0xf]
      %v1372 = vld [vmem:[%s1368 + $0xc] sm:$0xf]
      %v1373 = vld [vmem:[%s1368 + $0x10] sm:$0xf]
      %v1374 = vld [vmem:[%s1368 + $0x14] sm:$0xf]
      %v1375 = vld [vmem:[%s1368 + $0x18] sm:$0xf]
      %v1376 = vld [vmem:[%s1368 + $0x1c] sm:$0xf]
      %v1377 = vld [vmem:[%s1368 + $0x20] sm:$0xf]
      %v1378 = vld [vmem:[%s1368 + $0x24] sm:$0xf]
      %v1379 = vld [vmem:[%s1368 + $0x28] sm:$0xf]
      %v1380 = vld [vmem:[%s1368 + $0x2c] sm:$0xf]
      %v1381 = vld [vmem:[%s1368 + $0x30] sm:$0xf]
      %v1382 = vld [vmem:[%s1368 + $0x34] sm:$0xf]
      %v1383 = vld [vmem:[%s1368 + $0x38] sm:$0xf]
      %v1384 = vld [vmem:[%s1368 + $0x3c] sm:$0xf]
      %v1401 = vunpack.c.l.b16 %v1369
      %v1402 = vunpack.c.l.b16 %v1370
      %v1403 = vunpack.c.l.b16 %v1371
      %v1404 = vunpack.c.l.b16 %v1372
      %v1405 = vunpack.c.l.b16 %v1373
      %v1406 = vunpack.c.l.b16 %v1374
      %v1407 = vunpack.c.l.b16 %v1375
      %v1408 = vunpack.c.l.b16 %v1376
      %v1409 = vunpack.c.l.b16 %v1377
      %v1410 = vunpack.c.l.b16 %v1378
      %v1411 = vunpack.c.l.b16 %v1379
      %v1412 = vunpack.c.l.b16 %v1380
      %v1413 = vunpack.c.l.b16 %v1381
      %v1414 = vunpack.c.l.b16 %v1382
      %v1415 = vunpack.c.l.b16 %v1383
      %v1416 = vunpack.c.l.b16 %v1384
      %v1417 = vpack.c.b16 %v1402, %v1401
      %v1418 = vpack.c.b16 %v1404, %v1403
      %v1419 = vpack.c.b16 %v1406, %v1405
      %v1420 = vpack.c.b16 %v1408, %v1407
      %v1421 = vpack.c.b16 %v1410, %v1409
      %v1422 = vpack.c.b16 %v1412, %v1411
      %v1423 = vpack.c.b16 %v1414, %v1413
      %v1424 = vpack.c.b16 %v1416, %v1415
      %1433 = vmatprep.subr.bf16.mxu0 0
      %1434 = vmatpush1.bf16.msra.mxu0 %v1417
      %1435 = vmatprep.subr.bf16.mxu0 0
      %1436 = vmatpush1.bf16.msra.mxu0 %v1418
      %1437 = vmatprep.subr.bf16.mxu0 0
      %1438 = vmatpush1.bf16.msra.mxu0 %v1419
      %1439 = vmatprep.subr.bf16.mxu0 0
      %1440 = vmatpush1.bf16.msra.mxu0 %v1420
      %1441 = vmatprep.subr.bf16.mxu0 0
      %1442 = vmatpush1.bf16.msra.mxu0 %v1421
      %1443 = vmatprep.subr.bf16.mxu0 0
      %1444 = vmatpush1.bf16.msra.mxu0 %v1422
      %1445 = vmatprep.subr.bf16.mxu0 0
      %1446 = vmatpush1.bf16.msra.mxu0 %v1423
      %1447 = vmatprep.subr.bf16.mxu0 0
      %1448 = vmatpush1.bf16.msra.mxu0 %v1424
      %1449 = vmatprep.subr.bf16.mxu0 0
      %1450 = vmatpush1.bf16.msra.mxu0 0
      %1451 = vmatprep.subr.bf16.mxu0 0
      %1452 = vmatpush1.bf16.msra.mxu0 0
      %1453 = vmatprep.subr.bf16.mxu0 0
      %1454 = vmatpush1.bf16.msra.mxu0 0
      %1455 = vmatprep.subr.bf16.mxu0 0
      %1456 = vmatpush1.bf16.msra.mxu0 0
      %1457 = vmatprep.subr.bf16.mxu0 0
      %1458 = vmatpush1.bf16.msra.mxu0 0
      %1459 = vmatprep.subr.bf16.mxu0 0
      %1460 = vmatpush1.bf16.msra.mxu0 0
      %1461 = vmatprep.subr.bf16.mxu0 0
      %1462 = vmatpush1.bf16.msra.mxu0 0
      %1463 = vmatprep.subr.bf16.mxu0 0
      %1464 = vmatpush1.bf16.msra.mxu0 0
      %1465 = vmatprep.mubr.bf16.mxu0 0
      %1466 = vmatmul.mubr.bf16.gmra.mrb[0].mxu0 %v1360
      %v1467 = vpop.f32.mrb[0].mxu0
      %v1468 = vadd.f32 0.0, %v1467
      %v1469 = vpop.f32.mrb[0].mxu0
      %v1470 = vpop.f32.mrb[0].mxu0
      %v1471 = vpop.f32.mrb[0].mxu0
      %1472 = vmatprep.mubr.bf16.mxu0 0
      %1473 = vmatmul.mubr.bf16.gmra.mrb[0].mxu0 %v1361
      %v1474 = vpop.f32.mrb[0].mxu0
      %v1475 = vadd.f32 0.0, %v1474
      %v1476 = vpop.f32.mrb[0].mxu0
      %v1477 = vpop.f32.mrb[0].mxu0
      %v1478 = vpop.f32.mrb[0].mxu0
      %1479 = vmatprep.mubr.bf16.mxu0 0
      %1480 = vmatmul.mubr.bf16.gmra.mrb[0].mxu0 %v1362
      %v1481 = vpop.f32.mrb[0].mxu0
      %v1482 = vadd.f32 0.0, %v1481
      %v1483 = vpop.f32.mrb[0].mxu0
      %v1484 = vpop.f32.mrb[0].mxu0
      %v1485 = vpop.f32.mrb[0].mxu0
      %1486 = vmatprep.mubr.bf16.mxu0 0
      %1487 = vmatmul.mubr.bf16.gmra.mrb[0].mxu0 %v1363
      %v1488 = vpop.f32.mrb[0].mxu0
      %v1489 = vadd.f32 0.0, %v1488
      %v1490 = vpop.f32.mrb[0].mxu0
      %v1491 = vpop.f32.mrb[0].mxu0
      %v1492 = vpop.f32.mrb[0].mxu0
      %1493 = vmatprep.mubr.bf16.mxu0 0
      %1494 = vmatmul.mubr.bf16.gmra.mrb[0].mxu0 %v1364
      %v1495 = vpop.f32.mrb[0].mxu0
      %v1496 = vadd.f32 0.0, %v1495
      %v1497 = vpop.f32.mrb[0].mxu0
      %v1498 = vpop.f32.mrb[0].mxu0
      %v1499 = vpop.f32.mrb[0].mxu0
      %1500 = vmatprep.mubr.bf16.mxu0 0
      %1501 = vmatmul.mubr.bf16.gmra.mrb[0].mxu0 %v1365
      %v1502 = vpop.f32.mrb[0].mxu0
      %v1503 = vadd.f32 0.0, %v1502
      %v1504 = vpop.f32.mrb[0].mxu0
      %v1505 = vpop.f32.mrb[0].mxu0
      %v1506 = vpop.f32.mrb[0].mxu0
      %1507 = vmatprep.mubr.bf16.mxu0 0
      %1508 = vmatmul.mubr.bf16.gmra.mrb[0].mxu0 %v1366
      %v1509 = vpop.f32.mrb[0].mxu0
      %v1510 = vadd.f32 0.0, %v1509
      %v1511 = vpop.f32.mrb[0].mxu0
      %v1512 = vpop.f32.mrb[0].mxu0
      %v1513 = vpop.f32.mrb[0].mxu0
      %1514 = vmatprep.mubr.bf16.mxu0 0
      %1515 = vmatmul.mubr.bf16.gmra.mrb[0].mxu0 %v1367
      %v1516 = vpop.f32.mrb[0].mxu0
      %v1517 = vadd.f32 0.0, %v1516
      %v1518 = vpop.f32.mrb[0].mxu0
      %v1519 = vpop.f32.mrb[0].mxu0
      %v1520 = vpop.f32.mrb[0].mxu0
      %1521 = vdwg.mxu0
      %v1522 = vadd.f32 %v1336, %v1468
      %v1523 = vadd.f32 %v1337, %v1475
      %v1524 = vadd.f32 %v1338, %v1482
      %v1525 = vadd.f32 %v1339, %v1489
      %v1526 = vadd.f32 %v1340, %v1496
      %v1527 = vadd.f32 %v1341, %v1503
      %v1528 = vadd.f32 %v1342, %v1510
      %v1529 = vadd.f32 %v1343, %v1517
      %v1530 = vld [vmem:[#allocation5 + $0x19] sm:$0xff]
      %v1531 = vld [vmem:[#allocation5 + $0x21] sm:$0xff]
      %v1532 = vld [vmem:[#allocation5 + $0x29] sm:$0xff]
      %v1533 = vld [vmem:[#allocation5 + $0x31] sm:$0xff]
      %v1534 = vld [vmem:[#allocation5 + $0x39] sm:$0xff]
      %v1535 = vld [vmem:[#allocation5 + $0x41] sm:$0xff]
      %v1536 = vld [vmem:[#allocation5 + $0x49] sm:$0xff]
      %v1537 = vld [vmem:[#allocation5 + $0x51] sm:$0xff]
      %v1538 = vld [vmem:[#allocation5 + $0x59] sm:$0xff]
      %v1539 = vld [vmem:[#allocation5 + $0x61] sm:$0xff]
      %v1540 = vld [vmem:[#allocation5 + $0x69] sm:$0xff]
      %v1541 = vld [vmem:[#allocation5 + $0x71] sm:$0xff]
      %v1542 = vld [vmem:[#allocation5 + $0x79] sm:$0xff]
      %v1543 = vld [vmem:[#allocation5 + $0x81] sm:$0xff]
      %v1544 = vld [vmem:[#allocation5 + $0x89] sm:$0xff]
      %v1545 = vld [vmem:[#allocation5 + $0x91] sm:$0xff]
      %v1546 = vpack.c.bf16 %v1531, %v1530
      %v1547 = vpack.c.bf16 %v1533, %v1532
      %v1548 = vpack.c.bf16 %v1535, %v1534
      %v1549 = vpack.c.bf16 %v1537, %v1536
      %v1550 = vpack.c.bf16 %v1539, %v1538
      %v1551 = vpack.c.bf16 %v1541, %v1540
      %v1552 = vpack.c.bf16 %v1543, %v1542
      %v1553 = vpack.c.bf16 %v1545, %v1544
      %s1554 = scalar_lea.vmem %s3, 320
      %v1555 = vld [vmem:[%s1554] sm:$0xf]
      %v1556 = vld [vmem:[%s1554 + $0x4] sm:$0xf]
      %v1557 = vld [vmem:[%s1554 + $0x8] sm:$0xf]
      %v1558 = vld [vmem:[%s1554 + $0xc] sm:$0xf]
      %v1559 = vld [vmem:[%s1554 + $0x10] sm:$0xf]
      %v1560 = vld [vmem:[%s1554 + $0x14] sm:$0xf]
      %v1561 = vld [vmem:[%s1554 + $0x18] sm:$0xf]
      %v1562 = vld [vmem:[%s1554 + $0x1c] sm:$0xf]
      %v1563 = vld [vmem:[%s1554 + $0x20] sm:$0xf]
      %v1564 = vld [vmem:[%s1554 + $0x24] sm:$0xf]
      %v1565 = vld [vmem:[%s1554 + $0x28] sm:$0xf]
      %v1566 = vld [vmem:[%s1554 + $0x2c] sm:$0xf]
      %v1567 = vld [vmem:[%s1554 + $0x30] sm:$0xf]
      %v1568 = vld [vmem:[%s1554 + $0x34] sm:$0xf]
      %v1569 = vld [vmem:[%s1554 + $0x38] sm:$0xf]
      %v1570 = vld [vmem:[%s1554 + $0x3c] sm:$0xf]
      %v1587 = vunpack.c.l.b16 %v1555
      %v1588 = vunpack.c.l.b16 %v1556
      %v1589 = vunpack.c.l.b16 %v1557
      %v1590 = vunpack.c.l.b16 %v1558
      %v1591 = vunpack.c.l.b16 %v1559
      %v1592 = vunpack.c.l.b16 %v1560
      %v1593 = vunpack.c.l.b16 %v1561
      %v1594 = vunpack.c.l.b16 %v1562
      %v1595 = vunpack.c.l.b16 %v1563
      %v1596 = vunpack.c.l.b16 %v1564
      %v1597 = vunpack.c.l.b16 %v1565
      %v1598 = vunpack.c.l.b16 %v1566
      %v1599 = vunpack.c.l.b16 %v1567
      %v1600 = vunpack.c.l.b16 %v1568
      %v1601 = vunpack.c.l.b16 %v1569
      %v1602 = vunpack.c.l.b16 %v1570
      %v1603 = vpack.c.b16 %v1588, %v1587
      %v1604 = vpack.c.b16 %v1590, %v1589
      %v1605 = vpack.c.b16 %v1592, %v1591
      %v1606 = vpack.c.b16 %v1594, %v1593
      %v1607 = vpack.c.b16 %v1596, %v1595
      %v1608 = vpack.c.b16 %v1598, %v1597
      %v1609 = vpack.c.b16 %v1600, %v1599
      %v1610 = vpack.c.b16 %v1602, %v1601
      %1619 = vmatprep.subr.bf16.mxu0 0
      %1620 = vmatpush1.bf16.msra.mxu0 %v1603
      %1621 = vmatprep.subr.bf16.mxu0 0
      %1622 = vmatpush1.bf16.msra.mxu0 %v1604
      %1623 = vmatprep.subr.bf16.mxu0 0
      %1624 = vmatpush1.bf16.msra.mxu0 %v1605
      %1625 = vmatprep.subr.bf16.mxu0 0
      %1626 = vmatpush1.bf16.msra.mxu0 %v1606
      %1627 = vmatprep.subr.bf16.mxu0 0
      %1628 = vmatpush1.bf16.msra.mxu0 %v1607
      %1629 = vmatprep.subr.bf16.mxu0 0
      %1630 = vmatpush1.bf16.msra.mxu0 %v1608
      %1631 = vmatprep.subr.bf16.mxu0 0
      %1632 = vmatpush1.bf16.msra.mxu0 %v1609
      %1633 = vmatprep.subr.bf16.mxu0 0
      %1634 = vmatpush1.bf16.msra.mxu0 %v1610
      %1635 = vmatprep.subr.bf16.mxu0 0
      %1636 = vmatpush1.bf16.msra.mxu0 0
      %1637 = vmatprep.subr.bf16.mxu0 0
      %1638 = vmatpush1.bf16.msra.mxu0 0
      %1639 = vmatprep.subr.bf16.mxu0 0
      %1640 = vmatpush1.bf16.msra.mxu0 0
      %1641 = vmatprep.subr.bf16.mxu0 0
      %1642 = vmatpush1.bf16.msra.mxu0 0
      %1643 = vmatprep.subr.bf16.mxu0 0
      %1644 = vmatpush1.bf16.msra.mxu0 0
      %1645 = vmatprep.subr.bf16.mxu0 0
      %1646 = vmatpush1.bf16.msra.mxu0 0
      %1647 = vmatprep.subr.bf16.mxu0 0
      %1648 = vmatpush1.bf16.msra.mxu0 0
      %1649 = vmatprep.subr.bf16.mxu0 0
      %1650 = vmatpush1.bf16.msra.mxu0 0
      %1651 = vmatprep.mubr.bf16.mxu0 0
      %1652 = vmatmul.mubr.bf16.gmra.mrb[0].mxu0 %v1546
      %v1653 = vpop.f32.mrb[0].mxu0
      %v1654 = vadd.f32 0.0, %v1653
      %v1655 = vpop.f32.mrb[0].mxu0
      %v1656 = vpop.f32.mrb[0].mxu0
      %v1657 = vpop.f32.mrb[0].mxu0
      %1658 = vmatprep.mubr.bf16.mxu0 0
      %1659 = vmatmul.mubr.bf16.gmra.mrb[0].mxu0 %v1547
      %v1660 = vpop.f32.mrb[0].mxu0
      %v1661 = vadd.f32 0.0, %v1660
      %v1662 = vpop.f32.mrb[0].mxu0
      %v1663 = vpop.f32.mrb[0].mxu0
      %v1664 = vpop.f32.mrb[0].mxu0
      %1665 = vmatprep.mubr.bf16.mxu0 0
      %1666 = vmatmul.mubr.bf16.gmra.mrb[0].mxu0 %v1548
      %v1667 = vpop.f32.mrb[0].mxu0
      %v1668 = vadd.f32 0.0, %v1667
      %v1669 = vpop.f32.mrb[0].mxu0
      %v1670 = vpop.f32.mrb[0].mxu0
      %v1671 = vpop.f32.mrb[0].mxu0
      %1672 = vmatprep.mubr.bf16.mxu0 0
      %1673 = vmatmul.mubr.bf16.gmra.mrb[0].mxu0 %v1549
      %v1674 = vpop.f32.mrb[0].mxu0
      %v1675 = vadd.f32 0.0, %v1674
      %v1676 = vpop.f32.mrb[0].mxu0
      %v1677 = vpop.f32.mrb[0].mxu0
      %v1678 = vpop.f32.mrb[0].mxu0
      %1679 = vmatprep.mubr.bf16.mxu0 0
      %1680 = vmatmul.mubr.bf16.gmra.mrb[0].mxu0 %v1550
      %v1681 = vpop.f32.mrb[0].mxu0
      %v1682 = vadd.f32 0.0, %v1681
      %v1683 = vpop.f32.mrb[0].mxu0
      %v1684 = vpop.f32.mrb[0].mxu0
      %v1685 = vpop.f32.mrb[0].mxu0
      %1686 = vmatprep.mubr.bf16.mxu0 0
      %1687 = vmatmul.mubr.bf16.gmra.mrb[0].mxu0 %v1551
      %v1688 = vpop.f32.mrb[0].mxu0
      %v1689 = vadd.f32 0.0, %v1688
      %v1690 = vpop.f32.mrb[0].mxu0
      %v1691 = vpop.f32.mrb[0].mxu0
      %v1692 = vpop.f32.mrb[0].mxu0
      %1693 = vmatprep.mubr.bf16.mxu0 0
      %1694 = vmatmul.mubr.bf16.gmra.mrb[0].mxu0 %v1552
      %v1695 = vpop.f32.mrb[0].mxu0
      %v1696 = vadd.f32 0.0, %v1695
      %v1697 = vpop.f32.mrb[0].mxu0
      %v1698 = vpop.f32.mrb[0].mxu0
      %v1699 = vpop.f32.mrb[0].mxu0
      %1700 = vmatprep.mubr.bf16.mxu0 0
      %1701 = vmatmul.mubr.bf16.gmra.mrb[0].mxu0 %v1553
      %v1702 = vpop.f32.mrb[0].mxu0
      %v1703 = vadd.f32 0.0, %v1702
      %v1704 = vpop.f32.mrb[0].mxu0
      %v1705 = vpop.f32.mrb[0].mxu0
      %v1706 = vpop.f32.mrb[0].mxu0
      %1707 = vdwg.mxu0
      %v1708 = vadd.f32 %v1522, %v1654
      %v1709 = vadd.f32 %v1523, %v1661
      %v1710 = vadd.f32 %v1524, %v1668
      %v1711 = vadd.f32 %v1525, %v1675
      %v1712 = vadd.f32 %v1526, %v1682
      %v1713 = vadd.f32 %v1527, %v1689
      %v1714 = vadd.f32 %v1528, %v1696
      %v1715 = vadd.f32 %v1529, %v1703
      %v1716 = vld [vmem:[#allocation5 + $0x27] sm:$0xff]
      %v1717 = vld [vmem:[#allocation5 + $0x2f] sm:$0xff]
      %v1718 = vld [vmem:[#allocation5 + $0x37] sm:$0xff]
      %v1719 = vld [vmem:[#allocation5 + $0x3f] sm:$0xff]
      %v1720 = vld [vmem:[#allocation5 + $0x47] sm:$0xff]
      %v1721 = vld [vmem:[#allocation5 + $0x4f] sm:$0xff]
      %v1722 = vld [vmem:[#allocation5 + $0x57] sm:$0xff]
      %v1723 = vld [vmem:[#allocation5 + $0x5f] sm:$0xff]
      %v1724 = vld [vmem:[#allocation5 + $0x67] sm:$0xff]
      %v1725 = vld [vmem:[#allocation5 + $0x6f] sm:$0xff]
      %v1726 = vld [vmem:[#allocation5 + $0x77] sm:$0xff]
      %v1727 = vld [vmem:[#allocation5 + $0x7f] sm:$0xff]
      %v1728 = vld [vmem:[#allocation5 + $0x87] sm:$0xff]
      %v1729 = vld [vmem:[#allocation5 + $0x8f] sm:$0xff]
      %v1730 = vld [vmem:[#allocation5 + $0x97] sm:$0xff]
      %v1731 = vld [vmem:[#allocation5 + $0x9f] sm:$0xff]
      %v1732 = vpack.c.bf16 %v1717, %v1716
      %v1733 = vpack.c.bf16 %v1719, %v1718
      %v1734 = vpack.c.bf16 %v1721, %v1720
      %v1735 = vpack.c.bf16 %v1723, %v1722
      %v1736 = vpack.c.bf16 %v1725, %v1724
      %v1737 = vpack.c.bf16 %v1727, %v1726
      %v1738 = vpack.c.bf16 %v1729, %v1728
      %v1739 = vpack.c.bf16 %v1731, %v1730
      %s1740 = scalar_lea.vmem %s3, 384
      %v1741 = vld [vmem:[%s1740] sm:$0xf]
      %v1742 = vld [vmem:[%s1740 + $0x4] sm:$0xf]
      %v1743 = vld [vmem:[%s1740 + $0x8] sm:$0xf]
      %v1744 = vld [vmem:[%s1740 + $0xc] sm:$0xf]
      %v1745 = vld [vmem:[%s1740 + $0x10] sm:$0xf]
      %v1746 = vld [vmem:[%s1740 + $0x14] sm:$0xf]
      %v1747 = vld [vmem:[%s1740 + $0x18] sm:$0xf]
      %v1748 = vld [vmem:[%s1740 + $0x1c] sm:$0xf]
      %v1749 = vld [vmem:[%s1740 + $0x20] sm:$0xf]
      %v1750 = vld [vmem:[%s1740 + $0x24] sm:$0xf]
      %v1751 = vld [vmem:[%s1740 + $0x28] sm:$0xf]
      %v1752 = vld [vmem:[%s1740 + $0x2c] sm:$0xf]
      %v1753 = vld [vmem:[%s1740 + $0x30] sm:$0xf]
      %v1754 = vld [vmem:[%s1740 + $0x34] sm:$0xf]
      %v1755 = vld [vmem:[%s1740 + $0x38] sm:$0xf]
      %v1756 = vld [vmem:[%s1740 + $0x3c] sm:$0xf]
      %v1773 = vunpack.c.l.b16 %v1741
      %v1774 = vunpack.c.l.b16 %v1742
      %v1775 = vunpack.c.l.b16 %v1743
      %v1776 = vunpack.c.l.b16 %v1744
      %v1777 = vunpack.c.l.b16 %v1745
      %v1778 = vunpack.c.l.b16 %v1746
      %v1779 = vunpack.c.l.b16 %v1747
      %v1780 = vunpack.c.l.b16 %v1748
      %v1781 = vunpack.c.l.b16 %v1749
      %v1782 = vunpack.c.l.b16 %v1750
      %v1783 = vunpack.c.l.b16 %v1751
      %v1784 = vunpack.c.l.b16 %v1752
      %v1785 = vunpack.c.l.b16 %v1753
      %v1786 = vunpack.c.l.b16 %v1754
      %v1787 = vunpack.c.l.b16 %v1755
      %v1788 = vunpack.c.l.b16 %v1756
      %v1789 = vpack.c.b16 %v1774, %v1773
      %v1790 = vpack.c.b16 %v1776, %v1775
      %v1791 = vpack.c.b16 %v1778, %v1777
      %v1792 = vpack.c.b16 %v1780, %v1779
      %v1793 = vpack.c.b16 %v1782, %v1781
      %v1794 = vpack.c.b16 %v1784, %v1783
      %v1795 = vpack.c.b16 %v1786, %v1785
      %v1796 = vpack.c.b16 %v1788, %v1787
      %1805 = vmatprep.subr.bf16.mxu0 0
      %1806 = vmatpush1.bf16.msra.mxu0 %v1789
      %1807 = vmatprep.subr.bf16.mxu0 0
      %1808 = vmatpush1.bf16.msra.mxu0 %v1790
      %1809 = vmatprep.subr.bf16.mxu0 0
      %1810 = vmatpush1.bf16.msra.mxu0 %v1791
      %1811 = vmatprep.subr.bf16.mxu0 0
      %1812 = vmatpush1.bf16.msra.mxu0 %v1792
      %1813 = vmatprep.subr.bf16.mxu0 0
      %1814 = vmatpush1.bf16.msra.mxu0 %v1793
      %1815 = vmatprep.subr.bf16.mxu0 0
      %1816 = vmatpush1.bf16.msra.mxu0 %v1794
      %1817 = vmatprep.subr.bf16.mxu0 0
      %1818 = vmatpush1.bf16.msra.mxu0 %v1795
      %1819 = vmatprep.subr.bf16.mxu0 0
      %1820 = vmatpush1.bf16.msra.mxu0 %v1796
      %1821 = vmatprep.subr.bf16.mxu0 0
      %1822 = vmatpush1.bf16.msra.mxu0 0
      %1823 = vmatprep.subr.bf16.mxu0 0
      %1824 = vmatpush1.bf16.msra.mxu0 0
      %1825 = vmatprep.subr.bf16.mxu0 0
      %1826 = vmatpush1.bf16.msra.mxu0 0
      %1827 = vmatprep.subr.bf16.mxu0 0
      %1828 = vmatpush1.bf16.msra.mxu0 0
      %1829 = vmatprep.subr.bf16.mxu0 0
      %1830 = vmatpush1.bf16.msra.mxu0 0
      %1831 = vmatprep.subr.bf16.mxu0 0
      %1832 = vmatpush1.bf16.msra.mxu0 0
      %1833 = vmatprep.subr.bf16.mxu0 0
      %1834 = vmatpush1.bf16.msra.mxu0 0
      %1835 = vmatprep.subr.bf16.mxu0 0
      %1836 = vmatpush1.bf16.msra.mxu0 0
      %1837 = vmatprep.mubr.bf16.mxu0 0
      %1838 = vmatmul.mubr.bf16.gmra.mrb[0].mxu0 %v1732
      %v1839 = vpop.f32.mrb[0].mxu0
      %v1840 = vadd.f32 0.0, %v1839
      %v1841 = vpop.f32.mrb[0].mxu0
      %v1842 = vpop.f32.mrb[0].mxu0
      %v1843 = vpop.f32.mrb[0].mxu0
      %1844 = vmatprep.mubr.bf16.mxu0 0
      %1845 = vmatmul.mubr.bf16.gmra.mrb[0].mxu0 %v1733
      %v1846 = vpop.f32.mrb[0].mxu0
      %v1847 = vadd.f32 0.0, %v1846
      %v1848 = vpop.f32.mrb[0].mxu0
      %v1849 = vpop.f32.mrb[0].mxu0
      %v1850 = vpop.f32.mrb[0].mxu0
      %1851 = vmatprep.mubr.bf16.mxu0 0
      %1852 = vmatmul.mubr.bf16.gmra.mrb[0].mxu0 %v1734
      %v1853 = vpop.f32.mrb[0].mxu0
      %v1854 = vadd.f32 0.0, %v1853
      %v1855 = vpop.f32.mrb[0].mxu0
      %v1856 = vpop.f32.mrb[0].mxu0
      %v1857 = vpop.f32.mrb[0].mxu0
      %1858 = vmatprep.mubr.bf16.mxu0 0
      %1859 = vmatmul.mubr.bf16.gmra.mrb[0].mxu0 %v1735
      %v1860 = vpop.f32.mrb[0].mxu0
      %v1861 = vadd.f32 0.0, %v1860
      %v1862 = vpop.f32.mrb[0].mxu0
      %v1863 = vpop.f32.mrb[0].mxu0
      %v1864 = vpop.f32.mrb[0].mxu0
      %1865 = vmatprep.mubr.bf16.mxu0 0
      %1866 = vmatmul.mubr.bf16.gmra.mrb[0].mxu0 %v1736
      %v1867 = vpop.f32.mrb[0].mxu0
      %v1868 = vadd.f32 0.0, %v1867
      %v1869 = vpop.f32.mrb[0].mxu0
      %v1870 = vpop.f32.mrb[0].mxu0
      %v1871 = vpop.f32.mrb[0].mxu0
      %1872 = vmatprep.mubr.bf16.mxu0 0
      %1873 = vmatmul.mubr.bf16.gmra.mrb[0].mxu0 %v1737
      %v1874 = vpop.f32.mrb[0].mxu0
      %v1875 = vadd.f32 0.0, %v1874
      %v1876 = vpop.f32.mrb[0].mxu0
      %v1877 = vpop.f32.mrb[0].mxu0
      %v1878 = vpop.f32.mrb[0].mxu0
      %1879 = vmatprep.mubr.bf16.mxu0 0
      %1880 = vmatmul.mubr.bf16.gmra.mrb[0].mxu0 %v1738
      %v1881 = vpop.f32.mrb[0].mxu0
      %v1882 = vadd.f32 0.0, %v1881
      %v1883 = vpop.f32.mrb[0].mxu0
      %v1884 = vpop.f32.mrb[0].mxu0
      %v1885 = vpop.f32.mrb[0].mxu0
      %1886 = vmatprep.mubr.bf16.mxu0 0
      %1887 = vmatmul.mubr.bf16.gmra.mrb[0].mxu0 %v1739
      %v1888 = vpop.f32.mrb[0].mxu0
      %v1889 = vadd.f32 0.0, %v1888
      %v1890 = vpop.f32.mrb[0].mxu0
      %v1891 = vpop.f32.mrb[0].mxu0
      %v1892 = vpop.f32.mrb[0].mxu0
      %1893 = vdwg.mxu0
      %v1894 = vadd.f32 %v1708, %v1840
      %v1895 = vadd.f32 %v1709, %v1847
      %v1896 = vadd.f32 %v1710, %v1854
      %v1897 = vadd.f32 %v1711, %v1861
      %v1898 = vadd.f32 %v1712, %v1868
      %v1899 = vadd.f32 %v1713, %v1875
      %v1900 = vadd.f32 %v1714, %v1882
      %v1901 = vadd.f32 %v1715, %v1889
      %v1902 = vld [vmem:[#allocation5 + $0x28] sm:$0xff]
      %v1903 = vld [vmem:[#allocation5 + $0x30] sm:$0xff]
      %v1904 = vld [vmem:[#allocation5 + $0x38] sm:$0xff]
      %v1905 = vld [vmem:[#allocation5 + $0x40] sm:$0xff]
      %v1906 = vld [vmem:[#allocation5 + $0x48] sm:$0xff]
      %v1907 = vld [vmem:[#allocation5 + $0x50] sm:$0xff]
      %v1908 = vld [vmem:[#allocation5 + $0x58] sm:$0xff]
      %v1909 = vld [vmem:[#allocation5 + $0x60] sm:$0xff]
      %v1910 = vld [vmem:[#allocation5 + $0x68] sm:$0xff]
      %v1911 = vld [vmem:[#allocation5 + $0x70] sm:$0xff]
      %v1912 = vld [vmem:[#allocation5 + $0x78] sm:$0xff]
      %v1913 = vld [vmem:[#allocation5 + $0x80] sm:$0xff]
      %v1914 = vld [vmem:[#allocation5 + $0x88] sm:$0xff]
      %v1915 = vld [vmem:[#allocation5 + $0x90] sm:$0xff]
      %v1916 = vld [vmem:[#allocation5 + $0x98] sm:$0xff]
      %v1917 = vld [vmem:[#allocation5 + $0xa0] sm:$0xff]
      %v1918 = vpack.c.bf16 %v1903, %v1902
      %v1919 = vpack.c.bf16 %v1905, %v1904
      %v1920 = vpack.c.bf16 %v1907, %v1906
      %v1921 = vpack.c.bf16 %v1909, %v1908
      %v1922 = vpack.c.bf16 %v1911, %v1910
      %v1923 = vpack.c.bf16 %v1913, %v1912
      %v1924 = vpack.c.bf16 %v1915, %v1914
      %v1925 = vpack.c.bf16 %v1917, %v1916
      %s1926 = scalar_lea.vmem %s3, 448
      %v1927 = vld [vmem:[%s1926] sm:$0xf]
      %v1928 = vld [vmem:[%s1926 + $0x4] sm:$0xf]
      %v1929 = vld [vmem:[%s1926 + $0x8] sm:$0xf]
      %v1930 = vld [vmem:[%s1926 + $0xc] sm:$0xf]
      %v1931 = vld [vmem:[%s1926 + $0x10] sm:$0xf]
      %v1932 = vld [vmem:[%s1926 + $0x14] sm:$0xf]
      %v1933 = vld [vmem:[%s1926 + $0x18] sm:$0xf]
      %v1934 = vld [vmem:[%s1926 + $0x1c] sm:$0xf]
      %v1935 = vld [vmem:[%s1926 + $0x20] sm:$0xf]
      %v1936 = vld [vmem:[%s1926 + $0x24] sm:$0xf]
      %v1937 = vld [vmem:[%s1926 + $0x28] sm:$0xf]
      %v1938 = vld [vmem:[%s1926 + $0x2c] sm:$0xf]
      %v1939 = vld [vmem:[%s1926 + $0x30] sm:$0xf]
      %v1940 = vld [vmem:[%s1926 + $0x34] sm:$0xf]
      %v1941 = vld [vmem:[%s1926 + $0x38] sm:$0xf]
      %v1942 = vld [vmem:[%s1926 + $0x3c] sm:$0xf]
      %v1959 = vunpack.c.l.b16 %v1927
      %v1960 = vunpack.c.l.b16 %v1928
      %v1961 = vunpack.c.l.b16 %v1929
      %v1962 = vunpack.c.l.b16 %v1930
      %v1963 = vunpack.c.l.b16 %v1931
      %v1964 = vunpack.c.l.b16 %v1932
      %v1965 = vunpack.c.l.b16 %v1933
      %v1966 = vunpack.c.l.b16 %v1934
      %v1967 = vunpack.c.l.b16 %v1935
      %v1968 = vunpack.c.l.b16 %v1936
      %v1969 = vunpack.c.l.b16 %v1937
      %v1970 = vunpack.c.l.b16 %v1938
      %v1971 = vunpack.c.l.b16 %v1939
      %v1972 = vunpack.c.l.b16 %v1940
      %v1973 = vunpack.c.l.b16 %v1941
      %v1974 = vunpack.c.l.b16 %v1942
      %v1975 = vpack.c.b16 %v1960, %v1959
      %v1976 = vpack.c.b16 %v1962, %v1961
      %v1977 = vpack.c.b16 %v1964, %v1963
      %v1978 = vpack.c.b16 %v1966, %v1965
      %v1979 = vpack.c.b16 %v1968, %v1967
      %v1980 = vpack.c.b16 %v1970, %v1969
      %v1981 = vpack.c.b16 %v1972, %v1971
      %v1982 = vpack.c.b16 %v1974, %v1973
      %1991 = vmatprep.subr.bf16.mxu0 0
      %1992 = vmatpush1.bf16.msra.mxu0 %v1975
      %1993 = vmatprep.subr.bf16.mxu0 0
      %1994 = vmatpush1.bf16.msra.mxu0 %v1976
      %1995 = vmatprep.subr.bf16.mxu0 0
      %1996 = vmatpush1.bf16.msra.mxu0 %v1977
      %1997 = vmatprep.subr.bf16.mxu0 0
      %1998 = vmatpush1.bf16.msra.mxu0 %v1978
      %1999 = vmatprep.subr.bf16.mxu0 0
      %2000 = vmatpush1.bf16.msra.mxu0 %v1979
      %2001 = vmatprep.subr.bf16.mxu0 0
      %2002 = vmatpush1.bf16.msra.mxu0 %v1980
      %2003 = vmatprep.subr.bf16.mxu0 0
      %2004 = vmatpush1.bf16.msra.mxu0 %v1981
      %2005 = vmatprep.subr.bf16.mxu0 0
      %2006 = vmatpush1.bf16.msra.mxu0 %v1982
      %2007 = vmatprep.subr.bf16.mxu0 0
      %2008 = vmatpush1.bf16.msra.mxu0 0
      %2009 = vmatprep.subr.bf16.mxu0 0
      %2010 = vmatpush1.bf16.msra.mxu0 0
      %2011 = vmatprep.subr.bf16.mxu0 0
      %2012 = vmatpush1.bf16.msra.mxu0 0
      %2013 = vmatprep.subr.bf16.mxu0 0
      %2014 = vmatpush1.bf16.msra.mxu0 0
      %2015 = vmatprep.subr.bf16.mxu0 0
      %2016 = vmatpush1.bf16.msra.mxu0 0
      %2017 = vmatprep.subr.bf16.mxu0 0
      %2018 = vmatpush1.bf16.msra.mxu0 0
      %2019 = vmatprep.subr.bf16.mxu0 0
      %2020 = vmatpush1.bf16.msra.mxu0 0
      %2021 = vmatprep.subr.bf16.mxu0 0
      %2022 = vmatpush1.bf16.msra.mxu0 0
      %2023 = vmatprep.mubr.bf16.mxu0 0
      %2024 = vmatmul.mubr.bf16.gmra.mrb[0].mxu0 %v1918
      %v2025 = vpop.f32.mrb[0].mxu0
      %v2026 = vadd.f32 0.0, %v2025
      %v2027 = vpop.f32.mrb[0].mxu0
      %v2028 = vpop.f32.mrb[0].mxu0
      %v2029 = vpop.f32.mrb[0].mxu0
      %2030 = vmatprep.mubr.bf16.mxu0 0
      %2031 = vmatmul.mubr.bf16.gmra.mrb[0].mxu0 %v1919
      %v2032 = vpop.f32.mrb[0].mxu0
      %v2033 = vadd.f32 0.0, %v2032
      %v2034 = vpop.f32.mrb[0].mxu0
      %v2035 = vpop.f32.mrb[0].mxu0
      %v2036 = vpop.f32.mrb[0].mxu0
      %2037 = vmatprep.mubr.bf16.mxu0 0
      %2038 = vmatmul.mubr.bf16.gmra.mrb[0].mxu0 %v1920
      %v2039 = vpop.f32.mrb[0].mxu0
      %v2040 = vadd.f32 0.0, %v2039
      %v2041 = vpop.f32.mrb[0].mxu0
      %v2042 = vpop.f32.mrb[0].mxu0
      %v2043 = vpop.f32.mrb[0].mxu0
      %2044 = vmatprep.mubr.bf16.mxu0 0
      %2045 = vmatmul.mubr.bf16.gmra.mrb[0].mxu0 %v1921
      %v2046 = vpop.f32.mrb[0].mxu0
      %v2047 = vadd.f32 0.0, %v2046
      %v2048 = vpop.f32.mrb[0].mxu0
      %v2049 = vpop.f32.mrb[0].mxu0
      %v2050 = vpop.f32.mrb[0].mxu0
      %2051 = vmatprep.mubr.bf16.mxu0 0
      %2052 = vmatmul.mubr.bf16.gmra.mrb[0].mxu0 %v1922
      %v2053 = vpop.f32.mrb[0].mxu0
      %v2054 = vadd.f32 0.0, %v2053
      %v2055 = vpop.f32.mrb[0].mxu0
      %v2056 = vpop.f32.mrb[0].mxu0
      %v2057 = vpop.f32.mrb[0].mxu0
      %2058 = vmatprep.mubr.bf16.mxu0 0
      %2059 = vmatmul.mubr.bf16.gmra.mrb[0].mxu0 %v1923
      %v2060 = vpop.f32.mrb[0].mxu0
      %v2061 = vadd.f32 0.0, %v2060
      %v2062 = vpop.f32.mrb[0].mxu0
      %v2063 = vpop.f32.mrb[0].mxu0
      %v2064 = vpop.f32.mrb[0].mxu0
      %2065 = vmatprep.mubr.bf16.mxu0 0
      %2066 = vmatmul.mubr.bf16.gmra.mrb[0].mxu0 %v1924
      %v2067 = vpop.f32.mrb[0].mxu0
      %v2068 = vadd.f32 0.0, %v2067
      %v2069 = vpop.f32.mrb[0].mxu0
      %v2070 = vpop.f32.mrb[0].mxu0
      %v2071 = vpop.f32.mrb[0].mxu0
      %2072 = vmatprep.mubr.bf16.mxu0 0
      %2073 = vmatmul.mubr.bf16.gmra.mrb[0].mxu0 %v1925
      %v2074 = vpop.f32.mrb[0].mxu0
      %v2075 = vadd.f32 0.0, %v2074
      %v2076 = vpop.f32.mrb[0].mxu0
      %v2077 = vpop.f32.mrb[0].mxu0
      %v2078 = vpop.f32.mrb[0].mxu0
      %2079 = vdwg.mxu0
      %v2080 = vadd.f32 %v1894, %v2026
      %v2081 = vadd.f32 %v1895, %v2033
      %v2082 = vadd.f32 %v1896, %v2040
      %v2083 = vadd.f32 %v1897, %v2047
      %v2084 = vadd.f32 %v1898, %v2054
      %v2085 = vadd.f32 %v1899, %v2061
      %v2086 = vadd.f32 %v1900, %v2068
      %v2087 = vadd.f32 %v1901, %v2075
      %v2088 = vld [vmem:[#allocation5 + $0x29] sm:$0xff]
      %v2089 = vld [vmem:[#allocation5 + $0x31] sm:$0xff]
      %v2090 = vld [vmem:[#allocation5 + $0x39] sm:$0xff]
      %v2091 = vld [vmem:[#allocation5 + $0x41] sm:$0xff]
      %v2092 = vld [vmem:[#allocation5 + $0x49] sm:$0xff]
      %v2093 = vld [vmem:[#allocation5 + $0x51] sm:$0xff]
      %v2094 = vld [vmem:[#allocation5 + $0x59] sm:$0xff]
      %v2095 = vld [vmem:[#allocation5 + $0x61] sm:$0xff]
      %v2096 = vld [vmem:[#allocation5 + $0x69] sm:$0xff]
      %v2097 = vld [vmem:[#allocation5 + $0x71] sm:$0xff]
      %v2098 = vld [vmem:[#allocation5 + $0x79] sm:$0xff]
      %v2099 = vld [vmem:[#allocation5 + $0x81] sm:$0xff]
      %v2100 = vld [vmem:[#allocation5 + $0x89] sm:$0xff]
      %v2101 = vld [vmem:[#allocation5 + $0x91] sm:$0xff]
      %v2102 = vld [vmem:[#allocation5 + $0x99] sm:$0xff]
      %v2103 = vld [vmem:[#allocation5 + $0xa1] sm:$0xff]
      %v2104 = vpack.c.bf16 %v2089, %v2088
      %v2105 = vpack.c.bf16 %v2091, %v2090
      %v2106 = vpack.c.bf16 %v2093, %v2092
      %v2107 = vpack.c.bf16 %v2095, %v2094
      %v2108 = vpack.c.bf16 %v2097, %v2096
      %v2109 = vpack.c.bf16 %v2099, %v2098
      %v2110 = vpack.c.bf16 %v2101, %v2100
      %v2111 = vpack.c.bf16 %v2103, %v2102
      %s2112 = scalar_lea.vmem %s3, 512
      %v2113 = vld [vmem:[%s2112] sm:$0xf]
      %v2114 = vld [vmem:[%s2112 + $0x4] sm:$0xf]
      %v2115 = vld [vmem:[%s2112 + $0x8] sm:$0xf]
      %v2116 = vld [vmem:[%s2112 + $0xc] sm:$0xf]
      %v2117 = vld [vmem:[%s2112 + $0x10] sm:$0xf]
      %v2118 = vld [vmem:[%s2112 + $0x14] sm:$0xf]
      %v2119 = vld [vmem:[%s2112 + $0x18] sm:$0xf]
      %v2120 = vld [vmem:[%s2112 + $0x1c] sm:$0xf]
      %v2121 = vld [vmem:[%s2112 + $0x20] sm:$0xf]
      %v2122 = vld [vmem:[%s2112 + $0x24] sm:$0xf]
      %v2123 = vld [vmem:[%s2112 + $0x28] sm:$0xf]
      %v2124 = vld [vmem:[%s2112 + $0x2c] sm:$0xf]
      %v2125 = vld [vmem:[%s2112 + $0x30] sm:$0xf]
      %v2126 = vld [vmem:[%s2112 + $0x34] sm:$0xf]
      %v2127 = vld [vmem:[%s2112 + $0x38] sm:$0xf]
      %v2128 = vld [vmem:[%s2112 + $0x3c] sm:$0xf]
      %v2145 = vunpack.c.l.b16 %v2113
      %v2146 = vunpack.c.l.b16 %v2114
      %v2147 = vunpack.c.l.b16 %v2115
      %v2148 = vunpack.c.l.b16 %v2116
      %v2149 = vunpack.c.l.b16 %v2117
      %v2150 = vunpack.c.l.b16 %v2118
      %v2151 = vunpack.c.l.b16 %v2119
      %v2152 = vunpack.c.l.b16 %v2120
      %v2153 = vunpack.c.l.b16 %v2121
      %v2154 = vunpack.c.l.b16 %v2122
      %v2155 = vunpack.c.l.b16 %v2123
      %v2156 = vunpack.c.l.b16 %v2124
      %v2157 = vunpack.c.l.b16 %v2125
      %v2158 = vunpack.c.l.b16 %v2126
      %v2159 = vunpack.c.l.b16 %v2127
      %v2160 = vunpack.c.l.b16 %v2128
      %v2161 = vpack.c.b16 %v2146, %v2145
      %v2162 = vpack.c.b16 %v2148, %v2147
      %v2163 = vpack.c.b16 %v2150, %v2149
      %v2164 = vpack.c.b16 %v2152, %v2151
      %v2165 = vpack.c.b16 %v2154, %v2153
      %v2166 = vpack.c.b16 %v2156, %v2155
      %v2167 = vpack.c.b16 %v2158, %v2157
      %v2168 = vpack.c.b16 %v2160, %v2159
      %2177 = vmatprep.subr.bf16.mxu0 0
      %2178 = vmatpush1.bf16.msra.mxu0 %v2161
      %2179 = vmatprep.subr.bf16.mxu0 0
      %2180 = vmatpush1.bf16.msra.mxu0 %v2162
      %2181 = vmatprep.subr.bf16.mxu0 0
      %2182 = vmatpush1.bf16.msra.mxu0 %v2163
      %2183 = vmatprep.subr.bf16.mxu0 0
      %2184 = vmatpush1.bf16.msra.mxu0 %v2164
      %2185 = vmatprep.subr.bf16.mxu0 0
      %2186 = vmatpush1.bf16.msra.mxu0 %v2165
      %2187 = vmatprep.subr.bf16.mxu0 0
      %2188 = vmatpush1.bf16.msra.mxu0 %v2166
      %2189 = vmatprep.subr.bf16.mxu0 0
      %2190 = vmatpush1.bf16.msra.mxu0 %v2167
      %2191 = vmatprep.subr.bf16.mxu0 0
      %2192 = vmatpush1.bf16.msra.mxu0 %v2168
      %2193 = vmatprep.subr.bf16.mxu0 0
      %2194 = vmatpush1.bf16.msra.mxu0 0
      %2195 = vmatprep.subr.bf16.mxu0 0
      %2196 = vmatpush1.bf16.msra.mxu0 0
      %2197 = vmatprep.subr.bf16.mxu0 0
      %2198 = vmatpush1.bf16.msra.mxu0 0
      %2199 = vmatprep.subr.bf16.mxu0 0
      %2200 = vmatpush1.bf16.msra.mxu0 0
      %2201 = vmatprep.subr.bf16.mxu0 0
      %2202 = vmatpush1.bf16.msra.mxu0 0
      %2203 = vmatprep.subr.bf16.mxu0 0
      %2204 = vmatpush1.bf16.msra.mxu0 0
      %2205 = vmatprep.subr.bf16.mxu0 0
      %2206 = vmatpush1.bf16.msra.mxu0 0
      %2207 = vmatprep.subr.bf16.mxu0 0
      %2208 = vmatpush1.bf16.msra.mxu0 0
      %2209 = vmatprep.mubr.bf16.mxu0 0
      %2210 = vmatmul.mubr.bf16.gmra.mrb[0].mxu0 %v2104
      %v2211 = vpop.f32.mrb[0].mxu0
      %v2212 = vadd.f32 0.0, %v2211
      %v2213 = vpop.f32.mrb[0].mxu0
      %v2214 = vpop.f32.mrb[0].mxu0
      %v2215 = vpop.f32.mrb[0].mxu0
      %2216 = vmatprep.mubr.bf16.mxu0 0
      %2217 = vmatmul.mubr.bf16.gmra.mrb[0].mxu0 %v2105
      %v2218 = vpop.f32.mrb[0].mxu0
      %v2219 = vadd.f32 0.0, %v2218
      %v2220 = vpop.f32.mrb[0].mxu0
      %v2221 = vpop.f32.mrb[0].mxu0
      %v2222 = vpop.f32.mrb[0].mxu0
      %2223 = vmatprep.mubr.bf16.mxu0 0
      %2224 = vmatmul.mubr.bf16.gmra.mrb[0].mxu0 %v2106
      %v2225 = vpop.f32.mrb[0].mxu0
      %v2226 = vadd.f32 0.0, %v2225
      %v2227 = vpop.f32.mrb[0].mxu0
      %v2228 = vpop.f32.mrb[0].mxu0
      %v2229 = vpop.f32.mrb[0].mxu0
      %2230 = vmatprep.mubr.bf16.mxu0 0
      %2231 = vmatmul.mubr.bf16.gmra.mrb[0].mxu0 %v2107
      %v2232 = vpop.f32.mrb[0].mxu0
      %v2233 = vadd.f32 0.0, %v2232
      %v2234 = vpop.f32.mrb[0].mxu0
      %v2235 = vpop.f32.mrb[0].mxu0
      %v2236 = vpop.f32.mrb[0].mxu0
      %2237 = vmatprep.mubr.bf16.mxu0 0
      %2238 = vmatmul.mubr.bf16.gmra.mrb[0].mxu0 %v2108
      %v2239 = vpop.f32.mrb[0].mxu0
      %v2240 = vadd.f32 0.0, %v2239
      %v2241 = vpop.f32.mrb[0].mxu0
      %v2242 = vpop.f32.mrb[0].mxu0
      %v2243 = vpop.f32.mrb[0].mxu0
      %2244 = vmatprep.mubr.bf16.mxu0 0
      %2245 = vmatmul.mubr.bf16.gmra.mrb[0].mxu0 %v2109
      %v2246 = vpop.f32.mrb[0].mxu0
      %v2247 = vadd.f32 0.0, %v2246
      %v2248 = vpop.f32.mrb[0].mxu0
      %v2249 = vpop.f32.mrb[0].mxu0
      %v2250 = vpop.f32.mrb[0].mxu0
      %2251 = vmatprep.mubr.bf16.mxu0 0
      %2252 = vmatmul.mubr.bf16.gmra.mrb[0].mxu0 %v2110
      %v2253 = vpop.f32.mrb[0].mxu0
      %v2254 = vadd.f32 0.0, %v2253
      %v2255 = vpop.f32.mrb[0].mxu0
      %v2256 = vpop.f32.mrb[0].mxu0
      %v2257 = vpop.f32.mrb[0].mxu0
      %2258 = vmatprep.mubr.bf16.mxu0 0
      %2259 = vmatmul.mubr.bf16.gmra.mrb[0].mxu0 %v2111
      %v2260 = vpop.f32.mrb[0].mxu0
      %v2261 = vadd.f32 0.0, %v2260
      %v2262 = vpop.f32.mrb[0].mxu0
      %v2263 = vpop.f32.mrb[0].mxu0
      %v2264 = vpop.f32.mrb[0].mxu0
      %2265 = vdwg.mxu0
      %v2266 = vadd.f32 %v2080, %v2212
      %v2267 = vadd.f32 %v2081, %v2219
      %v2268 = vadd.f32 %v2082, %v2226
      %v2269 = vadd.f32 %v2083, %v2233
      %v2270 = vadd.f32 %v2084, %v2240
      %v2271 = vadd.f32 %v2085, %v2247
      %v2272 = vadd.f32 %v2086, %v2254
      %v2273 = vadd.f32 %v2087, %v2261
      %v2274 = vld [vmem:[#allocation3] sm:$0xff]
      %v2275 = vld [vmem:[#allocation3 + $0x8] sm:$0xff]
      %v2276 = vld [vmem:[#allocation3 + $0x10] sm:$0xff]
      %v2277 = vld [vmem:[#allocation3 + $0x18] sm:$0xff]
      %v2278 = vld [vmem:[#allocation3 + $0x20] sm:$0xff]
      %v2279 = vld [vmem:[#allocation3 + $0x28] sm:$0xff]
      %v2280 = vld [vmem:[#allocation3 + $0x30] sm:$0xff]
      %v2281 = vld [vmem:[#allocation3 + $0x38] sm:$0xff]
      %v2282 = vmul.f32 %v2274, 0.5
      %v2283 = vmul.f32 %v2275, 0.5
      %v2284 = vmul.f32 %v2276, 0.5
      %v2285 = vmul.f32 %v2277, 0.5
      %v2286 = vmul.f32 %v2278, 0.5
      %v2287 = vmul.f32 %v2279, 0.5
      %v2288 = vmul.f32 %v2280, 0.5
      %v2289 = vmul.f32 %v2281, 0.5
      %v2290 = vadd.f32 %v2282, %v2266
      %v2291 = vadd.f32 %v2283, %v2267
      %v2292 = vadd.f32 %v2284, %v2268
      %v2293 = vadd.f32 %v2285, %v2269
      %v2294 = vadd.f32 %v2286, %v2270
      %v2295 = vadd.f32 %v2287, %v2271
      %v2296 = vadd.f32 %v2288, %v2272
      %v2297 = vadd.f32 %v2289, %v2273
      %vm2298 = vcmp.ge.f32.partialorder %v2290, 1.0
      %vm2299 = vcmp.ge.f32.partialorder %v2291, 1.0
      %vm2300 = vcmp.ge.f32.partialorder %v2292, 1.0
      %vm2301 = vcmp.ge.f32.partialorder %v2293, 1.0
      %vm2302 = vcmp.ge.f32.partialorder %v2294, 1.0
      %vm2303 = vcmp.ge.f32.partialorder %v2295, 1.0
      %vm2304 = vcmp.ge.f32.partialorder %v2296, 1.0
      %vm2305 = vcmp.ge.f32.partialorder %v2297, 1.0
      %v2306 = vsel %vm2298, 1, 0
      %v2307 = vsel %vm2299, 1, 0
      %v2308 = vsel %vm2300, 1, 0
      %v2309 = vsel %vm2301, 1, 0
      %v2310 = vsel %vm2302, 1, 0
      %v2311 = vsel %vm2303, 1, 0
      %v2312 = vsel %vm2304, 1, 0
      %v2313 = vsel %vm2305, 1, 0
      %v2314 = vcvt.s32.f32 %v2306
      %v2315 = vcvt.s32.f32 %v2307
      %v2316 = vcvt.s32.f32 %v2308
      %v2317 = vcvt.s32.f32 %v2309
      %v2318 = vcvt.s32.f32 %v2310
      %v2319 = vcvt.s32.f32 %v2311
      %v2320 = vcvt.s32.f32 %v2312
      %v2321 = vcvt.s32.f32 %v2313
      %v2322 = vsub.f32 1.0, %v2314
      %v2323 = vsub.f32 1.0, %v2315
      %v2324 = vsub.f32 1.0, %v2316
      %v2325 = vsub.f32 1.0, %v2317
      %v2326 = vsub.f32 1.0, %v2318
      %v2327 = vsub.f32 1.0, %v2319
      %v2328 = vsub.f32 1.0, %v2320
      %v2329 = vsub.f32 1.0, %v2321
      %v2330 = vmul.f32 %v2290, %v2322
      %v2331 = vmul.f32 %v2291, %v2323
      %v2332 = vmul.f32 %v2292, %v2324
      %v2333 = vmul.f32 %v2293, %v2325
      %v2334 = vmul.f32 %v2294, %v2326
      %v2335 = vmul.f32 %v2295, %v2327
      %v2336 = vmul.f32 %v2296, %v2328
      %v2337 = vmul.f32 %v2297, %v2329
      %2338 = vst [vmem:[#allocation3] sm:$0xff] %v2330
      %2339 = vst [vmem:[#allocation3 + $0x8] sm:$0xff] %v2331
      %2340 = vst [vmem:[#allocation3 + $0x10] sm:$0xff] %v2332
      %2341 = vst [vmem:[#allocation3 + $0x18] sm:$0xff] %v2333
      %2342 = vst [vmem:[#allocation3 + $0x20] sm:$0xff] %v2334
      %2343 = vst [vmem:[#allocation3 + $0x28] sm:$0xff] %v2335
      %2344 = vst [vmem:[#allocation3 + $0x30] sm:$0xff] %v2336
      %2345 = vst [vmem:[#allocation3 + $0x38] sm:$0xff] %v2337
      %v2346 = vpack.c.bf16 %v2315, %v2314
      %v2347 = vpack.c.bf16 %v2317, %v2316
      %v2348 = vpack.c.bf16 %v2319, %v2318
      %v2349 = vpack.c.bf16 %v2321, %v2320
      %v2350 = vld [vmem:[%s5] sm:$0xff]
      %v2351 = vld [vmem:[%s5 + $0x8] sm:$0xff]
      %v2352 = vld [vmem:[%s5 + $0x10] sm:$0xff]
      %v2353 = vld [vmem:[%s5 + $0x18] sm:$0xff]
      %v2354 = vld [vmem:[%s5 + $0x20] sm:$0xff]
      %v2355 = vld [vmem:[%s5 + $0x28] sm:$0xff]
      %v2356 = vld [vmem:[%s5 + $0x30] sm:$0xff]
      %v2357 = vld [vmem:[%s5 + $0x38] sm:$0xff]
      %v2358 = vld [vmem:[%s5 + $0x40] sm:$0xff]
      %v2359 = vld [vmem:[%s5 + $0x48] sm:$0xff]
      %v2360 = vld [vmem:[%s5 + $0x50] sm:$0xff]
      %v2361 = vld [vmem:[%s5 + $0x58] sm:$0xff]
      %v2362 = vld [vmem:[%s5 + $0x60] sm:$0xff]
      %v2363 = vld [vmem:[%s5 + $0x68] sm:$0xff]
      %v2364 = vld [vmem:[%s5 + $0x70] sm:$0xff]
      %v2365 = vld [vmem:[%s5 + $0x78] sm:$0xff]
      %v2366 = vld [vmem:[%s6] sm:$0x3]
      %v2368 = vlaneseq
      %v2369 = vshrl.u32 %v2368, 7
      %v2370 = vsub.s32 0, %v2369
      %v2371 = vrot.slane %v2366, %v2370
      %v2372 = vlaneseq
      %v2373 = vshrl.u32 %v2372, 7
      %v2374 = vsub.s32 1, %v2373
      %v2375 = vrot.slane %v2366, %v2374
      %v2394 = vunpack.c.l.b16 %v2350
      %v2395 = vunpack.c.h.b16 %v2350
      %v2396 = vunpack.c.l.b16 %v2351
      %v2397 = vunpack.c.h.b16 %v2351
      %v2398 = vunpack.c.l.b16 %v2352
      %v2399 = vunpack.c.h.b16 %v2352
      %v2400 = vunpack.c.l.b16 %v2353
      %v2401 = vunpack.c.h.b16 %v2353
      %v2402 = vunpack.c.l.b16 %v2354
      %v2403 = vunpack.c.h.b16 %v2354
      %v2404 = vunpack.c.l.b16 %v2355
      %v2405 = vunpack.c.h.b16 %v2355
      %v2406 = vunpack.c.l.b16 %v2356
      %v2407 = vunpack.c.h.b16 %v2356
      %v2408 = vunpack.c.l.b16 %v2357
      %v2409 = vunpack.c.h.b16 %v2357
      %v2410 = vunpack.c.l.b16 %v2358
      %v2411 = vunpack.c.h.b16 %v2358
      %v2412 = vunpack.c.l.b16 %v2359
      %v2413 = vunpack.c.h.b16 %v2359
      %v2414 = vunpack.c.l.b16 %v2360
      %v2415 = vunpack.c.h.b16 %v2360
      %v2416 = vunpack.c.l.b16 %v2361
      %v2417 = vunpack.c.h.b16 %v2361
      %v2418 = vunpack.c.l.b16 %v2362
      %v2419 = vunpack.c.h.b16 %v2362
      %v2420 = vunpack.c.l.b16 %v2363
      %v2421 = vunpack.c.h.b16 %v2363
      %v2422 = vunpack.c.l.b16 %v2364
      %v2423 = vunpack.c.h.b16 %v2364
      %v2424 = vunpack.c.l.b16 %v2365
      %v2425 = vunpack.c.h.b16 %v2365
      %v2426 = vpack.c.b16 %v2396, %v2394
      %v2427 = vpack.c.b16 %v2397, %v2395
      %v2428 = vpack.c.b16 %v2400, %v2398
      %v2429 = vpack.c.b16 %v2401, %v2399
      %v2430 = vpack.c.b16 %v2404, %v2402
      %v2431 = vpack.c.b16 %v2405, %v2403
      %v2432 = vpack.c.b16 %v2408, %v2406
      %v2433 = vpack.c.b16 %v2409, %v2407
      %v2434 = vpack.c.b16 %v2412, %v2410
      %v2435 = vpack.c.b16 %v2413, %v2411
      %v2436 = vpack.c.b16 %v2416, %v2414
      %v2437 = vpack.c.b16 %v2417, %v2415
      %v2438 = vpack.c.b16 %v2420, %v2418
      %v2439 = vpack.c.b16 %v2421, %v2419
      %v2440 = vpack.c.b16 %v2424, %v2422
      %v2441 = vpack.c.b16 %v2425, %v2423
      %2458 = vmatprep.subr.bf16.mxu0 %v2427
      %2459 = vmatpush1.bf16.msra.mxu0 %v2426
      %2460 = vmatprep.subr.bf16.mxu0 %v2429
      %2461 = vmatpush1.bf16.msra.mxu0 %v2428
      %2462 = vmatprep.subr.bf16.mxu0 %v2431
      %2463 = vmatpush1.bf16.msra.mxu0 %v2430
      %2464 = vmatprep.subr.bf16.mxu0 %v2433
      %2465 = vmatpush1.bf16.msra.mxu0 %v2432
      %2466 = vmatprep.subr.bf16.mxu0 %v2435
      %2467 = vmatpush1.bf16.msra.mxu0 %v2434
      %2468 = vmatprep.subr.bf16.mxu0 %v2437
      %2469 = vmatpush1.bf16.msra.mxu0 %v2436
      %2470 = vmatprep.subr.bf16.mxu0 %v2439
      %2471 = vmatpush1.bf16.msra.mxu0 %v2438
      %2472 = vmatprep.subr.bf16.mxu0 %v2441
      %2473 = vmatpush1.bf16.msra.mxu0 %v2440
      %2474 = vmatprep.subr.bf16.mxu0 0
      %2475 = vmatpush1.bf16.msra.mxu0 0
      %2476 = vmatprep.subr.bf16.mxu0 0
      %2477 = vmatpush1.bf16.msra.mxu0 0
      %2478 = vmatprep.subr.bf16.mxu0 0
      %2479 = vmatpush1.bf16.msra.mxu0 0
      %2480 = vmatprep.subr.bf16.mxu0 0
      %2481 = vmatpush1.bf16.msra.mxu0 0
      %2482 = vmatprep.subr.bf16.mxu0 0
      %2483 = vmatpush1.bf16.msra.mxu0 0
      %2484 = vmatprep.subr.bf16.mxu0 0
      %2485 = vmatpush1.bf16.msra.mxu0 0
      %2486 = vmatprep.subr.bf16.mxu0 0
      %2487 = vmatpush1.bf16.msra.mxu0 0
      %2488 = vmatprep.subr.bf16.mxu0 0
      %2489 = vmatpush1.bf16.msra.mxu0 0
      %2490 = vmatprep.mubr.bf16.mxu0 0
      %2491 = vmatmul.mubr.bf16.gmra.mrb[0].mxu0 %v2346
      %v2492 = vpop.f32.mrb[0].mxu0
      %v2493 = vadd.f32 %v2371, %v2492
      %v2494 = vpop.f32.mrb[0].mxu0
      %v2495 = vadd.f32 %v2375, %v2494
      %v2496 = vpop.f32.mrb[0].mxu0
      %v2497 = vadd.f32 %v2371, %v2496
      %v2498 = vpop.f32.mrb[0].mxu0
      %v2499 = vadd.f32 %v2375, %v2498
      %2500 = vmatprep.mubr.bf16.mxu0 0
      %2501 = vmatmul.mubr.bf16.gmra.mrb[0].mxu0 %v2347
      %v2502 = vpop.f32.mrb[0].mxu0
      %v2503 = vadd.f32 %v2371, %v2502
      %v2504 = vpop.f32.mrb[0].mxu0
      %v2505 = vadd.f32 %v2375, %v2504
      %v2506 = vpop.f32.mrb[0].mxu0
      %v2507 = vadd.f32 %v2371, %v2506
      %v2508 = vpop.f32.mrb[0].mxu0
      %v2509 = vadd.f32 %v2375, %v2508
      %2510 = vmatprep.mubr.bf16.mxu0 0
      %2511 = vmatmul.mubr.bf16.gmra.mrb[0].mxu0 %v2348
      %v2512 = vpop.f32.mrb[0].mxu0
      %v2513 = vadd.f32 %v2371, %v2512
      %v2514 = vpop.f32.mrb[0].mxu0
      %v2515 = vadd.f32 %v2375, %v2514
      %v2516 = vpop.f32.mrb[0].mxu0
      %v2517 = vadd.f32 %v2371, %v2516
      %v2518 = vpop.f32.mrb[0].mxu0
      %v2519 = vadd.f32 %v2375, %v2518
      %2520 = vmatprep.mubr.bf16.mxu0 0
      %2521 = vmatmul.mubr.bf16.gmra.mrb[0].mxu0 %v2349
      %v2522 = vpop.f32.mrb[0].mxu0
      %v2523 = vadd.f32 %v2371, %v2522
      %v2524 = vpop.f32.mrb[0].mxu0
      %v2525 = vadd.f32 %v2375, %v2524
      %v2526 = vpop.f32.mrb[0].mxu0
      %v2527 = vadd.f32 %v2371, %v2526
      %v2528 = vpop.f32.mrb[0].mxu0
      %v2529 = vadd.f32 %v2375, %v2528
      %2530 = vdwg.mxu0
      %v2531 = vld [vmem:[#allocation4] sm:$0xff]
      %v2532 = vld [vmem:[#allocation4 + $0x8] sm:$0xff]
      %v2533 = vld [vmem:[#allocation4 + $0x10] sm:$0xff]
      %v2534 = vld [vmem:[#allocation4 + $0x18] sm:$0xff]
      %v2535 = vld [vmem:[#allocation4 + $0x20] sm:$0xff]
      %v2536 = vld [vmem:[#allocation4 + $0x28] sm:$0xff]
      %v2537 = vld [vmem:[#allocation4 + $0x30] sm:$0xff]
      %v2538 = vld [vmem:[#allocation4 + $0x38] sm:$0xff]
      %v2539 = vld [vmem:[#allocation4 + $0x40] sm:$0xff]
      %v2540 = vld [vmem:[#allocation4 + $0x48] sm:$0xff]
      %v2541 = vld [vmem:[#allocation4 + $0x50] sm:$0xff]
      %v2542 = vld [vmem:[#allocation4 + $0x58] sm:$0xff]
      %v2543 = vld [vmem:[#allocation4 + $0x60] sm:$0xff]
      %v2544 = vld [vmem:[#allocation4 + $0x68] sm:$0xff]
      %v2545 = vld [vmem:[#allocation4 + $0x70] sm:$0xff]
      %v2546 = vld [vmem:[#allocation4 + $0x78] sm:$0xff]
      %v2547 = vmul.f32 %v2531, 0.5
      %v2548 = vmul.f32 %v2532, 0.5
      %v2549 = vmul.f32 %v2533, 0.5
      %v2550 = vmul.f32 %v2534, 0.5
      %v2551 = vmul.f32 %v2535, 0.5
      %v2552 = vmul.f32 %v2536, 0.5
      %v2553 = vmul.f32 %v2537, 0.5
      %v2554 = vmul.f32 %v2538, 0.5
      %v2555 = vmul.f32 %v2539, 0.5
      %v2556 = vmul.f32 %v2540, 0.5
      %v2557 = vmul.f32 %v2541, 0.5
      %v2558 = vmul.f32 %v2542, 0.5
      %v2559 = vmul.f32 %v2543, 0.5
      %v2560 = vmul.f32 %v2544, 0.5
      %v2561 = vmul.f32 %v2545, 0.5
      %v2562 = vmul.f32 %v2546, 0.5
      %v2563 = vadd.f32 %v2547, %v2493
      %v2564 = vadd.f32 %v2548, %v2495
      %v2565 = vadd.f32 %v2549, %v2497
      %v2566 = vadd.f32 %v2550, %v2499
      %v2567 = vadd.f32 %v2551, %v2503
      %v2568 = vadd.f32 %v2552, %v2505
      %v2569 = vadd.f32 %v2553, %v2507
      %v2570 = vadd.f32 %v2554, %v2509
      %v2571 = vadd.f32 %v2555, %v2513
      %v2572 = vadd.f32 %v2556, %v2515
      %v2573 = vadd.f32 %v2557, %v2517
      %v2574 = vadd.f32 %v2558, %v2519
      %v2575 = vadd.f32 %v2559, %v2523
      %v2576 = vadd.f32 %v2560, %v2525
      %v2577 = vadd.f32 %v2561, %v2527
      %v2578 = vadd.f32 %v2562, %v2529
      %vm2579 = vcmp.ge.f32.partialorder %v2563, 1.0
      %vm2580 = vcmp.ge.f32.partialorder %v2564, 1.0
      %vm2581 = vcmp.ge.f32.partialorder %v2565, 1.0
      %vm2582 = vcmp.ge.f32.partialorder %v2566, 1.0
      %vm2583 = vcmp.ge.f32.partialorder %v2567, 1.0
      %vm2584 = vcmp.ge.f32.partialorder %v2568, 1.0
      %vm2585 = vcmp.ge.f32.partialorder %v2569, 1.0
      %vm2586 = vcmp.ge.f32.partialorder %v2570, 1.0
      %vm2587 = vcmp.ge.f32.partialorder %v2571, 1.0
      %vm2588 = vcmp.ge.f32.partialorder %v2572, 1.0
      %vm2589 = vcmp.ge.f32.partialorder %v2573, 1.0
      %vm2590 = vcmp.ge.f32.partialorder %v2574, 1.0
      %vm2591 = vcmp.ge.f32.partialorder %v2575, 1.0
      %vm2592 = vcmp.ge.f32.partialorder %v2576, 1.0
      %vm2593 = vcmp.ge.f32.partialorder %v2577, 1.0
      %vm2594 = vcmp.ge.f32.partialorder %v2578, 1.0
      %v2595 = vsel %vm2579, 1, 0
      %v2596 = vsel %vm2580, 1, 0
      %v2597 = vsel %vm2581, 1, 0
      %v2598 = vsel %vm2582, 1, 0
      %v2599 = vsel %vm2583, 1, 0
      %v2600 = vsel %vm2584, 1, 0
      %v2601 = vsel %vm2585, 1, 0
      %v2602 = vsel %vm2586, 1, 0
      %v2603 = vsel %vm2587, 1, 0
      %v2604 = vsel %vm2588, 1, 0
      %v2605 = vsel %vm2589, 1, 0
      %v2606 = vsel %vm2590, 1, 0
      %v2607 = vsel %vm2591, 1, 0
      %v2608 = vsel %vm2592, 1, 0
      %v2609 = vsel %vm2593, 1, 0
      %v2610 = vsel %vm2594, 1, 0
      %v2611 = vcvt.s32.f32 %v2595
      %v2612 = vcvt.s32.f32 %v2596
      %v2613 = vcvt.s32.f32 %v2597
      %v2614 = vcvt.s32.f32 %v2598
      %v2615 = vcvt.s32.f32 %v2599
      %v2616 = vcvt.s32.f32 %v2600
      %v2617 = vcvt.s32.f32 %v2601
      %v2618 = vcvt.s32.f32 %v2602
      %v2619 = vcvt.s32.f32 %v2603
      %v2620 = vcvt.s32.f32 %v2604
      %v2621 = vcvt.s32.f32 %v2605
      %v2622 = vcvt.s32.f32 %v2606
      %v2623 = vcvt.s32.f32 %v2607
      %v2624 = vcvt.s32.f32 %v2608
      %v2625 = vcvt.s32.f32 %v2609
      %v2626 = vcvt.s32.f32 %v2610
      %v2627 = vsub.f32 1.0, %v2611
      %v2628 = vsub.f32 1.0, %v2612
      %v2629 = vsub.f32 1.0, %v2613
      %v2630 = vsub.f32 1.0, %v2614
      %v2631 = vsub.f32 1.0, %v2615
      %v2632 = vsub.f32 1.0, %v2616
      %v2633 = vsub.f32 1.0, %v2617
      %v2634 = vsub.f32 1.0, %v2618
      %v2635 = vsub.f32 1.0, %v2619
      %v2636 = vsub.f32 1.0, %v2620
      %v2637 = vsub.f32 1.0, %v2621
      %v2638 = vsub.f32 1.0, %v2622
      %v2639 = vsub.f32 1.0, %v2623
      %v2640 = vsub.f32 1.0, %v2624
      %v2641 = vsub.f32 1.0, %v2625
      %v2642 = vsub.f32 1.0, %v2626
      %v2643 = vmul.f32 %v2563, %v2627
      %v2644 = vmul.f32 %v2564, %v2628
      %v2645 = vmul.f32 %v2565, %v2629
      %v2646 = vmul.f32 %v2566, %v2630
      %v2647 = vmul.f32 %v2567, %v2631
      %v2648 = vmul.f32 %v2568, %v2632
      %v2649 = vmul.f32 %v2569, %v2633
      %v2650 = vmul.f32 %v2570, %v2634
      %v2651 = vmul.f32 %v2571, %v2635
      %v2652 = vmul.f32 %v2572, %v2636
      %v2653 = vmul.f32 %v2573, %v2637
      %v2654 = vmul.f32 %v2574, %v2638
      %v2655 = vmul.f32 %v2575, %v2639
      %v2656 = vmul.f32 %v2576, %v2640
      %v2657 = vmul.f32 %v2577, %v2641
      %v2658 = vmul.f32 %v2578, %v2642
      %2659 = vst [vmem:[#allocation4] sm:$0xff] %v2643
      %2660 = vst [vmem:[#allocation4 + $0x8] sm:$0xff] %v2644
      %2661 = vst [vmem:[#allocation4 + $0x10] sm:$0xff] %v2645
      %2662 = vst [vmem:[#allocation4 + $0x18] sm:$0xff] %v2646
      %2663 = vst [vmem:[#allocation4 + $0x20] sm:$0xff] %v2647
      %2664 = vst [vmem:[#allocation4 + $0x28] sm:$0xff] %v2648
      %2665 = vst [vmem:[#allocation4 + $0x30] sm:$0xff] %v2649
      %2666 = vst [vmem:[#allocation4 + $0x38] sm:$0xff] %v2650
      %2667 = vst [vmem:[#allocation4 + $0x40] sm:$0xff] %v2651
      %2668 = vst [vmem:[#allocation4 + $0x48] sm:$0xff] %v2652
      %2669 = vst [vmem:[#allocation4 + $0x50] sm:$0xff] %v2653
      %2670 = vst [vmem:[#allocation4 + $0x58] sm:$0xff] %v2654
      %2671 = vst [vmem:[#allocation4 + $0x60] sm:$0xff] %v2655
      %2672 = vst [vmem:[#allocation4 + $0x68] sm:$0xff] %v2656
      %2673 = vst [vmem:[#allocation4 + $0x70] sm:$0xff] %v2657
      %2674 = vst [vmem:[#allocation4 + $0x78] sm:$0xff] %v2658
      %v2675 = vmul.f32 %v374, %v2611
      %v2676 = vmul.f32 %v375, %v2613
      %v2677 = vmul.f32 %v376, %v2615
      %v2678 = vmul.f32 %v377, %v2617
      %v2679 = vmul.f32 %v378, %v2619
      %v2680 = vmul.f32 %v379, %v2621
      %v2681 = vmul.f32 %v380, %v2623
      %v2682 = vmul.f32 %v381, %v2625
      %v2683 = vadd.f32 %v374, %v2611
      %v2684 = vadd.f32 %v375, %v2613
      %v2685 = vadd.f32 %v376, %v2615
      %v2686 = vadd.f32 %v377, %v2617
      %v2687 = vadd.f32 %v378, %v2619
      %v2688 = vadd.f32 %v379, %v2621
      %v2689 = vadd.f32 %v380, %v2623
      %v2690 = vadd.f32 %v381, %v2625
      %v2691 = vmul.f32 %v374, 2.0
      %v2692 = vmul.f32 %v375, 2.0
      %v2693 = vmul.f32 %v376, 2.0
      %v2694 = vmul.f32 %v377, 2.0
      %v2695 = vmul.f32 %v378, 2.0
      %v2696 = vmul.f32 %v379, 2.0
      %v2697 = vmul.f32 %v380, 2.0
      %v2698 = vmul.f32 %v381, 2.0
      %v2699 = vmul.f32 %v2691, %v2611
      %v2700 = vmul.f32 %v2692, %v2613
      %v2701 = vmul.f32 %v2693, %v2615
      %v2702 = vmul.f32 %v2694, %v2617
      %v2703 = vmul.f32 %v2695, %v2619
      %v2704 = vmul.f32 %v2696, %v2621
      %v2705 = vmul.f32 %v2697, %v2623
      %v2706 = vmul.f32 %v2698, %v2625
      %v2707 = vsub.f32 %v2683, %v2699
      %v2708 = vsub.f32 %v2684, %v2700
      %v2709 = vsub.f32 %v2685, %v2701
      %v2710 = vsub.f32 %v2686, %v2702
      %v2711 = vsub.f32 %v2687, %v2703
      %v2712 = vsub.f32 %v2688, %v2704
      %v2713 = vsub.f32 %v2689, %v2705
      %v2714 = vsub.f32 %v2690, %v2706
      %v2715 = vmul.f32 %v2628, %v2707
      %v2716 = vmul.f32 %v2630, %v2708
      %v2717 = vmul.f32 %v2632, %v2709
      %v2718 = vmul.f32 %v2634, %v2710
      %v2719 = vmul.f32 %v2636, %v2711
      %v2720 = vmul.f32 %v2638, %v2712
      %v2721 = vmul.f32 %v2640, %v2713
      %v2722 = vmul.f32 %v2642, %v2714
      %v2723 = vadd.f32 %v2675, %v2715
      %v2724 = vadd.f32 %v2676, %v2716
      %v2725 = vadd.f32 %v2677, %v2717
      %v2726 = vadd.f32 %v2678, %v2718
      %v2727 = vadd.f32 %v2679, %v2719
      %v2728 = vadd.f32 %v2680, %v2720
      %v2729 = vadd.f32 %v2681, %v2721
      %v2730 = vadd.f32 %v2682, %v2722
      %2731 = vst [vmem:[%s314] sm:$0xff] %v2723
      %2732 = vst [vmem:[%s314 + $0x8] sm:$0xff] %v2724
      %2733 = vst [vmem:[%s314 + $0x10] sm:$0xff] %v2725
      %2734 = vst [vmem:[%s314 + $0x18] sm:$0xff] %v2726
      %2735 = vst [vmem:[%s314 + $0x20] sm:$0xff] %v2727
      %2736 = vst [vmem:[%s314 + $0x28] sm:$0xff] %v2728
      %2737 = vst [vmem:[%s314 + $0x30] sm:$0xff] %v2729
      %2738 = vst [vmem:[%s314 + $0x38] sm:$0xff] %v2730
      %p2739 = scmp.lt.s32.totalorder %s23, 3
      %s2740 = scalar_select %p2739, %s23, 3
      %p2741 = scmp.lt.s32.totalorder %s22, 1
      %s2742 = scalar_select %p2741, %s22, 1
      %s2743 = smul.addr %s2742, 8
      %s2744 = smul.addr %s2740, 16
      %s2745 = sadd.s32 %s2743, %s2744
      %s2746 = smul.addr %s2745, 8
      %s2747 = scalar_lea.vmem %s7, %s2746
      // Predicated region
      $region53: #{_lambda_.1} parent=47 // pred_check
        %p2748 = pneg %p204
      $region54: #{_lambda_.1} parent=47 // pred_check_branch
        %2750 = sbr.rel (%p2748) target = $region56
      $region55: #{_lambda_.1} parent=47 // pred_region
        _
      $region56: #{_lambda_.1} parent=47 // pred_fallthru
        _
    $region48: #{_lambda_.1} parent=5 // pred_fallthru
      _
    %p2751 = scmp.le.s32.totalorder 2, %s13
    // Predicated region
    $region57: #{_lambda_.1} parent=5 // pred_check
      %p2752 = pneg %p2751
    $region58: #{_lambda_.1} parent=5 // pred_check_branch
      %2754 = sbr.rel (%p2752) target = $region60
    $region59: #{_lambda_.1} parent=5 // pred_region
      %s2755 = ssub.s32 %s13, 2
      // Predicated region
      $region61: #{_lambda_.1} parent=59 // pred_check
        %p2756 = pneg %p210
      $region62: #{_lambda_.1} parent=59 // pred_check_branch
        %2758 = sbr.rel (%p2756) target = $region64
      $region63: #{_lambda_.1} parent=59 // pred_region
        %p2759 = scmp.lt.s32.totalorder %s25, 3
        %s2760 = scalar_select %p2759, %s25, 3
        %p2761 = scmp.lt.s32.totalorder %s24, 1
        %s2762 = scalar_select %p2761, %s24, 1
        %s2763 = smul.addr %s2762, 8
        %s2764 = smul.addr %s2760, 16
        %s2765 = sadd.s32 %s2763, %s2764
        %s2766 = smul.addr %s2765, 8
        %s2767 = scalar_lea.vmem %s7, %s2766
      $region64: #{_lambda_.1} parent=59 // pred_fallthru
        _
    $region60: #{_lambda_.1} parent=5 // pred_fallthru
      _
  $region6: #{_lambda_.1} parent=0 // loop_footer
    %s17 = sadd.s32 1, %s13
  $region7: #{_lambda_.1} parent=0 // loop_footer_branch
    %12 = sbr.rel target = $region3
  $region8: #{_lambda_.1} parent=0 // loop_exit
    _

</llo_original>
